<compile_context>
chip_gen: v7x
topology: tpu7x:2x2x1
jax: 0.10.0
libtpu: 0.0.40
codegen_flags: <defaults>
</compile_context>

<pallas_src>
import math

import jax
import jax.numpy as jnp
from jax.experimental import pallas as pl
from jax.experimental.pallas import tpu as pltpu

# ---- model hyper-parameters (small, consistent with the module) ----
B = 2               # batch
S = 16              # source sequence length (visual feature patches)
D_MODEL = 32        # d_model
NUM_HEADS = 4
D_HEAD = D_MODEL // NUM_HEADS    # 8
D_FF = 64
NUM_LAYERS = 3      # Encoder = clones(layer, N); R2Gen default N = 3
EPS = 1e-6
NEG_INF = -1e9
BT = B * S                       # 32 flattened tokens
HT = NUM_HEADS * BT              # 128 -> exactly one lane-dense panel width


# ========================= shared numeric helpers =========================

def _mm(a, b):
    """bf16-input / f32-accumulate matmul (single native MXU pass)."""
    return jnp.dot(a.astype(jnp.bfloat16), b.astype(jnp.bfloat16),
                   preferred_element_type=jnp.float32)


def _layer_norm(v, gamma, beta):
    """R2Gen LayerNorm: unbiased std (N-1), eps added to std (exact f32)."""
    mean = jnp.mean(v, axis=-1, keepdims=True)
    diff = v - mean
    var = jnp.sum(diff * diff, axis=-1, keepdims=True) * (1.0 / (v.shape[-1] - 1))
    std = jnp.sqrt(var)
    return gamma * diff / (std + EPS) + beta


# ============================== fused kernel ==============================

def encoder_kernel(x_ref, bias_ref, hmask_ref, onehot_ref,
                   ln1g_ref, ln1b_ref, wqkv_ref, bqkv_ref, wo_ref, bo_ref,
                   ln2g_ref, ln2b_ref, w1_ref, b1_ref, w2_ref, b2_ref,
                   lng_ref, lnb_ref, o_ref):
    """Entire Encoder forward for the whole (flattened) batch, VMEM-resident."""
    x = x_ref[...]                      # (BT, D)      f32 residual stream
    bias = bias_ref[...]                # (BT, HT)     additive attention bias, all heads
    hmask = hmask_ref[...]              # (HT, D)      head block mask (0/1 f32)
    onehot = onehot_ref[...]            # (HT, HT)     head-block one-hot (0/1 f32)
    scale = 1.0 / math.sqrt(D_HEAD)

    for l in range(NUM_LAYERS):         # unrolled; weights indexed statically
        # ---- sublayer 0: x + self_attn(norm(x)) ----
        n = _layer_norm(x, ln1g_ref[l], ln1b_ref[l])
        # Fused QKV projection: one (BT,D)@(D,3D) bf16 matmul (weights pre-cast).
        qkv = jnp.dot(n.astype(jnp.bfloat16), wqkv_ref[l],
                      preferred_element_type=jnp.float32) + bqkv_ref[l]   # (BT,3D) f32
        q = qkv[:, :D_MODEL]
        k = qkv[:, D_MODEL:2 * D_MODEL]
        v = qkv[:, 2 * D_MODEL:3 * D_MODEL]

        # Sublane-tile K and V over heads and zero out features not belonging to
        # that head: the packed matmuls below then produce all heads at once.
        km = (jnp.tile(k, (NUM_HEADS, 1)) * hmask).astype(jnp.bfloat16)   # (HT, D)
        vm = (jnp.tile(v, (NUM_HEADS, 1)) * hmask).astype(jnp.bfloat16)   # (HT, D)

        # All-head scores in ONE MXU pass -> lane-dense (BT, HT) panel.
        s = jax.lax.dot_general(q.astype(jnp.bfloat16), km,
                                (((1,), (1,)), ((), ())),
                                preferred_element_type=jnp.float32)
        s = s * scale + bias                                              # (BT, HT)

        # Softmax: single global per-row max (shift-invariant per head),
        # per-head denominators via ONE f32 matmul against the block one-hot
        # (each head's row-sum lands broadcast across its 32 lanes), exact divide.
        p = jnp.exp(s - jnp.max(s, axis=-1, keepdims=True))
        denom = jnp.dot(p, onehot, preferred_element_type=jnp.float32)
        p = p / denom

        # All-head context in ONE MXU pass; heads land in final lane slots.
        ctx = jnp.dot(p.astype(jnp.bfloat16), vm,
                      preferred_element_type=jnp.float32)                 # (BT, D)
        x = x + jnp.dot(ctx.astype(jnp.bfloat16), wo_ref[l],
                        preferred_element_type=jnp.float32) + bo_ref[l]

        # ---- sublayer 1: x + feed_forward(norm(x)) ----
        n = _layer_norm(x, ln2g_ref[l], ln2b_ref[l])
        hdn = jnp.maximum(jnp.dot(n.astype(jnp.bfloat16), w1_ref[l],
                                  preferred_element_type=jnp.float32) + b1_ref[l], 0.0)
        x = x + jnp.dot(hdn.astype(jnp.bfloat16), w2_ref[l],
                        preferred_element_type=jnp.float32) + b2_ref[l]

    # ---- final LayerNorm ----
    o_ref[...] = _layer_norm(x, lng_ref[...], lnb_ref[...])


# ================================ wrapper ================================

@jax.jit
def encoder_pallas(x, mask, params):
    b, s, d = x.shape
    x2d = x.reshape(b * s, d)

    # Block-diagonal additive attention bias: 0 where (same batch AND key kept),
    # NEG_INF everywhere else.  Tiled along lanes once for all heads.
    keep = (mask[:, 0, :] > 0).reshape(-1)                      # (BT,)
    batch_id = jnp.repeat(jnp.arange(b), s)                     # (BT,)
    allowed = (batch_id[:, None] == batch_id[None, :]) & keep[None, :]
    bias = jnp.where(allowed, 0.0, NEG_INF).astype(jnp.float32)         # (BT, BT)
    bias_packed = jnp.tile(bias, (1, NUM_HEADS))                        # (BT, HT)

    # Head block mask (HT, D): row j = h*BT + t keeps only features of head h.
    row_head = jnp.repeat(jnp.arange(NUM_HEADS), b * s)                 # (HT,)
    col_head = jnp.arange(d) // D_HEAD                                  # (D,)
    head_mask = (row_head[:, None] == col_head[None, :]).astype(jnp.float32)

    # Denominator one-hot (HT, HT): 1 where lanes belong to the same head block.
    den_onehot = (row_head[:, None] == row_head[None, :]).astype(jnp.float32)

    # Pack per-layer weights, stacked over the layer dim; matmul weights pre-cast
    # to bf16 once here (plain-JAX glue).
    lay = params["layers"]
    ln1g = jnp.stack([p["ln1_gamma"] for p in lay])[:, None, :]          # (L,1,D)
    ln1b = jnp.stack([p["ln1_beta"] for p in lay])[:, None, :]
    wqkv = jnp.stack([jnp.concatenate([p["Wq"], p["Wk"], p["Wv"]], axis=1)
                      for p in lay]).astype(jnp.bfloat16)                # (L,D,3D)
    bqkv = jnp.stack([jnp.concatenate([p["bq"], p["bk"], p["bv"]])
                      for p in lay])[:, None, :]                         # (L,1,3D)
    wo = jnp.stack([p["Wo"] for p in lay]).astype(jnp.bfloat16)          # (L,D,D)
    bo = jnp.stack([p["bo"] for p in lay])[:, None, :]                   # (L,1,D)
    ln2g = jnp.stack([p["ln2_gamma"] for p in lay])[:, None, :]
    ln2b = jnp.stack([p["ln2_beta"] for p in lay])[:, None, :]
    w1 = jnp.stack([p["W1"] for p in lay]).astype(jnp.bfloat16)          # (L,D,DFF)
    b1 = jnp.stack([p["b1"] for p in lay])[:, None, :]                   # (L,1,DFF)
    w2 = jnp.stack([p["W2"] for p in lay]).astype(jnp.bfloat16)          # (L,DFF,D)
    b2 = jnp.stack([p["b2"] for p in lay])[:, None, :]                   # (L,1,D)
    fg = params["final_gamma"][None, :]                                  # (1,D)
    fb = params["final_beta"][None, :]

    # Whole encoder in ONE no-grid pallas_call: ~200 KB resident, far under the
    # VMEM ceiling of any generation.  At production batch sizes, add a leading
    # "parallel" grid axis over batch blocks to use v7x's second TensorCore;
    # at B*S = 32 the per-step overhead would exceed the work, so we don't.
    n_inputs = 18
    out = pl.pallas_call(
        encoder_kernel,
        out_shape=jax.ShapeDtypeStruct((b * s, d), jnp.float32),
        in_specs=[pl.BlockSpec(memory_space=pltpu.MemorySpace.VMEM)] * n_inputs,
        out_specs=pl.BlockSpec(memory_space=pltpu.MemorySpace.VMEM),
    )(x2d, bias_packed, head_mask, den_onehot,
      ln1g, ln1b, wqkv, bqkv, wo, bo,
      ln2g, ln2b, w1, b1, w2, b2, fg, fb)
    return out.reshape(b, s, d)


# ========================= pure-JAX reference =========================

def mha_ref(x, mask, p):
    b, s, d = x.shape
    h, dk = NUM_HEADS, D_HEAD
    q = (_mm(x, p["Wq"]) + p["bq"]).reshape(b, s, h, dk).transpose(0, 2, 1, 3)
    k = (_mm(x, p["Wk"]) + p["bk"]).reshape(b, s, h, dk).transpose(0, 2, 1, 3)
    v = (_mm(x, p["Wv"]) + p["bv"]).reshape(b, s, h, dk).transpose(0, 2, 1, 3)
    scores = jnp.einsum("bhqd,bhkd->bhqk",
                        q.astype(jnp.bfloat16), k.astype(jnp.bfloat16),
                        preferred_element_type=jnp.float32) / math.sqrt(dk)
    scores = jnp.where(mask[:, None, :, :] > 0, scores, NEG_INF)
    attn = jax.nn.softmax(scores, axis=-1)
    ctx = jnp.einsum("bhqk,bhkd->bhqd",
                     attn.astype(jnp.bfloat16), v.astype(jnp.bfloat16),
                     preferred_element_type=jnp.float32)
    ctx = ctx.transpose(0, 2, 1, 3).reshape(b, s, d)
    return _mm(ctx, p["Wo"]) + p["bo"]


def ffn_ref(x, p):
    return _mm(jnp.maximum(_mm(x, p["W1"]) + p["b1"], 0.0), p["W2"]) + p["b2"]


def encoder_ref(x, mask, params):
    for p in params["layers"]:
        n = _layer_norm(x, p["ln1_gamma"], p["ln1_beta"])
        x = x + mha_ref(n, mask, p)
        n = _layer_norm(x, p["ln2_gamma"], p["ln2_beta"])
        x = x + ffn_ref(n, p)
    return _layer_norm(x, params["final_gamma"], params["final_beta"])


# ============================ params / main ============================

def init_params(key):
    d, dff = D_MODEL, D_FF
    keys = iter(jax.random.split(key, 64))

    def w(shape, scale=0.1):
        return scale * jax.random.normal(next(keys), shape, jnp.float32)

    layers = []
    for _ in range(NUM_LAYERS):
        layers.append(dict(
            ln1_gamma=1.0 + 0.1 * jax.random.normal(next(keys), (d,), jnp.float32),
            ln1_beta=0.1 * jax.random.normal(next(keys), (d,), jnp.float32),
            Wq=w((d, d)), bq=jnp.full((d,), 0.05, jnp.float32),
            Wk=w((d, d)), bk=jnp.full((d,), 0.05, jnp.float32),
            Wv=w((d, d)), bv=jnp.full((d,), 0.05, jnp.float32),
            Wo=w((d, d)), bo=jnp.full((d,), 0.05, jnp.float32),
            ln2_gamma=1.0 + 0.1 * jax.random.normal(next(keys), (d,), jnp.float32),
            ln2_beta=0.1 * jax.random.normal(next(keys), (d,), jnp.float32),
            W1=w((d, dff)), b1=jnp.full((dff,), 0.05, jnp.float32),
            W2=w((dff, d)), b2=jnp.full((d,), 0.05, jnp.float32)))
    return dict(
        layers=layers,
        final_gamma=1.0 + 0.1 * jax.random.normal(next(keys), (d,), jnp.float32),
        final_beta=0.1 * jax.random.normal(next(keys), (d,), jnp.float32))


if __name__ == "__main__":
    key = jax.random.PRNGKey(0)
    kx, kp = jax.random.split(key, 2)

    x = jax.random.normal(kx, (B, S, D_MODEL), jnp.float32)
    mask = jnp.ones((B, 1, S), jnp.float32)
    mask = mask.at[1, 0, S - 3:].set(0.0)   # mask a few source positions in batch 1

    params = init_params(kp)

    out = encoder_pallas(x, mask, params)
    out = jax.block_until_ready(out)

    ref = encoder_ref(x, mask, params)
    err = float(jnp.max(jnp.abs(out - ref)))
    assert err < 2e-3, f"mismatch vs reference: max abs err = {err}"
    print("KERNEL_OK")
</pallas_src>

<mosaic_0001>
module attributes {stable_mosaic.version = 11 : i64} {
  func.func @encoder_kernel(%arg0: memref<32x32xf32, #tpu.memory_space<vmem>>, %arg1: memref<32x128xf32, #tpu.memory_space<vmem>>, %arg2: memref<128x32xf32, #tpu.memory_space<vmem>>, %arg3: memref<128x128xf32, #tpu.memory_space<vmem>>, %arg4: memref<3x1x32xf32, #tpu.memory_space<vmem>>, %arg5: memref<3x1x32xf32, #tpu.memory_space<vmem>>, %arg6: memref<3x32x96xbf16, #tpu.memory_space<vmem>>, %arg7: memref<3x1x96xf32, #tpu.memory_space<vmem>>, %arg8: memref<3x32x32xbf16, #tpu.memory_space<vmem>>, %arg9: memref<3x1x32xf32, #tpu.memory_space<vmem>>, %arg10: memref<3x1x32xf32, #tpu.memory_space<vmem>>, %arg11: memref<3x1x32xf32, #tpu.memory_space<vmem>>, %arg12: memref<3x32x64xbf16, #tpu.memory_space<vmem>>, %arg13: memref<3x1x64xf32, #tpu.memory_space<vmem>>, %arg14: memref<3x64x32xbf16, #tpu.memory_space<vmem>>, %arg15: memref<3x1x32xf32, #tpu.memory_space<vmem>>, %arg16: memref<1x32xf32, #tpu.memory_space<vmem>>, %arg17: memref<1x32xf32, #tpu.memory_space<vmem>>, %arg18: memref<32x32xf32, #tpu.memory_space<vmem>>) attributes {dimension_semantics = [], scalar_prefetch = 0 : i64, scratch_operands = 0 : i64, tpu.core_type = #tpu.core_type<tc>} {
    %c0 = arith.constant 0 : index
    %c0_0 = arith.constant 0 : index
    %0 = vector.load %arg0[%c0, %c0_0] : memref<32x32xf32, #tpu.memory_space<vmem>>, vector<32x32xf32>
    %c0_1 = arith.constant 0 : index
    %c0_2 = arith.constant 0 : index
    %1 = vector.load %arg1[%c0_1, %c0_2] : memref<32x128xf32, #tpu.memory_space<vmem>>, vector<32x128xf32>
    %c0_3 = arith.constant 0 : index
    %c0_4 = arith.constant 0 : index
    %2 = vector.load %arg2[%c0_3, %c0_4] : memref<128x32xf32, #tpu.memory_space<vmem>>, vector<128x32xf32>
    %c0_5 = arith.constant 0 : index
    %c0_6 = arith.constant 0 : index
    %3 = vector.load %arg3[%c0_5, %c0_6] : memref<128x128xf32, #tpu.memory_space<vmem>>, vector<128x128xf32>
    %c0_7 = arith.constant 0 : index
    %c0_8 = arith.constant 0 : index
    %c0_9 = arith.constant 0 : index
    %4 = vector.load %arg4[%c0_7, %c0_8, %c0_9] : memref<3x1x32xf32, #tpu.memory_space<vmem>>, vector<1x1x32xf32>
    %5 = vector.shape_cast %4 : vector<1x1x32xf32> to vector<1x32xf32>
    %c0_10 = arith.constant 0 : index
    %c0_11 = arith.constant 0 : index
    %c0_12 = arith.constant 0 : index
    %6 = vector.load %arg5[%c0_10, %c0_11, %c0_12] : memref<3x1x32xf32, #tpu.memory_space<vmem>>, vector<1x1x32xf32>
    %7 = vector.shape_cast %6 : vector<1x1x32xf32> to vector<1x32xf32>
    %cst = arith.constant dense<0.000000e+00> : vector<32xf32>
    %8 = vector.multi_reduction <add>, %0, %cst [1] : vector<32x32xf32> to vector<32xf32>
    %9 = vector.shape_cast %8 : vector<32xf32> to vector<32x1xf32>
    %cst_13 = arith.constant 3.200000e+01 : f32
    %10 = vector.broadcast %cst_13 : f32 to vector<32x1xf32>
    %11 = arith.divf %9, %10 : vector<32x1xf32>
    %12 = vector.broadcast %11 : vector<32x1xf32> to vector<32x32xf32>
    %13 = arith.subf %0, %12 : vector<32x32xf32>
    %14 = arith.mulf %13, %13 : vector<32x32xf32>
    %cst_14 = arith.constant dense<0.000000e+00> : vector<32xf32>
    %15 = vector.multi_reduction <add>, %14, %cst_14 [1] : vector<32x32xf32> to vector<32xf32>
    %16 = vector.shape_cast %15 : vector<32xf32> to vector<32x1xf32>
    %cst_15 = arith.constant 0.0322580636 : f32
    %17 = vector.broadcast %cst_15 : f32 to vector<32x1xf32>
    %18 = arith.mulf %16, %17 : vector<32x1xf32>
    %19 = math.sqrt %18 : vector<32x1xf32>
    %20 = vector.broadcast %5 : vector<1x32xf32> to vector<32x32xf32>
    %21 = arith.mulf %20, %13 : vector<32x32xf32>
    %cst_16 = arith.constant 9.99999997E-7 : f32
    %22 = vector.broadcast %cst_16 : f32 to vector<32x1xf32>
    %23 = arith.addf %19, %22 : vector<32x1xf32>
    %24 = vector.broadcast %23 : vector<32x1xf32> to vector<32x32xf32>
    %25 = arith.divf %21, %24 : vector<32x32xf32>
    %26 = vector.broadcast %7 : vector<1x32xf32> to vector<32x32xf32>
    %27 = arith.addf %25, %26 : vector<32x32xf32>
    %28 = arith.truncf %27 : vector<32x32xf32> to vector<32x32xbf16>
    %c0_17 = arith.constant 0 : index
    %c0_18 = arith.constant 0 : index
    %c0_19 = arith.constant 0 : index
    %29 = vector.load %arg6[%c0_17, %c0_18, %c0_19] : memref<3x32x96xbf16, #tpu.memory_space<vmem>>, vector<1x32x96xbf16>
    %30 = vector.shape_cast %29 : vector<1x32x96xbf16> to vector<32x96xbf16>
    %cst_20 = arith.constant dense<0.000000e+00> : vector<32x96xf32>
    %31 = tpu.matmul %28, %30, %cst_20 {dimension_numbers = #tpu.dot_dimension_numbers<[1], [0], [0], [1], [0, 0, 1, 1], [], []>} : vector<32x32xbf16>, vector<32x96xbf16>, vector<32x96xf32> -> vector<32x96xf32>
    %c0_21 = arith.constant 0 : index
    %c0_22 = arith.constant 0 : index
    %c0_23 = arith.constant 0 : index
    %32 = vector.load %arg7[%c0_21, %c0_22, %c0_23] : memref<3x1x96xf32, #tpu.memory_space<vmem>>, vector<1x1x96xf32>
    %33 = vector.shape_cast %32 : vector<1x1x96xf32> to vector<1x96xf32>
    %34 = vector.broadcast %33 : vector<1x96xf32> to vector<32x96xf32>
    %35 = arith.addf %31, %34 : vector<32x96xf32>
    %36 = vector.extract_strided_slice %35 {offsets = [0, 0], sizes = [32, 32], strides = [1, 1]} : vector<32x96xf32> to vector<32x32xf32>
    %37 = vector.extract_strided_slice %35 {offsets = [0, 32], sizes = [32, 32], strides = [1, 1]} : vector<32x96xf32> to vector<32x32xf32>
    %38 = vector.extract_strided_slice %35 {offsets = [0, 64], sizes = [32, 32], strides = [1, 1]} : vector<32x96xf32> to vector<32x32xf32>
    %39 = tpu.concatenate %37, %37, %37, %37 in 0 : vector<32x32xf32>, vector<32x32xf32>, vector<32x32xf32>, vector<32x32xf32> -> vector<128x32xf32>
    %40 = arith.mulf %39, %2 : vector<128x32xf32>
    %41 = arith.truncf %40 : vector<128x32xf32> to vector<128x32xbf16>
    %42 = tpu.concatenate %38, %38, %38, %38 in 0 : vector<32x32xf32>, vector<32x32xf32>, vector<32x32xf32>, vector<32x32xf32> -> vector<128x32xf32>
    %43 = arith.mulf %42, %2 : vector<128x32xf32>
    %44 = arith.truncf %43 : vector<128x32xf32> to vector<128x32xbf16>
    %45 = arith.truncf %36 : vector<32x32xf32> to vector<32x32xbf16>
    %cst_24 = arith.constant dense<0.000000e+00> : vector<32x128xf32>
    %46 = tpu.matmul %45, %41, %cst_24 {dimension_numbers = #tpu.dot_dimension_numbers<[1], [1], [0], [0], [0, 0, 1, 0], [], []>} : vector<32x32xbf16>, vector<128x32xbf16>, vector<32x128xf32> -> vector<32x128xf32>
    %cst_25 = arith.constant 0.353553385 : f32
    %47 = vector.broadcast %cst_25 : f32 to vector<32x128xf32>
    %48 = arith.mulf %46, %47 : vector<32x128xf32>
    %49 = arith.addf %48, %1 : vector<32x128xf32>
    %cst_26 = arith.constant dense<0xFF800000> : vector<32xf32>
    %50 = vector.multi_reduction <maximumf>, %49, %cst_26 [1] : vector<32x128xf32> to vector<32xf32>
    %51 = vector.shape_cast %50 : vector<32xf32> to vector<32x1xf32>
    %52 = vector.broadcast %51 : vector<32x1xf32> to vector<32x128xf32>
    %53 = arith.subf %49, %52 : vector<32x128xf32>
    %54 = math.exp %53 : vector<32x128xf32>
    %cst_27 = arith.constant dense<0.000000e+00> : vector<32x128xf32>
    %55 = tpu.matmul %54, %3, %cst_27 {dimension_numbers = #tpu.dot_dimension_numbers<[1], [0], [0], [1], [0, 0, 1, 1], [], []>} : vector<32x128xf32>, vector<128x128xf32>, vector<32x128xf32> -> vector<32x128xf32>
    %56 = arith.divf %54, %55 : vector<32x128xf32>
    %57 = arith.truncf %56 : vector<32x128xf32> to vector<32x128xbf16>
    %cst_28 = arith.constant dense<0.000000e+00> : vector<32x32xf32>
    %58 = tpu.matmul %57, %44, %cst_28 {dimension_numbers = #tpu.dot_dimension_numbers<[1], [0], [0], [1], [0, 0, 1, 1], [], []>} : vector<32x128xbf16>, vector<128x32xbf16>, vector<32x32xf32> -> vector<32x32xf32>
    %59 = arith.truncf %58 : vector<32x32xf32> to vector<32x32xbf16>
    %c0_29 = arith.constant 0 : index
    %c0_30 = arith.constant 0 : index
    %c0_31 = arith.constant 0 : index
    %60 = vector.load %arg8[%c0_29, %c0_30, %c0_31] : memref<3x32x32xbf16, #tpu.memory_space<vmem>>, vector<1x32x32xbf16>
    %61 = vector.shape_cast %60 : vector<1x32x32xbf16> to vector<32x32xbf16>
    %cst_32 = arith.constant dense<0.000000e+00> : vector<32x32xf32>
    %62 = tpu.matmul %59, %61, %cst_32 {dimension_numbers = #tpu.dot_dimension_numbers<[1], [0], [0], [1], [0, 0, 1, 1], [], []>} : vector<32x32xbf16>, vector<32x32xbf16>, vector<32x32xf32> -> vector<32x32xf32>
    %63 = arith.addf %0, %62 : vector<32x32xf32>
    %c0_33 = arith.constant 0 : index
    %c0_34 = arith.constant 0 : index
    %c0_35 = arith.constant 0 : index
    %64 = vector.load %arg9[%c0_33, %c0_34, %c0_35] : memref<3x1x32xf32, #tpu.memory_space<vmem>>, vector<1x1x32xf32>
    %65 = vector.shape_cast %64 : vector<1x1x32xf32> to vector<1x32xf32>
    %66 = vector.broadcast %65 : vector<1x32xf32> to vector<32x32xf32>
    %67 = arith.addf %63, %66 : vector<32x32xf32>
    %c0_36 = arith.constant 0 : index
    %c0_37 = arith.constant 0 : index
    %c0_38 = arith.constant 0 : index
    %68 = vector.load %arg10[%c0_36, %c0_37, %c0_38] : memref<3x1x32xf32, #tpu.memory_space<vmem>>, vector<1x1x32xf32>
    %69 = vector.shape_cast %68 : vector<1x1x32xf32> to vector<1x32xf32>
    %c0_39 = arith.constant 0 : index
    %c0_40 = arith.constant 0 : index
    %c0_41 = arith.constant 0 : index
    %70 = vector.load %arg11[%c0_39, %c0_40, %c0_41] : memref<3x1x32xf32, #tpu.memory_space<vmem>>, vector<1x1x32xf32>
    %71 = vector.shape_cast %70 : vector<1x1x32xf32> to vector<1x32xf32>
    %cst_42 = arith.constant dense<0.000000e+00> : vector<32xf32>
    %72 = vector.multi_reduction <add>, %67, %cst_42 [1] : vector<32x32xf32> to vector<32xf32>
    %73 = vector.shape_cast %72 : vector<32xf32> to vector<32x1xf32>
    %cst_43 = arith.constant 3.200000e+01 : f32
    %74 = vector.broadcast %cst_43 : f32 to vector<32x1xf32>
    %75 = arith.divf %73, %74 : vector<32x1xf32>
    %76 = vector.broadcast %75 : vector<32x1xf32> to vector<32x32xf32>
    %77 = arith.subf %67, %76 : vector<32x32xf32>
    %78 = arith.mulf %77, %77 : vector<32x32xf32>
    %cst_44 = arith.constant dense<0.000000e+00> : vector<32xf32>
    %79 = vector.multi_reduction <add>, %78, %cst_44 [1] : vector<32x32xf32> to vector<32xf32>
    %80 = vector.shape_cast %79 : vector<32xf32> to vector<32x1xf32>
    %cst_45 = arith.constant 0.0322580636 : f32
    %81 = vector.broadcast %cst_45 : f32 to vector<32x1xf32>
    %82 = arith.mulf %80, %81 : vector<32x1xf32>
    %83 = math.sqrt %82 : vector<32x1xf32>
    %84 = vector.broadcast %69 : vector<1x32xf32> to vector<32x32xf32>
    %85 = arith.mulf %84, %77 : vector<32x32xf32>
    %cst_46 = arith.constant 9.99999997E-7 : f32
    %86 = vector.broadcast %cst_46 : f32 to vector<32x1xf32>
    %87 = arith.addf %83, %86 : vector<32x1xf32>
    %88 = vector.broadcast %87 : vector<32x1xf32> to vector<32x32xf32>
    %89 = arith.divf %85, %88 : vector<32x32xf32>
    %90 = vector.broadcast %71 : vector<1x32xf32> to vector<32x32xf32>
    %91 = arith.addf %89, %90 : vector<32x32xf32>
    %92 = arith.truncf %91 : vector<32x32xf32> to vector<32x32xbf16>
    %c0_47 = arith.constant 0 : index
    %c0_48 = arith.constant 0 : index
    %c0_49 = arith.constant 0 : index
    %93 = vector.load %arg12[%c0_47, %c0_48, %c0_49] : memref<3x32x64xbf16, #tpu.memory_space<vmem>>, vector<1x32x64xbf16>
    %94 = vector.shape_cast %93 : vector<1x32x64xbf16> to vector<32x64xbf16>
    %cst_50 = arith.constant dense<0.000000e+00> : vector<32x64xf32>
    %95 = tpu.matmul %92, %94, %cst_50 {dimension_numbers = #tpu.dot_dimension_numbers<[1], [0], [0], [1], [0, 0, 1, 1], [], []>} : vector<32x32xbf16>, vector<32x64xbf16>, vector<32x64xf32> -> vector<32x64xf32>
    %c0_51 = arith.constant 0 : index
    %c0_52 = arith.constant 0 : index
    %c0_53 = arith.constant 0 : index
    %96 = vector.load %arg13[%c0_51, %c0_52, %c0_53] : memref<3x1x64xf32, #tpu.memory_space<vmem>>, vector<1x1x64xf32>
    %97 = vector.shape_cast %96 : vector<1x1x64xf32> to vector<1x64xf32>
    %98 = vector.broadcast %97 : vector<1x64xf32> to vector<32x64xf32>
    %99 = arith.addf %95, %98 : vector<32x64xf32>
    %cst_54 = arith.constant 0.000000e+00 : f32
    %100 = vector.broadcast %cst_54 : f32 to vector<32x64xf32>
    %101 = arith.maximumf %99, %100 : vector<32x64xf32>
    %102 = arith.truncf %101 : vector<32x64xf32> to vector<32x64xbf16>
    %c0_55 = arith.constant 0 : index
    %c0_56 = arith.constant 0 : index
    %c0_57 = arith.constant 0 : index
    %103 = vector.load %arg14[%c0_55, %c0_56, %c0_57] : memref<3x64x32xbf16, #tpu.memory_space<vmem>>, vector<1x64x32xbf16>
    %104 = vector.shape_cast %103 : vector<1x64x32xbf16> to vector<64x32xbf16>
    %cst_58 = arith.constant dense<0.000000e+00> : vector<32x32xf32>
    %105 = tpu.matmul %102, %104, %cst_58 {dimension_numbers = #tpu.dot_dimension_numbers<[1], [0], [0], [1], [0, 0, 1, 1], [], []>} : vector<32x64xbf16>, vector<64x32xbf16>, vector<32x32xf32> -> vector<32x32xf32>
    %106 = arith.addf %67, %105 : vector<32x32xf32>
    %c0_59 = arith.constant 0 : index
    %c0_60 = arith.constant 0 : index
    %c0_61 = arith.constant 0 : index
    %107 = vector.load %arg15[%c0_59, %c0_60, %c0_61] : memref<3x1x32xf32, #tpu.memory_space<vmem>>, vector<1x1x32xf32>
    %108 = vector.shape_cast %107 : vector<1x1x32xf32> to vector<1x32xf32>
    %109 = vector.broadcast %108 : vector<1x32xf32> to vector<32x32xf32>
    %110 = arith.addf %106, %109 : vector<32x32xf32>
    %c1 = arith.constant 1 : index
    %c0_62 = arith.constant 0 : index
    %c0_63 = arith.constant 0 : index
    %111 = vector.load %arg4[%c1, %c0_62, %c0_63] : memref<3x1x32xf32, #tpu.memory_space<vmem>>, vector<1x1x32xf32>
    %112 = vector.shape_cast %111 : vector<1x1x32xf32> to vector<1x32xf32>
    %c1_64 = arith.constant 1 : index
    %c0_65 = arith.constant 0 : index
    %c0_66 = arith.constant 0 : index
    %113 = vector.load %arg5[%c1_64, %c0_65, %c0_66] : memref<3x1x32xf32, #tpu.memory_space<vmem>>, vector<1x1x32xf32>
    %114 = vector.shape_cast %113 : vector<1x1x32xf32> to vector<1x32xf32>
    %cst_67 = arith.constant dense<0.000000e+00> : vector<32xf32>
    %115 = vector.multi_reduction <add>, %110, %cst_67 [1] : vector<32x32xf32> to vector<32xf32>
    %116 = vector.shape_cast %115 : vector<32xf32> to vector<32x1xf32>
    %cst_68 = arith.constant 3.200000e+01 : f32
    %117 = vector.broadcast %cst_68 : f32 to vector<32x1xf32>
    %118 = arith.divf %116, %117 : vector<32x1xf32>
    %119 = vector.broadcast %118 : vector<32x1xf32> to vector<32x32xf32>
    %120 = arith.subf %110, %119 : vector<32x32xf32>
    %121 = arith.mulf %120, %120 : vector<32x32xf32>
    %cst_69 = arith.constant dense<0.000000e+00> : vector<32xf32>
    %122 = vector.multi_reduction <add>, %121, %cst_69 [1] : vector<32x32xf32> to vector<32xf32>
    %123 = vector.shape_cast %122 : vector<32xf32> to vector<32x1xf32>
    %cst_70 = arith.constant 0.0322580636 : f32
    %124 = vector.broadcast %cst_70 : f32 to vector<32x1xf32>
    %125 = arith.mulf %123, %124 : vector<32x1xf32>
    %126 = math.sqrt %125 : vector<32x1xf32>
    %127 = vector.broadcast %112 : vector<1x32xf32> to vector<32x32xf32>
    %128 = arith.mulf %127, %120 : vector<32x32xf32>
    %cst_71 = arith.constant 9.99999997E-7 : f32
    %129 = vector.broadcast %cst_71 : f32 to vector<32x1xf32>
    %130 = arith.addf %126, %129 : vector<32x1xf32>
    %131 = vector.broadcast %130 : vector<32x1xf32> to vector<32x32xf32>
    %132 = arith.divf %128, %131 : vector<32x32xf32>
    %133 = vector.broadcast %114 : vector<1x32xf32> to vector<32x32xf32>
    %134 = arith.addf %132, %133 : vector<32x32xf32>
    %135 = arith.truncf %134 : vector<32x32xf32> to vector<32x32xbf16>
    %c1_72 = arith.constant 1 : index
    %c0_73 = arith.constant 0 : index
    %c0_74 = arith.constant 0 : index
    %136 = vector.load %arg6[%c1_72, %c0_73, %c0_74] : memref<3x32x96xbf16, #tpu.memory_space<vmem>>, vector<1x32x96xbf16>
    %137 = vector.shape_cast %136 : vector<1x32x96xbf16> to vector<32x96xbf16>
    %cst_75 = arith.constant dense<0.000000e+00> : vector<32x96xf32>
    %138 = tpu.matmul %135, %137, %cst_75 {dimension_numbers = #tpu.dot_dimension_numbers<[1], [0], [0], [1], [0, 0, 1, 1], [], []>} : vector<32x32xbf16>, vector<32x96xbf16>, vector<32x96xf32> -> vector<32x96xf32>
    %c1_76 = arith.constant 1 : index
    %c0_77 = arith.constant 0 : index
    %c0_78 = arith.constant 0 : index
    %139 = vector.load %arg7[%c1_76, %c0_77, %c0_78] : memref<3x1x96xf32, #tpu.memory_space<vmem>>, vector<1x1x96xf32>
    %140 = vector.shape_cast %139 : vector<1x1x96xf32> to vector<1x96xf32>
    %141 = vector.broadcast %140 : vector<1x96xf32> to vector<32x96xf32>
    %142 = arith.addf %138, %141 : vector<32x96xf32>
    %143 = vector.extract_strided_slice %142 {offsets = [0, 0], sizes = [32, 32], strides = [1, 1]} : vector<32x96xf32> to vector<32x32xf32>
    %144 = vector.extract_strided_slice %142 {offsets = [0, 32], sizes = [32, 32], strides = [1, 1]} : vector<32x96xf32> to vector<32x32xf32>
    %145 = vector.extract_strided_slice %142 {offsets = [0, 64], sizes = [32, 32], strides = [1, 1]} : vector<32x96xf32> to vector<32x32xf32>
    %146 = tpu.concatenate %144, %144, %144, %144 in 0 : vector<32x32xf32>, vector<32x32xf32>, vector<32x32xf32>, vector<32x32xf32> -> vector<128x32xf32>
    %147 = arith.mulf %146, %2 : vector<128x32xf32>
    %148 = arith.truncf %147 : vector<128x32xf32> to vector<128x32xbf16>
    %149 = tpu.concatenate %145, %145, %145, %145 in 0 : vector<32x32xf32>, vector<32x32xf32>, vector<32x32xf32>, vector<32x32xf32> -> vector<128x32xf32>
    %150 = arith.mulf %149, %2 : vector<128x32xf32>
    %151 = arith.truncf %150 : vector<128x32xf32> to vector<128x32xbf16>
    %152 = arith.truncf %143 : vector<32x32xf32> to vector<32x32xbf16>
    %cst_79 = arith.constant dense<0.000000e+00> : vector<32x128xf32>
    %153 = tpu.matmul %152, %148, %cst_79 {dimension_numbers = #tpu.dot_dimension_numbers<[1], [1], [0], [0], [0, 0, 1, 0], [], []>} : vector<32x32xbf16>, vector<128x32xbf16>, vector<32x128xf32> -> vector<32x128xf32>
    %cst_80 = arith.constant 0.353553385 : f32
    %154 = vector.broadcast %cst_80 : f32 to vector<32x128xf32>
    %155 = arith.mulf %153, %154 : vector<32x128xf32>
    %156 = arith.addf %155, %1 : vector<32x128xf32>
    %cst_81 = arith.constant dense<0xFF800000> : vector<32xf32>
    %157 = vector.multi_reduction <maximumf>, %156, %cst_81 [1] : vector<32x128xf32> to vector<32xf32>
    %158 = vector.shape_cast %157 : vector<32xf32> to vector<32x1xf32>
    %159 = vector.broadcast %158 : vector<32x1xf32> to vector<32x128xf32>
    %160 = arith.subf %156, %159 : vector<32x128xf32>
    %161 = math.exp %160 : vector<32x128xf32>
    %cst_82 = arith.constant dense<0.000000e+00> : vector<32x128xf32>
    %162 = tpu.matmul %161, %3, %cst_82 {dimension_numbers = #tpu.dot_dimension_numbers<[1], [0], [0], [1], [0, 0, 1, 1], [], []>} : vector<32x128xf32>, vector<128x128xf32>, vector<32x128xf32> -> vector<32x128xf32>
    %163 = arith.divf %161, %162 : vector<32x128xf32>
    %164 = arith.truncf %163 : vector<32x128xf32> to vector<32x128xbf16>
    %cst_83 = arith.constant dense<0.000000e+00> : vector<32x32xf32>
    %165 = tpu.matmul %164, %151, %cst_83 {dimension_numbers = #tpu.dot_dimension_numbers<[1], [0], [0], [1], [0, 0, 1, 1], [], []>} : vector<32x128xbf16>, vector<128x32xbf16>, vector<32x32xf32> -> vector<32x32xf32>
    %166 = arith.truncf %165 : vector<32x32xf32> to vector<32x32xbf16>
    %c1_84 = arith.constant 1 : index
    %c0_85 = arith.constant 0 : index
    %c0_86 = arith.constant 0 : index
    %167 = vector.load %arg8[%c1_84, %c0_85, %c0_86] : memref<3x32x32xbf16, #tpu.memory_space<vmem>>, vector<1x32x32xbf16>
    %168 = vector.shape_cast %167 : vector<1x32x32xbf16> to vector<32x32xbf16>
    %cst_87 = arith.constant dense<0.000000e+00> : vector<32x32xf32>
    %169 = tpu.matmul %166, %168, %cst_87 {dimension_numbers = #tpu.dot_dimension_numbers<[1], [0], [0], [1], [0, 0, 1, 1], [], []>} : vector<32x32xbf16>, vector<32x32xbf16>, vector<32x32xf32> -> vector<32x32xf32>
    %170 = arith.addf %110, %169 : vector<32x32xf32>
    %c1_88 = arith.constant 1 : index
    %c0_89 = arith.constant 0 : index
    %c0_90 = arith.constant 0 : index
    %171 = vector.load %arg9[%c1_88, %c0_89, %c0_90] : memref<3x1x32xf32, #tpu.memory_space<vmem>>, vector<1x1x32xf32>
    %172 = vector.shape_cast %171 : vector<1x1x32xf32> to vector<1x32xf32>
    %173 = vector.broadcast %172 : vector<1x32xf32> to vector<32x32xf32>
    %174 = arith.addf %170, %173 : vector<32x32xf32>
    %c1_91 = arith.constant 1 : index
    %c0_92 = arith.constant 0 : index
    %c0_93 = arith.constant 0 : index
    %175 = vector.load %arg10[%c1_91, %c0_92, %c0_93] : memref<3x1x32xf32, #tpu.memory_space<vmem>>, vector<1x1x32xf32>
    %176 = vector.shape_cast %175 : vector<1x1x32xf32> to vector<1x32xf32>
    %c1_94 = arith.constant 1 : index
    %c0_95 = arith.constant 0 : index
    %c0_96 = arith.constant 0 : index
    %177 = vector.load %arg11[%c1_94, %c0_95, %c0_96] : memref<3x1x32xf32, #tpu.memory_space<vmem>>, vector<1x1x32xf32>
    %178 = vector.shape_cast %177 : vector<1x1x32xf32> to vector<1x32xf32>
    %cst_97 = arith.constant dense<0.000000e+00> : vector<32xf32>
    %179 = vector.multi_reduction <add>, %174, %cst_97 [1] : vector<32x32xf32> to vector<32xf32>
    %180 = vector.shape_cast %179 : vector<32xf32> to vector<32x1xf32>
    %cst_98 = arith.constant 3.200000e+01 : f32
    %181 = vector.broadcast %cst_98 : f32 to vector<32x1xf32>
    %182 = arith.divf %180, %181 : vector<32x1xf32>
    %183 = vector.broadcast %182 : vector<32x1xf32> to vector<32x32xf32>
    %184 = arith.subf %174, %183 : vector<32x32xf32>
    %185 = arith.mulf %184, %184 : vector<32x32xf32>
    %cst_99 = arith.constant dense<0.000000e+00> : vector<32xf32>
    %186 = vector.multi_reduction <add>, %185, %cst_99 [1] : vector<32x32xf32> to vector<32xf32>
    %187 = vector.shape_cast %186 : vector<32xf32> to vector<32x1xf32>
    %cst_100 = arith.constant 0.0322580636 : f32
    %188 = vector.broadcast %cst_100 : f32 to vector<32x1xf32>
    %189 = arith.mulf %187, %188 : vector<32x1xf32>
    %190 = math.sqrt %189 : vector<32x1xf32>
    %191 = vector.broadcast %176 : vector<1x32xf32> to vector<32x32xf32>
    %192 = arith.mulf %191, %184 : vector<32x32xf32>
    %cst_101 = arith.constant 9.99999997E-7 : f32
    %193 = vector.broadcast %cst_101 : f32 to vector<32x1xf32>
    %194 = arith.addf %190, %193 : vector<32x1xf32>
    %195 = vector.broadcast %194 : vector<32x1xf32> to vector<32x32xf32>
    %196 = arith.divf %192, %195 : vector<32x32xf32>
    %197 = vector.broadcast %178 : vector<1x32xf32> to vector<32x32xf32>
    %198 = arith.addf %196, %197 : vector<32x32xf32>
    %199 = arith.truncf %198 : vector<32x32xf32> to vector<32x32xbf16>
    %c1_102 = arith.constant 1 : index
    %c0_103 = arith.constant 0 : index
    %c0_104 = arith.constant 0 : index
    %200 = vector.load %arg12[%c1_102, %c0_103, %c0_104] : memref<3x32x64xbf16, #tpu.memory_space<vmem>>, vector<1x32x64xbf16>
    %201 = vector.shape_cast %200 : vector<1x32x64xbf16> to vector<32x64xbf16>
    %cst_105 = arith.constant dense<0.000000e+00> : vector<32x64xf32>
    %202 = tpu.matmul %199, %201, %cst_105 {dimension_numbers = #tpu.dot_dimension_numbers<[1], [0], [0], [1], [0, 0, 1, 1], [], []>} : vector<32x32xbf16>, vector<32x64xbf16>, vector<32x64xf32> -> vector<32x64xf32>
    %c1_106 = arith.constant 1 : index
    %c0_107 = arith.constant 0 : index
    %c0_108 = arith.constant 0 : index
    %203 = vector.load %arg13[%c1_106, %c0_107, %c0_108] : memref<3x1x64xf32, #tpu.memory_space<vmem>>, vector<1x1x64xf32>
    %204 = vector.shape_cast %203 : vector<1x1x64xf32> to vector<1x64xf32>
    %205 = vector.broadcast %204 : vector<1x64xf32> to vector<32x64xf32>
    %206 = arith.addf %202, %205 : vector<32x64xf32>
    %cst_109 = arith.constant 0.000000e+00 : f32
    %207 = vector.broadcast %cst_109 : f32 to vector<32x64xf32>
    %208 = arith.maximumf %206, %207 : vector<32x64xf32>
    %209 = arith.truncf %208 : vector<32x64xf32> to vector<32x64xbf16>
    %c1_110 = arith.constant 1 : index
    %c0_111 = arith.constant 0 : index
    %c0_112 = arith.constant 0 : index
    %210 = vector.load %arg14[%c1_110, %c0_111, %c0_112] : memref<3x64x32xbf16, #tpu.memory_space<vmem>>, vector<1x64x32xbf16>
    %211 = vector.shape_cast %210 : vector<1x64x32xbf16> to vector<64x32xbf16>
    %cst_113 = arith.constant dense<0.000000e+00> : vector<32x32xf32>
    %212 = tpu.matmul %209, %211, %cst_113 {dimension_numbers = #tpu.dot_dimension_numbers<[1], [0], [0], [1], [0, 0, 1, 1], [], []>} : vector<32x64xbf16>, vector<64x32xbf16>, vector<32x32xf32> -> vector<32x32xf32>
    %213 = arith.addf %174, %212 : vector<32x32xf32>
    %c1_114 = arith.constant 1 : index
    %c0_115 = arith.constant 0 : index
    %c0_116 = arith.constant 0 : index
    %214 = vector.load %arg15[%c1_114, %c0_115, %c0_116] : memref<3x1x32xf32, #tpu.memory_space<vmem>>, vector<1x1x32xf32>
    %215 = vector.shape_cast %214 : vector<1x1x32xf32> to vector<1x32xf32>
    %216 = vector.broadcast %215 : vector<1x32xf32> to vector<32x32xf32>
    %217 = arith.addf %213, %216 : vector<32x32xf32>
    %c2 = arith.constant 2 : index
    %c0_117 = arith.constant 0 : index
    %c0_118 = arith.constant 0 : index
    %218 = vector.load %arg4[%c2, %c0_117, %c0_118] : memref<3x1x32xf32, #tpu.memory_space<vmem>>, vector<1x1x32xf32>
    %219 = vector.shape_cast %218 : vector<1x1x32xf32> to vector<1x32xf32>
    %c2_119 = arith.constant 2 : index
    %c0_120 = arith.constant 0 : index
    %c0_121 = arith.constant 0 : index
    %220 = vector.load %arg5[%c2_119, %c0_120, %c0_121] : memref<3x1x32xf32, #tpu.memory_space<vmem>>, vector<1x1x32xf32>
    %221 = vector.shape_cast %220 : vector<1x1x32xf32> to vector<1x32xf32>
    %cst_122 = arith.constant dense<0.000000e+00> : vector<32xf32>
    %222 = vector.multi_reduction <add>, %217, %cst_122 [1] : vector<32x32xf32> to vector<32xf32>
    %223 = vector.shape_cast %222 : vector<32xf32> to vector<32x1xf32>
    %cst_123 = arith.constant 3.200000e+01 : f32
    %224 = vector.broadcast %cst_123 : f32 to vector<32x1xf32>
    %225 = arith.divf %223, %224 : vector<32x1xf32>
    %226 = vector.broadcast %225 : vector<32x1xf32> to vector<32x32xf32>
    %227 = arith.subf %217, %226 : vector<32x32xf32>
    %228 = arith.mulf %227, %227 : vector<32x32xf32>
    %cst_124 = arith.constant dense<0.000000e+00> : vector<32xf32>
    %229 = vector.multi_reduction <add>, %228, %cst_124 [1] : vector<32x32xf32> to vector<32xf32>
    %230 = vector.shape_cast %229 : vector<32xf32> to vector<32x1xf32>
    %cst_125 = arith.constant 0.0322580636 : f32
    %231 = vector.broadcast %cst_125 : f32 to vector<32x1xf32>
    %232 = arith.mulf %230, %231 : vector<32x1xf32>
    %233 = math.sqrt %232 : vector<32x1xf32>
    %234 = vector.broadcast %219 : vector<1x32xf32> to vector<32x32xf32>
    %235 = arith.mulf %234, %227 : vector<32x32xf32>
    %cst_126 = arith.constant 9.99999997E-7 : f32
    %236 = vector.broadcast %cst_126 : f32 to vector<32x1xf32>
    %237 = arith.addf %233, %236 : vector<32x1xf32>
    %238 = vector.broadcast %237 : vector<32x1xf32> to vector<32x32xf32>
    %239 = arith.divf %235, %238 : vector<32x32xf32>
    %240 = vector.broadcast %221 : vector<1x32xf32> to vector<32x32xf32>
    %241 = arith.addf %239, %240 : vector<32x32xf32>
    %242 = arith.truncf %241 : vector<32x32xf32> to vector<32x32xbf16>
    %c2_127 = arith.constant 2 : index
    %c0_128 = arith.constant 0 : index
    %c0_129 = arith.constant 0 : index
    %243 = vector.load %arg6[%c2_127, %c0_128, %c0_129] : memref<3x32x96xbf16, #tpu.memory_space<vmem>>, vector<1x32x96xbf16>
    %244 = vector.shape_cast %243 : vector<1x32x96xbf16> to vector<32x96xbf16>
    %cst_130 = arith.constant dense<0.000000e+00> : vector<32x96xf32>
    %245 = tpu.matmul %242, %244, %cst_130 {dimension_numbers = #tpu.dot_dimension_numbers<[1], [0], [0], [1], [0, 0, 1, 1], [], []>} : vector<32x32xbf16>, vector<32x96xbf16>, vector<32x96xf32> -> vector<32x96xf32>
    %c2_131 = arith.constant 2 : index
    %c0_132 = arith.constant 0 : index
    %c0_133 = arith.constant 0 : index
    %246 = vector.load %arg7[%c2_131, %c0_132, %c0_133] : memref<3x1x96xf32, #tpu.memory_space<vmem>>, vector<1x1x96xf32>
    %247 = vector.shape_cast %246 : vector<1x1x96xf32> to vector<1x96xf32>
    %248 = vector.broadcast %247 : vector<1x96xf32> to vector<32x96xf32>
    %249 = arith.addf %245, %248 : vector<32x96xf32>
    %250 = vector.extract_strided_slice %249 {offsets = [0, 0], sizes = [32, 32], strides = [1, 1]} : vector<32x96xf32> to vector<32x32xf32>
    %251 = vector.extract_strided_slice %249 {offsets = [0, 32], sizes = [32, 32], strides = [1, 1]} : vector<32x96xf32> to vector<32x32xf32>
    %252 = vector.extract_strided_slice %249 {offsets = [0, 64], sizes = [32, 32], strides = [1, 1]} : vector<32x96xf32> to vector<32x32xf32>
    %253 = tpu.concatenate %251, %251, %251, %251 in 0 : vector<32x32xf32>, vector<32x32xf32>, vector<32x32xf32>, vector<32x32xf32> -> vector<128x32xf32>
    %254 = arith.mulf %253, %2 : vector<128x32xf32>
    %255 = arith.truncf %254 : vector<128x32xf32> to vector<128x32xbf16>
    %256 = tpu.concatenate %252, %252, %252, %252 in 0 : vector<32x32xf32>, vector<32x32xf32>, vector<32x32xf32>, vector<32x32xf32> -> vector<128x32xf32>
    %257 = arith.mulf %256, %2 : vector<128x32xf32>
    %258 = arith.truncf %257 : vector<128x32xf32> to vector<128x32xbf16>
    %259 = arith.truncf %250 : vector<32x32xf32> to vector<32x32xbf16>
    %cst_134 = arith.constant dense<0.000000e+00> : vector<32x128xf32>
    %260 = tpu.matmul %259, %255, %cst_134 {dimension_numbers = #tpu.dot_dimension_numbers<[1], [1], [0], [0], [0, 0, 1, 0], [], []>} : vector<32x32xbf16>, vector<128x32xbf16>, vector<32x128xf32> -> vector<32x128xf32>
    %cst_135 = arith.constant 0.353553385 : f32
    %261 = vector.broadcast %cst_135 : f32 to vector<32x128xf32>
    %262 = arith.mulf %260, %261 : vector<32x128xf32>
    %263 = arith.addf %262, %1 : vector<32x128xf32>
    %cst_136 = arith.constant dense<0xFF800000> : vector<32xf32>
    %264 = vector.multi_reduction <maximumf>, %263, %cst_136 [1] : vector<32x128xf32> to vector<32xf32>
    %265 = vector.shape_cast %264 : vector<32xf32> to vector<32x1xf32>
    %266 = vector.broadcast %265 : vector<32x1xf32> to vector<32x128xf32>
    %267 = arith.subf %263, %266 : vector<32x128xf32>
    %268 = math.exp %267 : vector<32x128xf32>
    %cst_137 = arith.constant dense<0.000000e+00> : vector<32x128xf32>
    %269 = tpu.matmul %268, %3, %cst_137 {dimension_numbers = #tpu.dot_dimension_numbers<[1], [0], [0], [1], [0, 0, 1, 1], [], []>} : vector<32x128xf32>, vector<128x128xf32>, vector<32x128xf32> -> vector<32x128xf32>
    %270 = arith.divf %268, %269 : vector<32x128xf32>
    %271 = arith.truncf %270 : vector<32x128xf32> to vector<32x128xbf16>
    %cst_138 = arith.constant dense<0.000000e+00> : vector<32x32xf32>
    %272 = tpu.matmul %271, %258, %cst_138 {dimension_numbers = #tpu.dot_dimension_numbers<[1], [0], [0], [1], [0, 0, 1, 1], [], []>} : vector<32x128xbf16>, vector<128x32xbf16>, vector<32x32xf32> -> vector<32x32xf32>
    %273 = arith.truncf %272 : vector<32x32xf32> to vector<32x32xbf16>
    %c2_139 = arith.constant 2 : index
    %c0_140 = arith.constant 0 : index
    %c0_141 = arith.constant 0 : index
    %274 = vector.load %arg8[%c2_139, %c0_140, %c0_141] : memref<3x32x32xbf16, #tpu.memory_space<vmem>>, vector<1x32x32xbf16>
    %275 = vector.shape_cast %274 : vector<1x32x32xbf16> to vector<32x32xbf16>
    %cst_142 = arith.constant dense<0.000000e+00> : vector<32x32xf32>
    %276 = tpu.matmul %273, %275, %cst_142 {dimension_numbers = #tpu.dot_dimension_numbers<[1], [0], [0], [1], [0, 0, 1, 1], [], []>} : vector<32x32xbf16>, vector<32x32xbf16>, vector<32x32xf32> -> vector<32x32xf32>
    %277 = arith.addf %217, %276 : vector<32x32xf32>
    %c2_143 = arith.constant 2 : index
    %c0_144 = arith.constant 0 : index
    %c0_145 = arith.constant 0 : index
    %278 = vector.load %arg9[%c2_143, %c0_144, %c0_145] : memref<3x1x32xf32, #tpu.memory_space<vmem>>, vector<1x1x32xf32>
    %279 = vector.shape_cast %278 : vector<1x1x32xf32> to vector<1x32xf32>
    %280 = vector.broadcast %279 : vector<1x32xf32> to vector<32x32xf32>
    %281 = arith.addf %277, %280 : vector<32x32xf32>
    %c2_146 = arith.constant 2 : index
    %c0_147 = arith.constant 0 : index
    %c0_148 = arith.constant 0 : index
    %282 = vector.load %arg10[%c2_146, %c0_147, %c0_148] : memref<3x1x32xf32, #tpu.memory_space<vmem>>, vector<1x1x32xf32>
    %283 = vector.shape_cast %282 : vector<1x1x32xf32> to vector<1x32xf32>
    %c2_149 = arith.constant 2 : index
    %c0_150 = arith.constant 0 : index
    %c0_151 = arith.constant 0 : index
    %284 = vector.load %arg11[%c2_149, %c0_150, %c0_151] : memref<3x1x32xf32, #tpu.memory_space<vmem>>, vector<1x1x32xf32>
    %285 = vector.shape_cast %284 : vector<1x1x32xf32> to vector<1x32xf32>
    %cst_152 = arith.constant dense<0.000000e+00> : vector<32xf32>
    %286 = vector.multi_reduction <add>, %281, %cst_152 [1] : vector<32x32xf32> to vector<32xf32>
    %287 = vector.shape_cast %286 : vector<32xf32> to vector<32x1xf32>
    %cst_153 = arith.constant 3.200000e+01 : f32
    %288 = vector.broadcast %cst_153 : f32 to vector<32x1xf32>
    %289 = arith.divf %287, %288 : vector<32x1xf32>
    %290 = vector.broadcast %289 : vector<32x1xf32> to vector<32x32xf32>
    %291 = arith.subf %281, %290 : vector<32x32xf32>
    %292 = arith.mulf %291, %291 : vector<32x32xf32>
    %cst_154 = arith.constant dense<0.000000e+00> : vector<32xf32>
    %293 = vector.multi_reduction <add>, %292, %cst_154 [1] : vector<32x32xf32> to vector<32xf32>
    %294 = vector.shape_cast %293 : vector<32xf32> to vector<32x1xf32>
    %cst_155 = arith.constant 0.0322580636 : f32
    %295 = vector.broadcast %cst_155 : f32 to vector<32x1xf32>
    %296 = arith.mulf %294, %295 : vector<32x1xf32>
    %297 = math.sqrt %296 : vector<32x1xf32>
    %298 = vector.broadcast %283 : vector<1x32xf32> to vector<32x32xf32>
    %299 = arith.mulf %298, %291 : vector<32x32xf32>
    %cst_156 = arith.constant 9.99999997E-7 : f32
    %300 = vector.broadcast %cst_156 : f32 to vector<32x1xf32>
    %301 = arith.addf %297, %300 : vector<32x1xf32>
    %302 = vector.broadcast %301 : vector<32x1xf32> to vector<32x32xf32>
    %303 = arith.divf %299, %302 : vector<32x32xf32>
    %304 = vector.broadcast %285 : vector<1x32xf32> to vector<32x32xf32>
    %305 = arith.addf %303, %304 : vector<32x32xf32>
    %306 = arith.truncf %305 : vector<32x32xf32> to vector<32x32xbf16>
    %c2_157 = arith.constant 2 : index
    %c0_158 = arith.constant 0 : index
    %c0_159 = arith.constant 0 : index
    %307 = vector.load %arg12[%c2_157, %c0_158, %c0_159] : memref<3x32x64xbf16, #tpu.memory_space<vmem>>, vector<1x32x64xbf16>
    %308 = vector.shape_cast %307 : vector<1x32x64xbf16> to vector<32x64xbf16>
    %cst_160 = arith.constant dense<0.000000e+00> : vector<32x64xf32>
    %309 = tpu.matmul %306, %308, %cst_160 {dimension_numbers = #tpu.dot_dimension_numbers<[1], [0], [0], [1], [0, 0, 1, 1], [], []>} : vector<32x32xbf16>, vector<32x64xbf16>, vector<32x64xf32> -> vector<32x64xf32>
    %c2_161 = arith.constant 2 : index
    %c0_162 = arith.constant 0 : index
    %c0_163 = arith.constant 0 : index
    %310 = vector.load %arg13[%c2_161, %c0_162, %c0_163] : memref<3x1x64xf32, #tpu.memory_space<vmem>>, vector<1x1x64xf32>
    %311 = vector.shape_cast %310 : vector<1x1x64xf32> to vector<1x64xf32>
    %312 = vector.broadcast %311 : vector<1x64xf32> to vector<32x64xf32>
    %313 = arith.addf %309, %312 : vector<32x64xf32>
    %cst_164 = arith.constant 0.000000e+00 : f32
    %314 = vector.broadcast %cst_164 : f32 to vector<32x64xf32>
    %315 = arith.maximumf %313, %314 : vector<32x64xf32>
    %316 = arith.truncf %315 : vector<32x64xf32> to vector<32x64xbf16>
    %c2_165 = arith.constant 2 : index
    %c0_166 = arith.constant 0 : index
    %c0_167 = arith.constant 0 : index
    %317 = vector.load %arg14[%c2_165, %c0_166, %c0_167] : memref<3x64x32xbf16, #tpu.memory_space<vmem>>, vector<1x64x32xbf16>
    %318 = vector.shape_cast %317 : vector<1x64x32xbf16> to vector<64x32xbf16>
    %cst_168 = arith.constant dense<0.000000e+00> : vector<32x32xf32>
    %319 = tpu.matmul %316, %318, %cst_168 {dimension_numbers = #tpu.dot_dimension_numbers<[1], [0], [0], [1], [0, 0, 1, 1], [], []>} : vector<32x64xbf16>, vector<64x32xbf16>, vector<32x32xf32> -> vector<32x32xf32>
    %320 = arith.addf %281, %319 : vector<32x32xf32>
    %c2_169 = arith.constant 2 : index
    %c0_170 = arith.constant 0 : index
    %c0_171 = arith.constant 0 : index
    %321 = vector.load %arg15[%c2_169, %c0_170, %c0_171] : memref<3x1x32xf32, #tpu.memory_space<vmem>>, vector<1x1x32xf32>
    %322 = vector.shape_cast %321 : vector<1x1x32xf32> to vector<1x32xf32>
    %323 = vector.broadcast %322 : vector<1x32xf32> to vector<32x32xf32>
    %324 = arith.addf %320, %323 : vector<32x32xf32>
    %c0_172 = arith.constant 0 : index
    %c0_173 = arith.constant 0 : index
    %325 = vector.load %arg16[%c0_172, %c0_173] : memref<1x32xf32, #tpu.memory_space<vmem>>, vector<1x32xf32>
    %c0_174 = arith.constant 0 : index
    %c0_175 = arith.constant 0 : index
    %326 = vector.load %arg17[%c0_174, %c0_175] : memref<1x32xf32, #tpu.memory_space<vmem>>, vector<1x32xf32>
    %cst_176 = arith.constant dense<0.000000e+00> : vector<32xf32>
    %327 = vector.multi_reduction <add>, %324, %cst_176 [1] : vector<32x32xf32> to vector<32xf32>
    %328 = vector.shape_cast %327 : vector<32xf32> to vector<32x1xf32>
    %cst_177 = arith.constant 3.200000e+01 : f32
    %329 = vector.broadcast %cst_177 : f32 to vector<32x1xf32>
    %330 = arith.divf %328, %329 : vector<32x1xf32>
    %331 = vector.broadcast %330 : vector<32x1xf32> to vector<32x32xf32>
    %332 = arith.subf %324, %331 : vector<32x32xf32>
    %333 = arith.mulf %332, %332 : vector<32x32xf32>
    %cst_178 = arith.constant dense<0.000000e+00> : vector<32xf32>
    %334 = vector.multi_reduction <add>, %333, %cst_178 [1] : vector<32x32xf32> to vector<32xf32>
    %335 = vector.shape_cast %334 : vector<32xf32> to vector<32x1xf32>
    %cst_179 = arith.constant 0.0322580636 : f32
    %336 = vector.broadcast %cst_179 : f32 to vector<32x1xf32>
    %337 = arith.mulf %335, %336 : vector<32x1xf32>
    %338 = math.sqrt %337 : vector<32x1xf32>
    %339 = vector.broadcast %325 : vector<1x32xf32> to vector<32x32xf32>
    %340 = arith.mulf %339, %332 : vector<32x32xf32>
    %cst_180 = arith.constant 9.99999997E-7 : f32
    %341 = vector.broadcast %cst_180 : f32 to vector<32x1xf32>
    %342 = arith.addf %338, %341 : vector<32x1xf32>
    %343 = vector.broadcast %342 : vector<32x1xf32> to vector<32x32xf32>
    %344 = arith.divf %340, %343 : vector<32x32xf32>
    %345 = vector.broadcast %326 : vector<1x32xf32> to vector<32x32xf32>
    %346 = arith.addf %344, %345 : vector<32x32xf32>
    %c0_181 = arith.constant 0 : index
    %c0_182 = arith.constant 0 : index
    %347 = vector.load %arg18[%c0_181, %c0_182] : memref<32x32xf32, #tpu.memory_space<vmem>>, vector<32x32xf32>
    tpu.vector_store %arg18[%c0_181, %c0_182], %346 {strides = array<i32>} : memref<32x32xf32, #tpu.memory_space<vmem>>, vector<32x32xf32>,
    return
  }
}

</mosaic_0001>

<llo_original>
// kernel: eq.29
$region0: #{eq.29}
  %s0 = inlined_call_operand.vmem [shape: s32[4,32], index: 0, kind: input, shape index: {}]
  %s1 = inlined_call_operand.vmem [shape: s32[128], index: 1, kind: output, shape index: {}]
  $region1: #{eq.29} parent=0
    #allocation0 [shape = 'u8[4096]{0}', space=vmem, size = 0x1000, scoped, tag = 'scoped mem for output reshape']
    #allocation1 [shape = 'u8[4096]{0}', space=vmem, size = 0x1000, scoped, tag = 'scoped mem for input reshape']
    %s3 = sshllo.u32 0, 4
    %v4 = vld [vmem:[%s0] sm:%s3]
    %5 = vst [vmem:[#allocation1] sm:%s3] %v4
    %v6 = vld [vmem:[#allocation1] sm:$0x1]
    %vm7 = vcmask 261120
    %8 = vst.msk [vmem:[#allocation0] sm:$0x1] %vm7, %v6
    %s9 = scalar_lea.vmem [#allocation1], 3
    %v10 = vld [vmem:[%s9] sm:$0x1]
    %11 = vrot.lane.b32.xlu0 %v10, 96
    %v12 = vpop.permute.xlu0 %11
    %vm13 = vcmask 1048320
    %14 = vst.msk [vmem:[#allocation0] sm:$0x1] %vm13, %v12
    %s15 = scalar_lea.vmem [#allocation1], 2
    %v16 = vld [vmem:[%s15] sm:$0x1]
    %17 = vrot.lane.b32.xlu0 %v16, 64
    %v18 = vpop.permute.xlu0 %17
    %vm19 = vcmask 785920
    %20 = vst.msk [vmem:[#allocation0] sm:$0x1] %vm19, %v18
    %s21 = scalar_lea.vmem [#allocation1], 1
    %v22 = vld [vmem:[%s21] sm:$0x1]
    %23 = vrot.lane.b32.xlu0 %v22, 32
    %v24 = vpop.permute.xlu0 %23
    %vm25 = vcmask 523520
    %26 = vst.msk [vmem:[#allocation0] sm:$0x1] %vm25, %v24
    %s28 = sshllo.u32 0, 1
    %v30 = vld [vmem:[#allocation0] sm:%s28]
    %s31 = sshllo.u32 0, 1
    %32 = vst [vmem:[%s1] sm:%s31] %v30

// kernel: tile.9
$region0: #{tile.9}
  %s0 = inlined_call_operand.vmem [shape: f32[32,4,32], index: 0, kind: input, shape index: {}]
  %s1 = inlined_call_operand.vmem [shape: f32[32,128], index: 1, kind: output, shape index: {}]
  $region1: #{tile.9} parent=0
    #allocation0 [shape = 'u8[131072]{0}', space=vmem, size = 0x20000, scoped, tag = 'scoped mem for input reshape']
    %s3 = sshllo.u32 0, 4
    %s4 = smul.addr 4, 31
    %s5 = scalar_lea.vmem %s0, %s4
    %v6 = vld [vmem:[%s5] sm:%s3]
    %s7 = scalar_lea.vmem [#allocation0], 248
    %8 = vst [vmem:[%s7] sm:%s3] %v6
    %s9 = smul.addr 4, 30
    %s10 = scalar_lea.vmem %s0, %s9
    %v11 = vld [vmem:[%s10] sm:%s3]
    %s12 = scalar_lea.vmem [#allocation0], 240
    %13 = vst [vmem:[%s12] sm:%s3] %v11
    %s14 = smul.addr 4, 29
    %s15 = scalar_lea.vmem %s0, %s14
    %v16 = vld [vmem:[%s15] sm:%s3]
    %s17 = scalar_lea.vmem [#allocation0], 232
    %18 = vst [vmem:[%s17] sm:%s3] %v16
    %s19 = smul.addr 4, 28
    %s20 = scalar_lea.vmem %s0, %s19
    %v21 = vld [vmem:[%s20] sm:%s3]
    %s22 = scalar_lea.vmem [#allocation0], 224
    %23 = vst [vmem:[%s22] sm:%s3] %v21
    %s24 = smul.addr 4, 27
    %s25 = scalar_lea.vmem %s0, %s24
    %v26 = vld [vmem:[%s25] sm:%s3]
    %s27 = scalar_lea.vmem [#allocation0], 216
    %28 = vst [vmem:[%s27] sm:%s3] %v26
    %s29 = smul.addr 4, 26
    %s30 = scalar_lea.vmem %s0, %s29
    %v31 = vld [vmem:[%s30] sm:%s3]
    %s32 = scalar_lea.vmem [#allocation0], 208
    %33 = vst [vmem:[%s32] sm:%s3] %v31
    %s34 = smul.addr 4, 25
    %s35 = scalar_lea.vmem %s0, %s34
    %v36 = vld [vmem:[%s35] sm:%s3]
    %s37 = scalar_lea.vmem [#allocation0], 200
    %38 = vst [vmem:[%s37] sm:%s3] %v36
    %s39 = smul.addr 4, 24
    %s40 = scalar_lea.vmem %s0, %s39
    %v41 = vld [vmem:[%s40] sm:%s3]
    %s42 = scalar_lea.vmem [#allocation0], 192
    %43 = vst [vmem:[%s42] sm:%s3] %v41
    %s44 = smul.addr 4, 23
    %s45 = scalar_lea.vmem %s0, %s44
    %v46 = vld [vmem:[%s45] sm:%s3]
    %s47 = scalar_lea.vmem [#allocation0], 184
    %48 = vst [vmem:[%s47] sm:%s3] %v46
    %s49 = smul.addr 4, 22
    %s50 = scalar_lea.vmem %s0, %s49
    %v51 = vld [vmem:[%s50] sm:%s3]
    %s52 = scalar_lea.vmem [#allocation0], 176
    %53 = vst [vmem:[%s52] sm:%s3] %v51
    %s54 = smul.addr 4, 21
    %s55 = scalar_lea.vmem %s0, %s54
    %v56 = vld [vmem:[%s55] sm:%s3]
    %s57 = scalar_lea.vmem [#allocation0], 168
    %58 = vst [vmem:[%s57] sm:%s3] %v56
    %s59 = smul.addr 4, 20
    %s60 = scalar_lea.vmem %s0, %s59
    %v61 = vld [vmem:[%s60] sm:%s3]
    %s62 = scalar_lea.vmem [#allocation0], 160
    %63 = vst [vmem:[%s62] sm:%s3] %v61
    %s64 = smul.addr 4, 19
    %s65 = scalar_lea.vmem %s0, %s64
    %v66 = vld [vmem:[%s65] sm:%s3]
    %s67 = scalar_lea.vmem [#allocation0], 152
    %68 = vst [vmem:[%s67] sm:%s3] %v66
    %s69 = smul.addr 4, 18
    %s70 = scalar_lea.vmem %s0, %s69
    %v71 = vld [vmem:[%s70] sm:%s3]
    %s72 = scalar_lea.vmem [#allocation0], 144
    %73 = vst [vmem:[%s72] sm:%s3] %v71
    %s74 = smul.addr 4, 17
    %s75 = scalar_lea.vmem %s0, %s74
    %v76 = vld [vmem:[%s75] sm:%s3]
    %s77 = scalar_lea.vmem [#allocation0], 136
    %78 = vst [vmem:[%s77] sm:%s3] %v76
    %s79 = smul.addr 4, 16
    %s80 = scalar_lea.vmem %s0, %s79
    %v81 = vld [vmem:[%s80] sm:%s3]
    %s82 = scalar_lea.vmem [#allocation0], 128
    %83 = vst [vmem:[%s82] sm:%s3] %v81
    %s84 = smul.addr 4, 15
    %s85 = scalar_lea.vmem %s0, %s84
    %v86 = vld [vmem:[%s85] sm:%s3]
    %s87 = scalar_lea.vmem [#allocation0], 120
    %88 = vst [vmem:[%s87] sm:%s3] %v86
    %s89 = smul.addr 4, 14
    %s90 = scalar_lea.vmem %s0, %s89
    %v91 = vld [vmem:[%s90] sm:%s3]
    %s92 = scalar_lea.vmem [#allocation0], 112
    %93 = vst [vmem:[%s92] sm:%s3] %v91
    %s94 = smul.addr 4, 13
    %s95 = scalar_lea.vmem %s0, %s94
    %v96 = vld [vmem:[%s95] sm:%s3]
    %s97 = scalar_lea.vmem [#allocation0], 104
    %98 = vst [vmem:[%s97] sm:%s3] %v96
    %s99 = smul.addr 4, 12
    %s100 = scalar_lea.vmem %s0, %s99
    %v101 = vld [vmem:[%s100] sm:%s3]
    %s102 = scalar_lea.vmem [#allocation0], 96
    %103 = vst [vmem:[%s102] sm:%s3] %v101
    %s104 = smul.addr 4, 11
    %s105 = scalar_lea.vmem %s0, %s104
    %v106 = vld [vmem:[%s105] sm:%s3]
    %s107 = scalar_lea.vmem [#allocation0], 88
    %108 = vst [vmem:[%s107] sm:%s3] %v106
    %s109 = smul.addr 4, 10
    %s110 = scalar_lea.vmem %s0, %s109
    %v111 = vld [vmem:[%s110] sm:%s3]
    %s112 = scalar_lea.vmem [#allocation0], 80
    %113 = vst [vmem:[%s112] sm:%s3] %v111
    %s114 = smul.addr 4, 9
    %s115 = scalar_lea.vmem %s0, %s114
    %v116 = vld [vmem:[%s115] sm:%s3]
    %s117 = scalar_lea.vmem [#allocation0], 72
    %118 = vst [vmem:[%s117] sm:%s3] %v116
    %s119 = smul.addr 4, 8
    %s120 = scalar_lea.vmem %s0, %s119
    %v121 = vld [vmem:[%s120] sm:%s3]
    %s122 = scalar_lea.vmem [#allocation0], 64
    %123 = vst [vmem:[%s122] sm:%s3] %v121
    %s124 = smul.addr 4, 7
    %s125 = scalar_lea.vmem %s0, %s124
    %v126 = vld [vmem:[%s125] sm:%s3]
    %s127 = scalar_lea.vmem [#allocation0], 56
    %128 = vst [vmem:[%s127] sm:%s3] %v126
    %s129 = smul.addr 4, 6
    %s130 = scalar_lea.vmem %s0, %s129
    %v131 = vld [vmem:[%s130] sm:%s3]
    %s132 = scalar_lea.vmem [#allocation0], 48
    %133 = vst [vmem:[%s132] sm:%s3] %v131
    %s134 = smul.addr 4, 5
    %s135 = scalar_lea.vmem %s0, %s134
    %v136 = vld [vmem:[%s135] sm:%s3]
    %s137 = scalar_lea.vmem [#allocation0], 40
    %138 = vst [vmem:[%s137] sm:%s3] %v136
    %s139 = smul.addr 4, 4
    %s140 = scalar_lea.vmem %s0, %s139
    %v141 = vld [vmem:[%s140] sm:%s3]
    %s142 = scalar_lea.vmem [#allocation0], 32
    %143 = vst [vmem:[%s142] sm:%s3] %v141
    %s144 = smul.addr 4, 3
    %s145 = scalar_lea.vmem %s0, %s144
    %v146 = vld [vmem:[%s145] sm:%s3]
    %s147 = scalar_lea.vmem [#allocation0], 24
    %148 = vst [vmem:[%s147] sm:%s3] %v146
    %s149 = smul.addr 4, 2
    %s150 = scalar_lea.vmem %s0, %s149
    %v151 = vld [vmem:[%s150] sm:%s3]
    %s152 = scalar_lea.vmem [#allocation0], 16
    %153 = vst [vmem:[%s152] sm:%s3] %v151
    %s154 = scalar_lea.vmem %s0, 4
    %v155 = vld [vmem:[%s154] sm:%s3]
    %s156 = scalar_lea.vmem [#allocation0], 8
    %157 = vst [vmem:[%s156] sm:%s3] %v155
    %v158 = vld [vmem:[%s0] sm:%s3]
    %159 = vst [vmem:[#allocation0] sm:%s3] %v158
    %v160 = vld [vmem:[#allocation0] ss:$8 sm:$0xf]
    %v161 = vld [vmem:[#allocation0] ss:$8 sm:$0xf0]
    %vm162 = vcmask 1047556
    %v163 = vsel %vm162, %v161, %v160
    %vm164 = vcmask 261120
    %165 = vst.msk [vmem:[%s1] sm:$0xff] %vm164, %v163
    %s166 = scalar_lea.vmem [#allocation0], 64
    %v167 = vld [vmem:[%s166] ss:$8 sm:$0xf]
    %s168 = scalar_lea.vmem [#allocation0], 64
    %v169 = vld [vmem:[%s168] ss:$8 sm:$0xf0]
    %vm170 = vcmask 1047556
    %v171 = vsel %vm170, %v169, %v167
    %vm172 = vcmask 261120
    %s173 = scalar_lea.vmem %s1, 8
    %174 = vst.msk [vmem:[%s173] sm:$0xff] %vm172, %v171
    %s175 = scalar_lea.vmem [#allocation0], 128
    %v176 = vld [vmem:[%s175] ss:$8 sm:$0xf]
    %s177 = scalar_lea.vmem [#allocation0], 128
    %v178 = vld [vmem:[%s177] ss:$8 sm:$0xf0]
    %vm179 = vcmask 1047556
    %v180 = vsel %vm179, %v178, %v176
    %vm181 = vcmask 261120
    %s182 = scalar_lea.vmem %s1, 16
    %183 = vst.msk [vmem:[%s182] sm:$0xff] %vm181, %v180
    %s184 = scalar_lea.vmem [#allocation0], 192
    %v185 = vld [vmem:[%s184] ss:$8 sm:$0xf]
    %s186 = scalar_lea.vmem [#allocation0], 192
    %v187 = vld [vmem:[%s186] ss:$8 sm:$0xf0]
    %vm188 = vcmask 1047556
    %v189 = vsel %vm188, %v187, %v185
    %vm190 = vcmask 261120
    %s191 = scalar_lea.vmem %s1, 24
    %192 = vst.msk [vmem:[%s191] sm:$0xff] %vm190, %v189
    %s193 = scalar_lea.vmem [#allocation0], 3
    %v194 = vld [vmem:[%s193] ss:$8 sm:$0xf]
    %s195 = scalar_lea.vmem [#allocation0], 3
    %v196 = vld [vmem:[%s195] ss:$8 sm:$0xf0]
    %vm197 = vcmask 1047556
    %v198 = vsel %vm197, %v196, %v194
    %199 = vrot.lane.b32.xlu0 %v198, 96
    %v200 = vpop.permute.xlu0 %199
    %vm201 = vcmask 1048320
    %202 = vst.msk [vmem:[%s1] sm:$0xff] %vm201, %v200
    %s203 = scalar_lea.vmem [#allocation0], 67
    %v204 = vld [vmem:[%s203] ss:$8 sm:$0xf]
    %s205 = scalar_lea.vmem [#allocation0], 67
    %v206 = vld [vmem:[%s205] ss:$8 sm:$0xf0]
    %vm207 = vcmask 1047556
    %v208 = vsel %vm207, %v206, %v204
    %209 = vrot.lane.b32.xlu0 %v208, 96
    %v210 = vpop.permute.xlu0 %209
    %vm211 = vcmask 1048320
    %s212 = scalar_lea.vmem %s1, 8
    %213 = vst.msk [vmem:[%s212] sm:$0xff] %vm211, %v210
    %s214 = scalar_lea.vmem [#allocation0], 131
    %v215 = vld [vmem:[%s214] ss:$8 sm:$0xf]
    %s216 = scalar_lea.vmem [#allocation0], 131
    %v217 = vld [vmem:[%s216] ss:$8 sm:$0xf0]
    %vm218 = vcmask 1047556
    %v219 = vsel %vm218, %v217, %v215
    %220 = vrot.lane.b32.xlu0 %v219, 96
    %v221 = vpop.permute.xlu0 %220
    %vm222 = vcmask 1048320
    %s223 = scalar_lea.vmem %s1, 16
    %224 = vst.msk [vmem:[%s223] sm:$0xff] %vm222, %v221
    %s225 = scalar_lea.vmem [#allocation0], 195
    %v226 = vld [vmem:[%s225] ss:$8 sm:$0xf]
    %s227 = scalar_lea.vmem [#allocation0], 195
    %v228 = vld [vmem:[%s227] ss:$8 sm:$0xf0]
    %vm229 = vcmask 1047556
    %v230 = vsel %vm229, %v228, %v226
    %231 = vrot.lane.b32.xlu0 %v230, 96
    %v232 = vpop.permute.xlu0 %231
    %vm233 = vcmask 1048320
    %s234 = scalar_lea.vmem %s1, 24
    %235 = vst.msk [vmem:[%s234] sm:$0xff] %vm233, %v232
    %s236 = scalar_lea.vmem [#allocation0], 2
    %v237 = vld [vmem:[%s236] ss:$8 sm:$0xf]
    %s238 = scalar_lea.vmem [#allocation0], 2
    %v239 = vld [vmem:[%s238] ss:$8 sm:$0xf0]
    %vm240 = vcmask 1047556
    %v241 = vsel %vm240, %v239, %v237
    %242 = vrot.lane.b32.xlu0 %v241, 64
    %v243 = vpop.permute.xlu0 %242
    %vm244 = vcmask 785920
    %245 = vst.msk [vmem:[%s1] sm:$0xff] %vm244, %v243
    %s246 = scalar_lea.vmem [#allocation0], 66
    %v247 = vld [vmem:[%s246] ss:$8 sm:$0xf]
    %s248 = scalar_lea.vmem [#allocation0], 66
    %v249 = vld [vmem:[%s248] ss:$8 sm:$0xf0]
    %vm250 = vcmask 1047556
    %v251 = vsel %vm250, %v249, %v247
    %252 = vrot.lane.b32.xlu0 %v251, 64
    %v253 = vpop.permute.xlu0 %252
    %vm254 = vcmask 785920
    %s255 = scalar_lea.vmem %s1, 8
    %256 = vst.msk [vmem:[%s255] sm:$0xff] %vm254, %v253
    %s257 = scalar_lea.vmem [#allocation0], 130
    %v258 = vld [vmem:[%s257] ss:$8 sm:$0xf]
    %s259 = scalar_lea.vmem [#allocation0], 130
    %v260 = vld [vmem:[%s259] ss:$8 sm:$0xf0]
    %vm261 = vcmask 1047556
    %v262 = vsel %vm261, %v260, %v258
    %263 = vrot.lane.b32.xlu0 %v262, 64
    %v264 = vpop.permute.xlu0 %263
    %vm265 = vcmask 785920
    %s266 = scalar_lea.vmem %s1, 16
    %267 = vst.msk [vmem:[%s266] sm:$0xff] %vm265, %v264
    %s268 = scalar_lea.vmem [#allocation0], 194
    %v269 = vld [vmem:[%s268] ss:$8 sm:$0xf]
    %s270 = scalar_lea.vmem [#allocation0], 194
    %v271 = vld [vmem:[%s270] ss:$8 sm:$0xf0]
    %vm272 = vcmask 1047556
    %v273 = vsel %vm272, %v271, %v269
    %274 = vrot.lane.b32.xlu0 %v273, 64
    %v275 = vpop.permute.xlu0 %274
    %vm276 = vcmask 785920
    %s277 = scalar_lea.vmem %s1, 24
    %278 = vst.msk [vmem:[%s277] sm:$0xff] %vm276, %v275
    %s279 = scalar_lea.vmem [#allocation0], 1
    %v280 = vld [vmem:[%s279] ss:$8 sm:$0xf]
    %s281 = scalar_lea.vmem [#allocation0], 1
    %v282 = vld [vmem:[%s281] ss:$8 sm:$0xf0]
    %vm283 = vcmask 1047556
    %v284 = vsel %vm283, %v282, %v280
    %285 = vrot.lane.b32.xlu0 %v284, 32
    %v286 = vpop.permute.xlu0 %285
    %vm287 = vcmask 523520
    %288 = vst.msk [vmem:[%s1] sm:$0xff] %vm287, %v286
    %s289 = scalar_lea.vmem [#allocation0], 65
    %v290 = vld [vmem:[%s289] ss:$8 sm:$0xf]
    %s291 = scalar_lea.vmem [#allocation0], 65
    %v292 = vld [vmem:[%s291] ss:$8 sm:$0xf0]
    %vm293 = vcmask 1047556
    %v294 = vsel %vm293, %v292, %v290
    %295 = vrot.lane.b32.xlu0 %v294, 32
    %v296 = vpop.permute.xlu0 %295
    %vm297 = vcmask 523520
    %s298 = scalar_lea.vmem %s1, 8
    %299 = vst.msk [vmem:[%s298] sm:$0xff] %vm297, %v296
    %s300 = scalar_lea.vmem [#allocation0], 129
    %v301 = vld [vmem:[%s300] ss:$8 sm:$0xf]
    %s302 = scalar_lea.vmem [#allocation0], 129
    %v303 = vld [vmem:[%s302] ss:$8 sm:$0xf0]
    %vm304 = vcmask 1047556
    %v305 = vsel %vm304, %v303, %v301
    %306 = vrot.lane.b32.xlu0 %v305, 32
    %v307 = vpop.permute.xlu0 %306
    %vm308 = vcmask 523520
    %s309 = scalar_lea.vmem %s1, 16
    %310 = vst.msk [vmem:[%s309] sm:$0xff] %vm308, %v307
    %s311 = scalar_lea.vmem [#allocation0], 193
    %v312 = vld [vmem:[%s311] ss:$8 sm:$0xf]
    %s313 = scalar_lea.vmem [#allocation0], 193
    %v314 = vld [vmem:[%s313] ss:$8 sm:$0xf0]
    %vm315 = vcmask 1047556
    %v316 = vsel %vm315, %v314, %v312
    %317 = vrot.lane.b32.xlu0 %v316, 32
    %v318 = vpop.permute.xlu0 %317
    %vm319 = vcmask 523520
    %s320 = scalar_lea.vmem %s1, 24
    %321 = vst.msk [vmem:[%s320] sm:$0xff] %vm319, %v318

// kernel: encoder_pallas.1
$region0: #{encoder_pallas.1}
  #allocation0 [shape = 'u32[]', space=smem, size = 0x4, offset = 0x4, fixed_abs, tag = 'smem constant byte address 0x4 - core index']
  #allocation1 [shape = 'u32[144,128]{1,0:T(1,128)}', space=vmem, size = 0x12000, scoped, tag = 'internal scratch']
  %s0 = inlined_call_operand.vmem [shape: f32[32,32], index: 0, kind: input, shape index: {}]
  %s1 = inlined_call_operand.vmem [shape: f32[32,128], index: 1, kind: input, shape index: {}]
  %s2 = inlined_call_operand.vmem [shape: f32[128,32], index: 2, kind: input, shape index: {}]
  %s3 = inlined_call_operand.vmem [shape: f32[128,128], index: 3, kind: input, shape index: {}]
  %s4 = inlined_call_operand.vmem [shape: f32[3,1,32], index: 4, kind: input, shape index: {}]
  %s5 = inlined_call_operand.vmem [shape: f32[3,1,32], index: 5, kind: input, shape index: {}]
  %s6 = inlined_call_operand.vmem [shape: bf16[3,32,96], index: 6, kind: input, shape index: {}]
  %s7 = inlined_call_operand.vmem [shape: f32[3,1,96], index: 7, kind: input, shape index: {}]
  %s8 = inlined_call_operand.vmem [shape: bf16[3,32,32], index: 8, kind: input, shape index: {}]
  %s9 = inlined_call_operand.vmem [shape: f32[3,1,32], index: 9, kind: input, shape index: {}]
  %s10 = inlined_call_operand.vmem [shape: f32[3,1,32], index: 10, kind: input, shape index: {}]
  %s11 = inlined_call_operand.vmem [shape: f32[3,1,32], index: 11, kind: input, shape index: {}]
  %s12 = inlined_call_operand.vmem [shape: bf16[3,32,64], index: 12, kind: input, shape index: {}]
  %s13 = inlined_call_operand.vmem [shape: f32[3,1,64], index: 13, kind: input, shape index: {}]
  %s14 = inlined_call_operand.vmem [shape: bf16[3,64,32], index: 14, kind: input, shape index: {}]
  %s15 = inlined_call_operand.vmem [shape: f32[3,1,32], index: 15, kind: input, shape index: {}]
  %s16 = inlined_call_operand.vmem [shape: f32[1,32], index: 16, kind: input, shape index: {}]
  %s17 = inlined_call_operand.vmem [shape: f32[1,32], index: 17, kind: input, shape index: {}]
  %s18 = inlined_call_operand.hbm [shape: f32[32,32], index: 18, kind: output, shape index: {}]
  %s19 = sld [smem:[#allocation0]]
  $region82: #{encoder_pallas.1} parent=0
    _
  %s21 = ssub.s32 1, %s19
  %s22 = scalar_select 0, %s21, %s19
  $region1: #{encoder_pallas.1} parent=0
    #allocation2 [shape = 'u8[16384]{0}', space=vmem, size = 0x4000, scoped, tag = 'output window, operand 0, single buffered']
    #allocation3 [shape = 's32[1]{0}', space=sflag, size = 0x4, scoped, tag = 'scoped memory for encoder_pallas.1']
    %23 = vsyncpa [#allocation3], 0
    // Predicated region
    $region2: #{encoder_pallas.1} parent=1 // pred_check
      _
    $region3: #{encoder_pallas.1} parent=1 // pred_check_branch
      %25 = sbr.rel (0) target = $region5
    $region4: #{encoder_pallas.1} parent=1 // pred_region
      _
    $region5: #{encoder_pallas.1} parent=1 // pred_fallthru
      _
    // Predicated region
    $region6: #{encoder_pallas.1} parent=1 // pred_check
      _
    $region7: #{encoder_pallas.1} parent=1 // pred_check_branch
      %27 = sbr.rel (0) target = $region9
    $region8: #{encoder_pallas.1} parent=1 // pred_region
      _
    $region9: #{encoder_pallas.1} parent=1 // pred_fallthru
      _
    // Predicated region
    $region10: #{encoder_pallas.1} parent=1 // pred_check
      _
    $region11: #{encoder_pallas.1} parent=1 // pred_check_branch
      %29 = sbr.rel (0) target = $region13
    $region12: #{encoder_pallas.1} parent=1 // pred_region
      _
    $region13: #{encoder_pallas.1} parent=1 // pred_fallthru
      _
    // Predicated region
    $region14: #{encoder_pallas.1} parent=1 // pred_check
      _
    $region15: #{encoder_pallas.1} parent=1 // pred_check_branch
      %31 = sbr.rel (0) target = $region17
    $region16: #{encoder_pallas.1} parent=1 // pred_region
      _
    $region17: #{encoder_pallas.1} parent=1 // pred_fallthru
      _
    // Predicated region
    $region18: #{encoder_pallas.1} parent=1 // pred_check
      _
    $region19: #{encoder_pallas.1} parent=1 // pred_check_branch
      %33 = sbr.rel (0) target = $region21
    $region20: #{encoder_pallas.1} parent=1 // pred_region
      _
    $region21: #{encoder_pallas.1} parent=1 // pred_fallthru
      _
    // Predicated region
    $region22: #{encoder_pallas.1} parent=1 // pred_check
      _
    $region23: #{encoder_pallas.1} parent=1 // pred_check_branch
      %35 = sbr.rel (0) target = $region25
    $region24: #{encoder_pallas.1} parent=1 // pred_region
      _
    $region25: #{encoder_pallas.1} parent=1 // pred_fallthru
      _
    // Predicated region
    $region26: #{encoder_pallas.1} parent=1 // pred_check
      _
    $region27: #{encoder_pallas.1} parent=1 // pred_check_branch
      %37 = sbr.rel (0) target = $region29
    $region28: #{encoder_pallas.1} parent=1 // pred_region
      _
    $region29: #{encoder_pallas.1} parent=1 // pred_fallthru
      _
    // Predicated region
    $region30: #{encoder_pallas.1} parent=1 // pred_check
      _
    $region31: #{encoder_pallas.1} parent=1 // pred_check_branch
      %39 = sbr.rel (0) target = $region33
    $region32: #{encoder_pallas.1} parent=1 // pred_region
      _
    $region33: #{encoder_pallas.1} parent=1 // pred_fallthru
      _
    // Predicated region
    $region34: #{encoder_pallas.1} parent=1 // pred_check
      _
    $region35: #{encoder_pallas.1} parent=1 // pred_check_branch
      %41 = sbr.rel (0) target = $region37
    $region36: #{encoder_pallas.1} parent=1 // pred_region
      _
    $region37: #{encoder_pallas.1} parent=1 // pred_fallthru
      _
    // Predicated region
    $region38: #{encoder_pallas.1} parent=1 // pred_check
      _
    $region39: #{encoder_pallas.1} parent=1 // pred_check_branch
      %43 = sbr.rel (0) target = $region41
    $region40: #{encoder_pallas.1} parent=1 // pred_region
      _
    $region41: #{encoder_pallas.1} parent=1 // pred_fallthru
      _
    // Predicated region
    $region42: #{encoder_pallas.1} parent=1 // pred_check
      _
    $region43: #{encoder_pallas.1} parent=1 // pred_check_branch
      %45 = sbr.rel (0) target = $region45
    $region44: #{encoder_pallas.1} parent=1 // pred_region
      _
    $region45: #{encoder_pallas.1} parent=1 // pred_fallthru
      _
    // Predicated region
    $region46: #{encoder_pallas.1} parent=1 // pred_check
      _
    $region47: #{encoder_pallas.1} parent=1 // pred_check_branch
      %47 = sbr.rel (0) target = $region49
    $region48: #{encoder_pallas.1} parent=1 // pred_region
      _
    $region49: #{encoder_pallas.1} parent=1 // pred_fallthru
      _
    // Predicated region
    $region50: #{encoder_pallas.1} parent=1 // pred_check
      _
    $region51: #{encoder_pallas.1} parent=1 // pred_check_branch
      %49 = sbr.rel (0) target = $region53
    $region52: #{encoder_pallas.1} parent=1 // pred_region
      _
    $region53: #{encoder_pallas.1} parent=1 // pred_fallthru
      _
    // Predicated region
    $region54: #{encoder_pallas.1} parent=1 // pred_check
      _
    $region55: #{encoder_pallas.1} parent=1 // pred_check_branch
      %51 = sbr.rel (0) target = $region57
    $region56: #{encoder_pallas.1} parent=1 // pred_region
      _
    $region57: #{encoder_pallas.1} parent=1 // pred_fallthru
      _
    // Predicated region
    $region58: #{encoder_pallas.1} parent=1 // pred_check
      _
    $region59: #{encoder_pallas.1} parent=1 // pred_check_branch
      %53 = sbr.rel (0) target = $region61
    $region60: #{encoder_pallas.1} parent=1 // pred_region
      _
    $region61: #{encoder_pallas.1} parent=1 // pred_fallthru
      _
    // Predicated region
    $region62: #{encoder_pallas.1} parent=1 // pred_check
      _
    $region63: #{encoder_pallas.1} parent=1 // pred_check_branch
      %55 = sbr.rel (0) target = $region65
    $region64: #{encoder_pallas.1} parent=1 // pred_region
      _
    $region65: #{encoder_pallas.1} parent=1 // pred_fallthru
      _
    // Predicated region
    $region66: #{encoder_pallas.1} parent=1 // pred_check
      _
    $region67: #{encoder_pallas.1} parent=1 // pred_check_branch
      %57 = sbr.rel (0) target = $region69
    $region68: #{encoder_pallas.1} parent=1 // pred_region
      _
    $region69: #{encoder_pallas.1} parent=1 // pred_fallthru
      _
    // Predicated region
    $region70: #{encoder_pallas.1} parent=1 // pred_check
      _
    $region71: #{encoder_pallas.1} parent=1 // pred_check_branch
      %59 = sbr.rel (0) target = $region73
    $region72: #{encoder_pallas.1} parent=1 // pred_region
      _
    $region73: #{encoder_pallas.1} parent=1 // pred_fallthru
      _
    %v61 = vld [vmem:[%s0] sm:$0xff]
    %v62 = vld [vmem:[%s0 + $0x8] sm:$0xff]
    %v63 = vld [vmem:[%s0 + $0x10] sm:$0xff]
    %v64 = vld [vmem:[%s0 + $0x18] sm:$0xff]
    %v65 = vld [vmem:[%s1] sm:$0xff]
    %v66 = vld [vmem:[%s1 + $0x8] sm:$0xff]
    %v67 = vld [vmem:[%s1 + $0x10] sm:$0xff]
    %v68 = vld [vmem:[%s1 + $0x18] sm:$0xff]
    %v69 = vld [vmem:[%s2] sm:$0xff]
    %v70 = vld [vmem:[%s2 + $0x8] sm:$0xff]
    %v71 = vld [vmem:[%s2 + $0x10] sm:$0xff]
    %v72 = vld [vmem:[%s2 + $0x18] sm:$0xff]
    %v73 = vld [vmem:[%s2 + $0x20] sm:$0xff]
    %v74 = vld [vmem:[%s2 + $0x28] sm:$0xff]
    %v75 = vld [vmem:[%s2 + $0x30] sm:$0xff]
    %v76 = vld [vmem:[%s2 + $0x38] sm:$0xff]
    %v77 = vld [vmem:[%s2 + $0x40] sm:$0xff]
    %v78 = vld [vmem:[%s2 + $0x48] sm:$0xff]
    %v79 = vld [vmem:[%s2 + $0x50] sm:$0xff]
    %v80 = vld [vmem:[%s2 + $0x58] sm:$0xff]
    %v81 = vld [vmem:[%s2 + $0x60] sm:$0xff]
    %v82 = vld [vmem:[%s2 + $0x68] sm:$0xff]
    %v83 = vld [vmem:[%s2 + $0x70] sm:$0xff]
    %v84 = vld [vmem:[%s2 + $0x78] sm:$0xff]
    %v85 = vld [vmem:[%s3] sm:$0xff]
    %v86 = vld [vmem:[%s3 + $0x8] sm:$0xff]
    %v87 = vld [vmem:[%s3 + $0x10] sm:$0xff]
    %v88 = vld [vmem:[%s3 + $0x18] sm:$0xff]
    %v89 = vld [vmem:[%s3 + $0x20] sm:$0xff]
    %v90 = vld [vmem:[%s3 + $0x28] sm:$0xff]
    %v91 = vld [vmem:[%s3 + $0x30] sm:$0xff]
    %v92 = vld [vmem:[%s3 + $0x38] sm:$0xff]
    %v93 = vld [vmem:[%s3 + $0x40] sm:$0xff]
    %v94 = vld [vmem:[%s3 + $0x48] sm:$0xff]
    %v95 = vld [vmem:[%s3 + $0x50] sm:$0xff]
    %v96 = vld [vmem:[%s3 + $0x58] sm:$0xff]
    %v97 = vld [vmem:[%s3 + $0x60] sm:$0xff]
    %v98 = vld [vmem:[%s3 + $0x68] sm:$0xff]
    %v99 = vld [vmem:[%s3 + $0x70] sm:$0xff]
    %v100 = vld [vmem:[%s3 + $0x78] sm:$0xff]
    %v101 = vld [vmem:[%s4] sm:$0x1]
    %v102 = vld [vmem:[%s5] sm:$0x1]
    %vm103 = vcmask 261120
    %v104 = vsel %vm103, %v61, 0.0
    %105 = vadd.xlane.f32.xlu0 %v104
    %v106 = vpop.xlane.xlu0 %105
    %v107 = vsel %vm103, %v62, 0.0
    %108 = vadd.xlane.f32.xlu0 %v107
    %v109 = vpop.xlane.xlu0 %108
    %v110 = vsel %vm103, %v63, 0.0
    %111 = vadd.xlane.f32.xlu0 %v110
    %v112 = vpop.xlane.xlu0 %111
    %v113 = vsel %vm103, %v64, 0.0
    %114 = vadd.xlane.f32.xlu0 %v113
    %v115 = vpop.xlane.xlu0 %114
    %v116 = vrcp.pop 32.0
    %v117 = vmul.f32 %v106, %v116
    %v118 = vmul.f32 %v109, %v116
    %v119 = vmul.f32 %v112, %v116
    %v120 = vmul.f32 %v115, %v116
    %v121 = vsub.f32 %v61, %v117
    %v122 = vsub.f32 %v62, %v118
    %v123 = vsub.f32 %v63, %v119
    %v124 = vsub.f32 %v64, %v120
    %v125 = vmul.f32 %v121, %v121
    %v126 = vmul.f32 %v122, %v122
    %v127 = vmul.f32 %v123, %v123
    %v128 = vmul.f32 %v124, %v124
    %v129 = vsel %vm103, %v125, 0.0
    %130 = vadd.xlane.f32.xlu0 %v129
    %v131 = vpop.xlane.xlu0 %130
    %v132 = vsel %vm103, %v126, 0.0
    %133 = vadd.xlane.f32.xlu0 %v132
    %v134 = vpop.xlane.xlu0 %133
    %v135 = vsel %vm103, %v127, 0.0
    %136 = vadd.xlane.f32.xlu0 %v135
    %v137 = vpop.xlane.xlu0 %136
    %v138 = vsel %vm103, %v128, 0.0
    %139 = vadd.xlane.f32.xlu0 %v138
    %v140 = vpop.xlane.xlu0 %139
    %v141 = vmul.f32 %v131, 0.032258064
    %v142 = vmul.f32 %v134, 0.032258064
    %v143 = vmul.f32 %v137, 0.032258064
    %v144 = vmul.f32 %v140, 0.032258064
    %v145 = vrsqrt.pop %v141
    %v146 = vmul.f32 %v141, %v145
    %vm147 = vcmp.eq.f32.partialorder %v141, inf
    %v148 = vsel %vm147, %v141, %v146
    %vm149 = vcmp.eq.f32.partialorder %v141, 0.0
    %v150 = vand.u32 %v141, 2147483648
    %v151 = vsel %vm149, %v150, %v148
    %v152 = vrsqrt.pop %v142
    %v153 = vmul.f32 %v142, %v152
    %vm154 = vcmp.eq.f32.partialorder %v142, inf
    %v155 = vsel %vm154, %v142, %v153
    %vm156 = vcmp.eq.f32.partialorder %v142, 0.0
    %v157 = vand.u32 %v142, 2147483648
    %v158 = vsel %vm156, %v157, %v155
    %v159 = vrsqrt.pop %v143
    %v160 = vmul.f32 %v143, %v159
    %vm161 = vcmp.eq.f32.partialorder %v143, inf
    %v162 = vsel %vm161, %v143, %v160
    %vm163 = vcmp.eq.f32.partialorder %v143, 0.0
    %v164 = vand.u32 %v143, 2147483648
    %v165 = vsel %vm163, %v164, %v162
    %v166 = vrsqrt.pop %v144
    %v167 = vmul.f32 %v144, %v166
    %vm168 = vcmp.eq.f32.partialorder %v144, inf
    %v169 = vsel %vm168, %v144, %v167
    %vm170 = vcmp.eq.f32.partialorder %v144, 0.0
    %v171 = vand.u32 %v144, 2147483648
    %v172 = vsel %vm170, %v171, %v169
    %v174 = vlaneseq
    %v175 = vshrl.u32 %v174, 7
    %v176 = vsub.s32 0, %v175
    %v177 = vrot.slane %v101, %v176
    %v179 = vmul.f32 %v177, %v121
    %v180 = vmul.f32 %v177, %v122
    %v181 = vmul.f32 %v177, %v123
    %v182 = vmul.f32 %v177, %v124
    %v183 = vadd.f32 %v151, 1e-06
    %v184 = vadd.f32 %v158, 1e-06
    %v185 = vadd.f32 %v165, 1e-06
    %v186 = vadd.f32 %v172, 1e-06
    %v187 = vrcp.pop %v183
    %v188 = vmul.f32 %v179, %v187
    %v189 = vrcp.pop %v184
    %v190 = vmul.f32 %v180, %v189
    %v191 = vrcp.pop %v185
    %v192 = vmul.f32 %v181, %v191
    %v193 = vrcp.pop %v186
    %v194 = vmul.f32 %v182, %v193
    %v196 = vlaneseq
    %v197 = vshrl.u32 %v196, 7
    %v198 = vsub.s32 0, %v197
    %v199 = vrot.slane %v102, %v198
    %v201 = vadd.f32 %v188, %v199
    %v202 = vadd.f32 %v190, %v199
    %v203 = vadd.f32 %v192, %v199
    %v204 = vadd.f32 %v194, %v199
    %v205 = vpack.c.bf16 %v202, %v201
    %v206 = vpack.c.bf16 %v204, %v203
    %v207 = vld [vmem:[%s6] sm:$0xf]
    %v208 = vld [vmem:[%s6 + $0x4] sm:$0xf]
    %v209 = vld [vmem:[%s6 + $0x8] sm:$0xf]
    %v210 = vld [vmem:[%s6 + $0xc] sm:$0xf]
    %v211 = vld [vmem:[%s7] sm:$0x1]
    %v213 = vlaneseq
    %v214 = vshrl.u32 %v213, 7
    %v215 = vsub.s32 0, %v214
    %v216 = vrot.slane %v211, %v215
    %v222 = vunpack.c.l.b16 %v207
    %v223 = vunpack.c.l.b16 %v208
    %v224 = vunpack.c.l.b16 %v209
    %v225 = vunpack.c.l.b16 %v210
    %v226 = vpack.c.b16 %v223, %v222
    %v227 = vpack.c.b16 %v225, %v224
    %v231 = vsel %vm103, %v205, 0
    %v234 = vsel %vm103, %v206, 0
    %236 = vmatprep.subr.bf16.mxu0 0
    %237 = vmatpush1.bf16.msra.mxu0 %v226
    %238 = vmatprep.subr.bf16.mxu0 0
    %239 = vmatpush1.bf16.msra.mxu0 %v227
    %240 = vmatprep.subr.bf16.mxu0 0
    %241 = vmatpush1.bf16.msra.mxu0 0
    %242 = vmatprep.subr.bf16.mxu0 0
    %243 = vmatpush1.bf16.msra.mxu0 0
    %244 = vmatprep.subr.bf16.mxu0 0
    %245 = vmatpush1.bf16.msra.mxu0 0
    %246 = vmatprep.subr.bf16.mxu0 0
    %247 = vmatpush1.bf16.msra.mxu0 0
    %248 = vmatprep.subr.bf16.mxu0 0
    %249 = vmatpush1.bf16.msra.mxu0 0
    %250 = vmatprep.subr.bf16.mxu0 0
    %251 = vmatpush1.bf16.msra.mxu0 0
    %252 = vmatprep.subr.bf16.mxu0 0
    %253 = vmatpush1.bf16.msra.mxu0 0
    %254 = vmatprep.subr.bf16.mxu0 0
    %255 = vmatpush1.bf16.msra.mxu0 0
    %256 = vmatprep.subr.bf16.mxu0 0
    %257 = vmatpush1.bf16.msra.mxu0 0
    %258 = vmatprep.subr.bf16.mxu0 0
    %259 = vmatpush1.bf16.msra.mxu0 0
    %260 = vmatprep.subr.bf16.mxu0 0
    %261 = vmatpush1.bf16.msra.mxu0 0
    %262 = vmatprep.subr.bf16.mxu0 0
    %263 = vmatpush1.bf16.msra.mxu0 0
    %264 = vmatprep.subr.bf16.mxu0 0
    %265 = vmatpush1.bf16.msra.mxu0 0
    %266 = vmatprep.subr.bf16.mxu0 0
    %267 = vmatpush1.bf16.msra.mxu0 0
    %268 = vmatprep.mubr.bf16.mxu0 0
    %269 = vmatmul.mubr.bf16.gmra.mrb[0].mxu0 %v231
    %v270 = vpop.f32.mrb[0].mxu0
    %v271 = vadd.f32 %v216, %v270
    %v272 = vpop.f32.mrb[0].mxu0
    %v273 = vpop.f32.mrb[0].mxu0
    %v274 = vadd.f32 %v216, %v273
    %v275 = vpop.f32.mrb[0].mxu0
    %276 = vmatprep.mubr.bf16.mxu0 0
    %277 = vmatmul.mubr.bf16.gmra.mrb[0].mxu0 %v234
    %v278 = vpop.f32.mrb[0].mxu0
    %v279 = vadd.f32 %v216, %v278
    %v280 = vpop.f32.mrb[0].mxu0
    %v281 = vpop.f32.mrb[0].mxu0
    %v282 = vadd.f32 %v216, %v281
    %v283 = vpop.f32.mrb[0].mxu0
    %284 = vdwg.mxu0
    %301 = vrot.lane.b32.xlu0 %v69, 32
    %v302 = vpop.permute.xlu0 %301
    %303 = vrot.lane.b32.xlu0 %v70, 32
    %v304 = vpop.permute.xlu0 %303
    %305 = vrot.lane.b32.xlu0 %v71, 32
    %v306 = vpop.permute.xlu0 %305
    %307 = vrot.lane.b32.xlu0 %v72, 32
    %v308 = vpop.permute.xlu0 %307
    %309 = vrot.lane.b32.xlu0 %v73, 32
    %v310 = vpop.permute.xlu0 %309
    %311 = vrot.lane.b32.xlu0 %v74, 32
    %v312 = vpop.permute.xlu0 %311
    %313 = vrot.lane.b32.xlu0 %v75, 32
    %v314 = vpop.permute.xlu0 %313
    %315 = vrot.lane.b32.xlu0 %v76, 32
    %v316 = vpop.permute.xlu0 %315
    %317 = vrot.lane.b32.xlu0 %v77, 32
    %v318 = vpop.permute.xlu0 %317
    %319 = vrot.lane.b32.xlu0 %v78, 32
    %v320 = vpop.permute.xlu0 %319
    %321 = vrot.lane.b32.xlu0 %v79, 32
    %v322 = vpop.permute.xlu0 %321
    %323 = vrot.lane.b32.xlu0 %v80, 32
    %v324 = vpop.permute.xlu0 %323
    %325 = vrot.lane.b32.xlu0 %v81, 32
    %v326 = vpop.permute.xlu0 %325
    %327 = vrot.lane.b32.xlu0 %v82, 32
    %v328 = vpop.permute.xlu0 %327
    %329 = vrot.lane.b32.xlu0 %v83, 32
    %v330 = vpop.permute.xlu0 %329
    %331 = vrot.lane.b32.xlu0 %v84, 32
    %v332 = vpop.permute.xlu0 %331
    %v349 = vmul.f32 %v271, %v302
    %v350 = vmul.f32 %v274, %v304
    %v351 = vmul.f32 %v279, %v306
    %v352 = vmul.f32 %v282, %v308
    %v353 = vmul.f32 %v271, %v310
    %v354 = vmul.f32 %v274, %v312
    %v355 = vmul.f32 %v279, %v314
    %v356 = vmul.f32 %v282, %v316
    %v357 = vmul.f32 %v271, %v318
    %v358 = vmul.f32 %v274, %v320
    %v359 = vmul.f32 %v279, %v322
    %v360 = vmul.f32 %v282, %v324
    %v361 = vmul.f32 %v271, %v326
    %v362 = vmul.f32 %v274, %v328
    %v363 = vmul.f32 %v279, %v330
    %v364 = vmul.f32 %v282, %v332
    %v365 = vpack.c.bf16 %v350, %v349
    %v366 = vpack.c.bf16 %v352, %v351
    %v367 = vpack.c.bf16 %v354, %v353
    %v368 = vpack.c.bf16 %v356, %v355
    %v369 = vpack.c.bf16 %v358, %v357
    %v370 = vpack.c.bf16 %v360, %v359
    %v371 = vpack.c.bf16 %v362, %v361
    %v372 = vpack.c.bf16 %v364, %v363
    %373 = vrot.lane.b32.xlu0 %v69, 64
    %v374 = vpop.permute.xlu0 %373
    %375 = vrot.lane.b32.xlu0 %v70, 64
    %v376 = vpop.permute.xlu0 %375
    %377 = vrot.lane.b32.xlu0 %v71, 64
    %v378 = vpop.permute.xlu0 %377
    %379 = vrot.lane.b32.xlu0 %v72, 64
    %v380 = vpop.permute.xlu0 %379
    %381 = vrot.lane.b32.xlu0 %v73, 64
    %v382 = vpop.permute.xlu0 %381
    %383 = vrot.lane.b32.xlu0 %v74, 64
    %v384 = vpop.permute.xlu0 %383
    %385 = vrot.lane.b32.xlu0 %v75, 64
    %v386 = vpop.permute.xlu0 %385
    %387 = vrot.lane.b32.xlu0 %v76, 64
    %v388 = vpop.permute.xlu0 %387
    %389 = vrot.lane.b32.xlu0 %v77, 64
    %v390 = vpop.permute.xlu0 %389
    %391 = vrot.lane.b32.xlu0 %v78, 64
    %v392 = vpop.permute.xlu0 %391
    %393 = vrot.lane.b32.xlu0 %v79, 64
    %v394 = vpop.permute.xlu0 %393
    %395 = vrot.lane.b32.xlu0 %v80, 64
    %v396 = vpop.permute.xlu0 %395
    %397 = vrot.lane.b32.xlu0 %v81, 64
    %v398 = vpop.permute.xlu0 %397
    %399 = vrot.lane.b32.xlu0 %v82, 64
    %v400 = vpop.permute.xlu0 %399
    %401 = vrot.lane.b32.xlu0 %v83, 64
    %v402 = vpop.permute.xlu0 %401
    %403 = vrot.lane.b32.xlu0 %v84, 64
    %v404 = vpop.permute.xlu0 %403
    %v421 = vmul.f32 %v271, %v374
    %v422 = vmul.f32 %v274, %v376
    %v423 = vmul.f32 %v279, %v378
    %v424 = vmul.f32 %v282, %v380
    %v425 = vmul.f32 %v271, %v382
    %v426 = vmul.f32 %v274, %v384
    %v427 = vmul.f32 %v279, %v386
    %v428 = vmul.f32 %v282, %v388
    %v429 = vmul.f32 %v271, %v390
    %v430 = vmul.f32 %v274, %v392
    %v431 = vmul.f32 %v279, %v394
    %v432 = vmul.f32 %v282, %v396
    %v433 = vmul.f32 %v271, %v398
    %v434 = vmul.f32 %v274, %v400
    %v435 = vmul.f32 %v279, %v402
    %v436 = vmul.f32 %v282, %v404
    %v437 = vpack.c.bf16 %v422, %v421
    %v438 = vpack.c.bf16 %v424, %v423
    %v439 = vpack.c.bf16 %v426, %v425
    %v440 = vpack.c.bf16 %v428, %v427
    %v441 = vpack.c.bf16 %v430, %v429
    %v442 = vpack.c.bf16 %v432, %v431
    %v443 = vpack.c.bf16 %v434, %v433
    %v444 = vpack.c.bf16 %v436, %v435
    %v445 = vpack.c.bf16 %v274, %v271
    %v446 = vpack.c.bf16 %v282, %v279
    %455 = vrot.lane.b32.xlu0 %v365, 96
    %v456 = vpop.permute.xlu0 %455
    %457 = vrot.lane.b32.xlu0 %v366, 96
    %v458 = vpop.permute.xlu0 %457
    %459 = vrot.lane.b32.xlu0 %v367, 96
    %v460 = vpop.permute.xlu0 %459
    %461 = vrot.lane.b32.xlu0 %v368, 96
    %v462 = vpop.permute.xlu0 %461
    %463 = vrot.lane.b32.xlu0 %v369, 96
    %v464 = vpop.permute.xlu0 %463
    %465 = vrot.lane.b32.xlu0 %v370, 96
    %v466 = vpop.permute.xlu0 %465
    %467 = vrot.lane.b32.xlu0 %v371, 96
    %v468 = vpop.permute.xlu0 %467
    %469 = vrot.lane.b32.xlu0 %v372, 96
    %v470 = vpop.permute.xlu0 %469
    %v472 = vsel %vm103, %v445, 0
    %v475 = vsel %vm103, %v446, 0
    %v478 = vsel %vm103, %v456, 0
    %v481 = vsel %vm103, %v458, 0
    %v484 = vsel %vm103, %v460, 0
    %v487 = vsel %vm103, %v462, 0
    %v490 = vsel %vm103, %v464, 0
    %v493 = vsel %vm103, %v466, 0
    %v496 = vsel %vm103, %v468, 0
    %v499 = vsel %vm103, %v470, 0
    %501 = vmatprep.subr.bf16.mxu0 0
    %502 = vmatpush1.bf16.xpose.msra.mxu0 %v478
    %503 = vmatprep.subr.bf16.mxu0 0
    %504 = vmatpush1.bf16.xpose.msra.mxu0 %v481
    %505 = vmatprep.subr.bf16.mxu0 0
    %506 = vmatpush1.bf16.xpose.msra.mxu0 %v484
    %507 = vmatprep.subr.bf16.mxu0 0
    %508 = vmatpush1.bf16.xpose.msra.mxu0 %v487
    %509 = vmatprep.subr.bf16.mxu0 0
    %510 = vmatpush1.bf16.xpose.msra.mxu0 %v490
    %511 = vmatprep.subr.bf16.mxu0 0
    %512 = vmatpush1.bf16.xpose.msra.mxu0 %v493
    %513 = vmatprep.subr.bf16.mxu0 0
    %514 = vmatpush1.bf16.xpose.msra.mxu0 %v496
    %515 = vmatprep.subr.bf16.mxu0 0
    %516 = vmatpush1.bf16.xpose.msra.mxu0 %v499
    %517 = vmatprep.subr.bf16.mxu0 0
    %518 = vmatpush1.bf16.xpose.msra.mxu0 0
    %519 = vmatprep.subr.bf16.mxu0 0
    %520 = vmatpush1.bf16.xpose.msra.mxu0 0
    %521 = vmatprep.subr.bf16.mxu0 0
    %522 = vmatpush1.bf16.xpose.msra.mxu0 0
    %523 = vmatprep.subr.bf16.mxu0 0
    %524 = vmatpush1.bf16.xpose.msra.mxu0 0
    %525 = vmatprep.subr.bf16.mxu0 0
    %526 = vmatpush1.bf16.xpose.msra.mxu0 0
    %527 = vmatprep.subr.bf16.mxu0 0
    %528 = vmatpush1.bf16.xpose.msra.mxu0 0
    %529 = vmatprep.subr.bf16.mxu0 0
    %530 = vmatpush1.bf16.xpose.msra.mxu0 0
    %531 = vmatprep.subr.bf16.mxu0 0
    %532 = vmatpush1.bf16.xpose.msra.mxu0 0
    %533 = vmatprep.mubr.bf16.mxu0 0
    %534 = vmatmul.mubr.bf16.gmra.mrb[0].mxu0 %v472
    %v535 = vpop.f32.mrb[0].mxu0
    %v536 = vadd.f32 0.0, %v535
    %v537 = vpop.f32.mrb[0].mxu0
    %v538 = vpop.f32.mrb[0].mxu0
    %v539 = vadd.f32 0.0, %v538
    %v540 = vpop.f32.mrb[0].mxu0
    %541 = vmatprep.mubr.bf16.mxu0 0
    %542 = vmatmul.mubr.bf16.gmra.mrb[0].mxu0 %v475
    %v543 = vpop.f32.mrb[0].mxu0
    %v544 = vadd.f32 0.0, %v543
    %v545 = vpop.f32.mrb[0].mxu0
    %v546 = vpop.f32.mrb[0].mxu0
    %v547 = vadd.f32 0.0, %v546
    %v548 = vpop.f32.mrb[0].mxu0
    %549 = vdwg.mxu0
    %v550 = vmul.f32 %v536, 0.35355338
    %v551 = vmul.f32 %v539, 0.35355338
    %v552 = vmul.f32 %v544, 0.35355338
    %v553 = vmul.f32 %v547, 0.35355338
    %v554 = vadd.f32 %v550, %v65
    %v555 = vadd.f32 %v551, %v66
    %v556 = vadd.f32 %v552, %v67
    %v557 = vadd.f32 %v553, %v68
    %558 = vmax.xlane.f32.xlu0 %v554
    %v559 = vpop.xlane.xlu0 %558
    %560 = vmax.xlane.f32.xlu0 %v555
    %v561 = vpop.xlane.xlu0 %560
    %562 = vmax.xlane.f32.xlu0 %v556
    %v563 = vpop.xlane.xlu0 %562
    %564 = vmax.xlane.f32.xlu0 %v557
    %v565 = vpop.xlane.xlu0 %564
    %v566 = vsub.f32 %v554, %v559
    %v567 = vsub.f32 %v555, %v561
    %v568 = vsub.f32 %v556, %v563
    %v569 = vsub.f32 %v557, %v565
    %v570 = vmul.f32 %v566, 1.442695
    %v571 = vpow.pop %v570
    %v572 = vmul.f32 %v567, 1.442695
    %v573 = vpow.pop %v572
    %v574 = vmul.f32 %v568, 1.442695
    %v575 = vpow.pop %v574
    %v576 = vmul.f32 %v569, 1.442695
    %v577 = vpow.pop %v576
    %578 = vmatprep.subr.mxu0 0.0
    %579 = vmatpush1.msra.mxu0 %v85
    %580 = vmatprep.subr.mxu0 0.0
    %581 = vmatpush1.msra.mxu0 %v86
    %582 = vmatprep.subr.mxu0 0.0
    %583 = vmatpush1.msra.mxu0 %v87
    %584 = vmatprep.subr.mxu0 0.0
    %585 = vmatpush1.msra.mxu0 %v88
    %586 = vmatprep.subr.mxu0 0.0
    %587 = vmatpush1.msra.mxu0 %v89
    %588 = vmatprep.subr.mxu0 0.0
    %589 = vmatpush1.msra.mxu0 %v90
    %590 = vmatprep.subr.mxu0 0.0
    %591 = vmatpush1.msra.mxu0 %v91
    %592 = vmatprep.subr.mxu0 0.0
    %593 = vmatpush1.msra.mxu0 %v92
    %594 = vmatprep.subr.mxu0 0.0
    %595 = vmatpush1.msra.mxu0 %v93
    %596 = vmatprep.subr.mxu0 0.0
    %597 = vmatpush1.msra.mxu0 %v94
    %598 = vmatprep.subr.mxu0 0.0
    %599 = vmatpush1.msra.mxu0 %v95
    %600 = vmatprep.subr.mxu0 0.0
    %601 = vmatpush1.msra.mxu0 %v96
    %602 = vmatprep.subr.mxu0 0.0
    %603 = vmatpush1.msra.mxu0 %v97
    %604 = vmatprep.subr.mxu0 0.0
    %605 = vmatpush1.msra.mxu0 %v98
    %606 = vmatprep.subr.mxu0 0.0
    %607 = vmatpush1.msra.mxu0 %v99
    %608 = vmatprep.subr.mxu0 0.0
    %609 = vmatpush1.msra.mxu0 %v100
    %610 = vmatprep.subr.mxu0 0.0
    %611 = vmatpush1.msra.mxu0 0.0
    %612 = vmatprep.subr.mxu0 0.0
    %613 = vmatpush1.msra.mxu0 0.0
    %614 = vmatprep.subr.mxu0 0.0
    %615 = vmatpush1.msra.mxu0 0.0
    %616 = vmatprep.subr.mxu0 0.0
    %617 = vmatpush1.msra.mxu0 0.0
    %618 = vmatprep.subr.mxu0 0.0
    %619 = vmatpush1.msra.mxu0 0.0
    %620 = vmatprep.subr.mxu0 0.0
    %621 = vmatpush1.msra.mxu0 0.0
    %622 = vmatprep.subr.mxu0 0.0
    %623 = vmatpush1.msra.mxu0 0.0
    %624 = vmatprep.subr.mxu0 0.0
    %625 = vmatpush1.msra.mxu0 0.0
    %626 = vmatprep.subr.mxu0 0.0
    %627 = vmatpush1.msra.mxu0 0.0
    %628 = vmatprep.subr.mxu0 0.0
    %629 = vmatpush1.msra.mxu0 0.0
    %630 = vmatprep.subr.mxu0 0.0
    %631 = vmatpush1.msra.mxu0 0.0
    %632 = vmatprep.subr.mxu0 0.0
    %633 = vmatpush1.msra.mxu0 0.0
    %634 = vmatprep.subr.mxu0 0.0
    %635 = vmatpush1.msra.mxu0 0.0
    %636 = vmatprep.subr.mxu0 0.0
    %637 = vmatpush1.msra.mxu0 0.0
    %638 = vmatprep.subr.mxu0 0.0
    %639 = vmatpush1.msra.mxu0 0.0
    %640 = vmatprep.subr.mxu0 0.0
    %641 = vmatpush1.msra.mxu0 0.0
    %642 = vmatprep.mubr.f32.mxu0 0.0
    %643 = vmatmul.mubr.f32.gmra.mrb[0].mxu0 %v571
    %v644 = vpop.f32.mrb[0].mxu0
    %v645 = vadd.f32 0.0, %v644
    %v646 = vpop.f32.mrb[0].mxu0
    %647 = vmatprep.mubr.f32.mxu0 0.0
    %648 = vmatmul.mubr.f32.gmra.mrb[0].mxu0 %v573
    %v649 = vpop.f32.mrb[0].mxu0
    %v650 = vadd.f32 0.0, %v649
    %v651 = vpop.f32.mrb[0].mxu0
    %652 = vmatprep.mubr.f32.mxu0 0.0
    %653 = vmatmul.mubr.f32.gmra.mrb[0].mxu0 %v575
    %v654 = vpop.f32.mrb[0].mxu0
    %v655 = vadd.f32 0.0, %v654
    %v656 = vpop.f32.mrb[0].mxu0
    %657 = vmatprep.mubr.f32.mxu0 0.0
    %658 = vmatmul.mubr.f32.gmra.mrb[0].mxu0 %v577
    %v659 = vpop.f32.mrb[0].mxu0
    %v660 = vadd.f32 0.0, %v659
    %v661 = vpop.f32.mrb[0].mxu0
    %662 = vdwg.mxu0
    %v663 = vrcp.pop %v645
    %v664 = vmul.f32 %v571, %v663
    %v665 = vrcp.pop %v650
    %v666 = vmul.f32 %v573, %v665
    %v667 = vrcp.pop %v655
    %v668 = vmul.f32 %v575, %v667
    %v669 = vrcp.pop %v660
    %v670 = vmul.f32 %v577, %v669
    %v671 = vpack.c.bf16 %v666, %v664
    %v672 = vpack.c.bf16 %v670, %v668
    %681 = vrot.lane.b32.xlu0 %v437, 64
    %v682 = vpop.permute.xlu0 %681
    %683 = vrot.lane.b32.xlu0 %v438, 64
    %v684 = vpop.permute.xlu0 %683
    %685 = vrot.lane.b32.xlu0 %v439, 64
    %v686 = vpop.permute.xlu0 %685
    %687 = vrot.lane.b32.xlu0 %v440, 64
    %v688 = vpop.permute.xlu0 %687
    %689 = vrot.lane.b32.xlu0 %v441, 64
    %v690 = vpop.permute.xlu0 %689
    %691 = vrot.lane.b32.xlu0 %v442, 64
    %v692 = vpop.permute.xlu0 %691
    %693 = vrot.lane.b32.xlu0 %v443, 64
    %v694 = vpop.permute.xlu0 %693
    %695 = vrot.lane.b32.xlu0 %v444, 64
    %v696 = vpop.permute.xlu0 %695
    %705 = vmatprep.subr.bf16.mxu0 0
    %706 = vmatpush1.bf16.msra.mxu0 %v682
    %707 = vmatprep.subr.bf16.mxu0 0
    %708 = vmatpush1.bf16.msra.mxu0 %v684
    %709 = vmatprep.subr.bf16.mxu0 0
    %710 = vmatpush1.bf16.msra.mxu0 %v686
    %711 = vmatprep.subr.bf16.mxu0 0
    %712 = vmatpush1.bf16.msra.mxu0 %v688
    %713 = vmatprep.subr.bf16.mxu0 0
    %714 = vmatpush1.bf16.msra.mxu0 %v690
    %715 = vmatprep.subr.bf16.mxu0 0
    %716 = vmatpush1.bf16.msra.mxu0 %v692
    %717 = vmatprep.subr.bf16.mxu0 0
    %718 = vmatpush1.bf16.msra.mxu0 %v694
    %719 = vmatprep.subr.bf16.mxu0 0
    %720 = vmatpush1.bf16.msra.mxu0 %v696
    %721 = vmatprep.subr.bf16.mxu0 0
    %722 = vmatpush1.bf16.msra.mxu0 0
    %723 = vmatprep.subr.bf16.mxu0 0
    %724 = vmatpush1.bf16.msra.mxu0 0
    %725 = vmatprep.subr.bf16.mxu0 0
    %726 = vmatpush1.bf16.msra.mxu0 0
    %727 = vmatprep.subr.bf16.mxu0 0
    %728 = vmatpush1.bf16.msra.mxu0 0
    %729 = vmatprep.subr.bf16.mxu0 0
    %730 = vmatpush1.bf16.msra.mxu0 0
    %731 = vmatprep.subr.bf16.mxu0 0
    %732 = vmatpush1.bf16.msra.mxu0 0
    %733 = vmatprep.subr.bf16.mxu0 0
    %734 = vmatpush1.bf16.msra.mxu0 0
    %735 = vmatprep.subr.bf16.mxu0 0
    %736 = vmatpush1.bf16.msra.mxu0 0
    %737 = vmatprep.mubr.bf16.mxu0 0
    %738 = vmatmul.mubr.bf16.gmra.mrb[0].mxu0 %v671
    %v739 = vpop.f32.mrb[0].mxu0
    %v740 = vadd.f32 0.0, %v739
    %v741 = vpop.f32.mrb[0].mxu0
    %v742 = vpop.f32.mrb[0].mxu0
    %v743 = vadd.f32 0.0, %v742
    %v744 = vpop.f32.mrb[0].mxu0
    %745 = vmatprep.mubr.bf16.mxu0 0
    %746 = vmatmul.mubr.bf16.gmra.mrb[0].mxu0 %v672
    %v747 = vpop.f32.mrb[0].mxu0
    %v748 = vadd.f32 0.0, %v747
    %v749 = vpop.f32.mrb[0].mxu0
    %v750 = vpop.f32.mrb[0].mxu0
    %v751 = vadd.f32 0.0, %v750
    %v752 = vpop.f32.mrb[0].mxu0
    %753 = vdwg.mxu0
    %v754 = vpack.c.bf16 %v743, %v740
    %v755 = vpack.c.bf16 %v751, %v748
    %v756 = vld [vmem:[%s8] sm:$0xf]
    %v757 = vld [vmem:[%s8 + $0x4] sm:$0xf]
    %v758 = vld [vmem:[%s8 + $0x8] sm:$0xf]
    %v759 = vld [vmem:[%s8 + $0xc] sm:$0xf]
    %v764 = vunpack.c.l.b16 %v756
    %v765 = vunpack.c.l.b16 %v757
    %v766 = vunpack.c.l.b16 %v758
    %v767 = vunpack.c.l.b16 %v759
    %v768 = vpack.c.b16 %v765, %v764
    %v769 = vpack.c.b16 %v767, %v766
    %v773 = vsel %vm103, %v754, 0
    %v776 = vsel %vm103, %v755, 0
    %778 = vmatprep.subr.bf16.mxu0 0
    %779 = vmatpush1.bf16.msra.mxu0 %v768
    %780 = vmatprep.subr.bf16.mxu0 0
    %781 = vmatpush1.bf16.msra.mxu0 %v769
    %782 = vmatprep.subr.bf16.mxu0 0
    %783 = vmatpush1.bf16.msra.mxu0 0
    %784 = vmatprep.subr.bf16.mxu0 0
    %785 = vmatpush1.bf16.msra.mxu0 0
    %786 = vmatprep.subr.bf16.mxu0 0
    %787 = vmatpush1.bf16.msra.mxu0 0
    %788 = vmatprep.subr.bf16.mxu0 0
    %789 = vmatpush1.bf16.msra.mxu0 0
    %790 = vmatprep.subr.bf16.mxu0 0
    %791 = vmatpush1.bf16.msra.mxu0 0
    %792 = vmatprep.subr.bf16.mxu0 0
    %793 = vmatpush1.bf16.msra.mxu0 0
    %794 = vmatprep.subr.bf16.mxu0 0
    %795 = vmatpush1.bf16.msra.mxu0 0
    %796 = vmatprep.subr.bf16.mxu0 0
    %797 = vmatpush1.bf16.msra.mxu0 0
    %798 = vmatprep.subr.bf16.mxu0 0
    %799 = vmatpush1.bf16.msra.mxu0 0
    %800 = vmatprep.subr.bf16.mxu0 0
    %801 = vmatpush1.bf16.msra.mxu0 0
    %802 = vmatprep.subr.bf16.mxu0 0
    %803 = vmatpush1.bf16.msra.mxu0 0
    %804 = vmatprep.subr.bf16.mxu0 0
    %805 = vmatpush1.bf16.msra.mxu0 0
    %806 = vmatprep.subr.bf16.mxu0 0
    %807 = vmatpush1.bf16.msra.mxu0 0
    %808 = vmatprep.subr.bf16.mxu0 0
    %809 = vmatpush1.bf16.msra.mxu0 0
    %810 = vmatprep.mubr.bf16.mxu0 0
    %811 = vmatmul.mubr.bf16.gmra.mrb[0].mxu0 %v773
    %v812 = vpop.f32.mrb[0].mxu0
    %v813 = vadd.f32 0.0, %v812
    %v814 = vpop.f32.mrb[0].mxu0
    %v815 = vpop.f32.mrb[0].mxu0
    %v816 = vadd.f32 0.0, %v815
    %v817 = vpop.f32.mrb[0].mxu0
    %818 = vmatprep.mubr.bf16.mxu0 0
    %819 = vmatmul.mubr.bf16.gmra.mrb[0].mxu0 %v776
    %v820 = vpop.f32.mrb[0].mxu0
    %v821 = vadd.f32 0.0, %v820
    %v822 = vpop.f32.mrb[0].mxu0
    %v823 = vpop.f32.mrb[0].mxu0
    %v824 = vadd.f32 0.0, %v823
    %v825 = vpop.f32.mrb[0].mxu0
    %826 = vdwg.mxu0
    %v827 = vadd.f32 %v61, %v813
    %v828 = vadd.f32 %v62, %v816
    %v829 = vadd.f32 %v63, %v821
    %v830 = vadd.f32 %v64, %v824
    %v831 = vld [vmem:[%s9] sm:$0x1]
    %v833 = vlaneseq
    %v834 = vshrl.u32 %v833, 7
    %v835 = vsub.s32 0, %v834
    %v836 = vrot.slane %v831, %v835
    %v838 = vadd.f32 %v827, %v836
    %v839 = vadd.f32 %v828, %v836
    %v840 = vadd.f32 %v829, %v836
    %v841 = vadd.f32 %v830, %v836
    %v842 = vld [vmem:[%s10] sm:$0x1]
    %v843 = vld [vmem:[%s11] sm:$0x1]
    %v844 = vsel %vm103, %v838, 0.0
    %845 = vadd.xlane.f32.xlu0 %v844
    %v846 = vpop.xlane.xlu0 %845
    %v847 = vsel %vm103, %v839, 0.0
    %848 = vadd.xlane.f32.xlu0 %v847
    %v849 = vpop.xlane.xlu0 %848
    %v850 = vsel %vm103, %v840, 0.0
    %851 = vadd.xlane.f32.xlu0 %v850
    %v852 = vpop.xlane.xlu0 %851
    %v853 = vsel %vm103, %v841, 0.0
    %854 = vadd.xlane.f32.xlu0 %v853
    %v855 = vpop.xlane.xlu0 %854
    %v856 = vmul.f32 %v846, %v116
    %v857 = vmul.f32 %v849, %v116
    %v858 = vmul.f32 %v852, %v116
    %v859 = vmul.f32 %v855, %v116
    %v860 = vsub.f32 %v838, %v856
    %v861 = vsub.f32 %v839, %v857
    %v862 = vsub.f32 %v840, %v858
    %v863 = vsub.f32 %v841, %v859
    %v864 = vmul.f32 %v860, %v860
    %v865 = vmul.f32 %v861, %v861
    %v866 = vmul.f32 %v862, %v862
    %v867 = vmul.f32 %v863, %v863
    %v868 = vsel %vm103, %v864, 0.0
    %869 = vadd.xlane.f32.xlu0 %v868
    %v870 = vpop.xlane.xlu0 %869
    %v871 = vsel %vm103, %v865, 0.0
    %872 = vadd.xlane.f32.xlu0 %v871
    %v873 = vpop.xlane.xlu0 %872
    %v874 = vsel %vm103, %v866, 0.0
    %875 = vadd.xlane.f32.xlu0 %v874
    %v876 = vpop.xlane.xlu0 %875
    %v877 = vsel %vm103, %v867, 0.0
    %878 = vadd.xlane.f32.xlu0 %v877
    %v879 = vpop.xlane.xlu0 %878
    %v880 = vmul.f32 %v870, 0.032258064
    %v881 = vmul.f32 %v873, 0.032258064
    %v882 = vmul.f32 %v876, 0.032258064
    %v883 = vmul.f32 %v879, 0.032258064
    %v884 = vrsqrt.pop %v880
    %v885 = vmul.f32 %v880, %v884
    %vm886 = vcmp.eq.f32.partialorder %v880, inf
    %v887 = vsel %vm886, %v880, %v885
    %vm888 = vcmp.eq.f32.partialorder %v880, 0.0
    %v889 = vand.u32 %v880, 2147483648
    %v890 = vsel %vm888, %v889, %v887
    %v891 = vrsqrt.pop %v881
    %v892 = vmul.f32 %v881, %v891
    %vm893 = vcmp.eq.f32.partialorder %v881, inf
    %v894 = vsel %vm893, %v881, %v892
    %vm895 = vcmp.eq.f32.partialorder %v881, 0.0
    %v896 = vand.u32 %v881, 2147483648
    %v897 = vsel %vm895, %v896, %v894
    %v898 = vrsqrt.pop %v882
    %v899 = vmul.f32 %v882, %v898
    %vm900 = vcmp.eq.f32.partialorder %v882, inf
    %v901 = vsel %vm900, %v882, %v899
    %vm902 = vcmp.eq.f32.partialorder %v882, 0.0
    %v903 = vand.u32 %v882, 2147483648
    %v904 = vsel %vm902, %v903, %v901
    %v905 = vrsqrt.pop %v883
    %v906 = vmul.f32 %v883, %v905
    %vm907 = vcmp.eq.f32.partialorder %v883, inf
    %v908 = vsel %vm907, %v883, %v906
    %vm909 = vcmp.eq.f32.partialorder %v883, 0.0
    %v910 = vand.u32 %v883, 2147483648
    %v911 = vsel %vm909, %v910, %v908
    %v913 = vlaneseq
    %v914 = vshrl.u32 %v913, 7
    %v915 = vsub.s32 0, %v914
    %v916 = vrot.slane %v842, %v915
    %v918 = vmul.f32 %v916, %v860
    %v919 = vmul.f32 %v916, %v861
    %v920 = vmul.f32 %v916, %v862
    %v921 = vmul.f32 %v916, %v863
    %v922 = vadd.f32 %v890, 1e-06
    %v923 = vadd.f32 %v897, 1e-06
    %v924 = vadd.f32 %v904, 1e-06
    %v925 = vadd.f32 %v911, 1e-06
    %v926 = vrcp.pop %v922
    %v927 = vmul.f32 %v918, %v926
    %v928 = vrcp.pop %v923
    %v929 = vmul.f32 %v919, %v928
    %v930 = vrcp.pop %v924
    %v931 = vmul.f32 %v920, %v930
    %v932 = vrcp.pop %v925
    %v933 = vmul.f32 %v921, %v932
    %v935 = vlaneseq
    %v936 = vshrl.u32 %v935, 7
    %v937 = vsub.s32 0, %v936
    %v938 = vrot.slane %v843, %v937
    %v940 = vadd.f32 %v927, %v938
    %v941 = vadd.f32 %v929, %v938
    %v942 = vadd.f32 %v931, %v938
    %v943 = vadd.f32 %v933, %v938
    %v944 = vpack.c.bf16 %v941, %v940
    %v945 = vpack.c.bf16 %v943, %v942
    %v946 = vld [vmem:[%s12] sm:$0xf]
    %v947 = vld [vmem:[%s12 + $0x4] sm:$0xf]
    %v948 = vld [vmem:[%s12 + $0x8] sm:$0xf]
    %v949 = vld [vmem:[%s12 + $0xc] sm:$0xf]
    %v950 = vld [vmem:[%s13] sm:$0x1]
    %v952 = vlaneseq
    %v953 = vshrl.u32 %v952, 7
    %v954 = vsub.s32 0, %v953
    %v955 = vrot.slane %v950, %v954
    %v961 = vunpack.c.l.b16 %v946
    %v962 = vunpack.c.l.b16 %v947
    %v963 = vunpack.c.l.b16 %v948
    %v964 = vunpack.c.l.b16 %v949
    %v965 = vpack.c.b16 %v962, %v961
    %v966 = vpack.c.b16 %v964, %v963
    %v970 = vsel %vm103, %v944, 0
    %v973 = vsel %vm103, %v945, 0
    %975 = vmatprep.subr.bf16.mxu0 0
    %976 = vmatpush1.bf16.msra.mxu0 %v965
    %977 = vmatprep.subr.bf16.mxu0 0
    %978 = vmatpush1.bf16.msra.mxu0 %v966
    %979 = vmatprep.subr.bf16.mxu0 0
    %980 = vmatpush1.bf16.msra.mxu0 0
    %981 = vmatprep.subr.bf16.mxu0 0
    %982 = vmatpush1.bf16.msra.mxu0 0
    %983 = vmatprep.subr.bf16.mxu0 0
    %984 = vmatpush1.bf16.msra.mxu0 0
    %985 = vmatprep.subr.bf16.mxu0 0
    %986 = vmatpush1.bf16.msra.mxu0 0
    %987 = vmatprep.subr.bf16.mxu0 0
    %988 = vmatpush1.bf16.msra.mxu0 0
    %989 = vmatprep.subr.bf16.mxu0 0
    %990 = vmatpush1.bf16.msra.mxu0 0
    %991 = vmatprep.subr.bf16.mxu0 0
    %992 = vmatpush1.bf16.msra.mxu0 0
    %993 = vmatprep.subr.bf16.mxu0 0
    %994 = vmatpush1.bf16.msra.mxu0 0
    %995 = vmatprep.subr.bf16.mxu0 0
    %996 = vmatpush1.bf16.msra.mxu0 0
    %997 = vmatprep.subr.bf16.mxu0 0
    %998 = vmatpush1.bf16.msra.mxu0 0
    %999 = vmatprep.subr.bf16.mxu0 0
    %1000 = vmatpush1.bf16.msra.mxu0 0
    %1001 = vmatprep.subr.bf16.mxu0 0
    %1002 = vmatpush1.bf16.msra.mxu0 0
    %1003 = vmatprep.subr.bf16.mxu0 0
    %1004 = vmatpush1.bf16.msra.mxu0 0
    %1005 = vmatprep.subr.bf16.mxu0 0
    %1006 = vmatpush1.bf16.msra.mxu0 0
    %1007 = vmatprep.mubr.bf16.mxu0 0
    %1008 = vmatmul.mubr.bf16.gmra.mrb[0].mxu0 %v970
    %v1009 = vpop.f32.mrb[0].mxu0
    %v1010 = vadd.f32 %v955, %v1009
    %v1011 = vpop.f32.mrb[0].mxu0
    %v1012 = vpop.f32.mrb[0].mxu0
    %v1013 = vadd.f32 %v955, %v1012
    %v1014 = vpop.f32.mrb[0].mxu0
    %1015 = vmatprep.mubr.bf16.mxu0 0
    %1016 = vmatmul.mubr.bf16.gmra.mrb[0].mxu0 %v973
    %v1017 = vpop.f32.mrb[0].mxu0
    %v1018 = vadd.f32 %v955, %v1017
    %v1019 = vpop.f32.mrb[0].mxu0
    %v1020 = vpop.f32.mrb[0].mxu0
    %v1021 = vadd.f32 %v955, %v1020
    %v1022 = vpop.f32.mrb[0].mxu0
    %1023 = vdwg.mxu0
    %v1024 = vmax.f32 %v1010, 0.0
    %v1025 = vmax.f32 %v1013, 0.0
    %v1026 = vmax.f32 %v1018, 0.0
    %v1027 = vmax.f32 %v1021, 0.0
    %v1028 = vpack.c.bf16 %v1025, %v1024
    %v1029 = vpack.c.bf16 %v1027, %v1026
    %v1030 = vld [vmem:[%s14] sm:$0xf]
    %v1031 = vld [vmem:[%s14 + $0x4] sm:$0xf]
    %v1032 = vld [vmem:[%s14 + $0x8] sm:$0xf]
    %v1033 = vld [vmem:[%s14 + $0xc] sm:$0xf]
    %v1034 = vld [vmem:[%s14 + $0x10] sm:$0xf]
    %v1035 = vld [vmem:[%s14 + $0x14] sm:$0xf]
    %v1036 = vld [vmem:[%s14 + $0x18] sm:$0xf]
    %v1037 = vld [vmem:[%s14 + $0x1c] sm:$0xf]
    %v1046 = vunpack.c.l.b16 %v1030
    %v1047 = vunpack.c.l.b16 %v1031
    %v1048 = vunpack.c.l.b16 %v1032
    %v1049 = vunpack.c.l.b16 %v1033
    %v1050 = vunpack.c.l.b16 %v1034
    %v1051 = vunpack.c.l.b16 %v1035
    %v1052 = vunpack.c.l.b16 %v1036
    %v1053 = vunpack.c.l.b16 %v1037
    %v1054 = vpack.c.b16 %v1047, %v1046
    %v1055 = vpack.c.b16 %v1049, %v1048
    %v1056 = vpack.c.b16 %v1051, %v1050
    %v1057 = vpack.c.b16 %v1053, %v1052
    %vm1062 = vcmask 523264
    %v1064 = vsel %vm1062, %v1028, 0
    %v1067 = vsel %vm1062, %v1029, 0
    %1069 = vmatprep.subr.bf16.mxu0 0
    %1070 = vmatpush1.bf16.msra.mxu0 %v1054
    %1071 = vmatprep.subr.bf16.mxu0 0
    %1072 = vmatpush1.bf16.msra.mxu0 %v1055
    %1073 = vmatprep.subr.bf16.mxu0 0
    %1074 = vmatpush1.bf16.msra.mxu0 %v1056
    %1075 = vmatprep.subr.bf16.mxu0 0
    %1076 = vmatpush1.bf16.msra.mxu0 %v1057
    %1077 = vmatprep.subr.bf16.mxu0 0
    %1078 = vmatpush1.bf16.msra.mxu0 0
    %1079 = vmatprep.subr.bf16.mxu0 0
    %1080 = vmatpush1.bf16.msra.mxu0 0
    %1081 = vmatprep.subr.bf16.mxu0 0
    %1082 = vmatpush1.bf16.msra.mxu0 0
    %1083 = vmatprep.subr.bf16.mxu0 0
    %1084 = vmatpush1.bf16.msra.mxu0 0
    %1085 = vmatprep.subr.bf16.mxu0 0
    %1086 = vmatpush1.bf16.msra.mxu0 0
    %1087 = vmatprep.subr.bf16.mxu0 0
    %1088 = vmatpush1.bf16.msra.mxu0 0
    %1089 = vmatprep.subr.bf16.mxu0 0
    %1090 = vmatpush1.bf16.msra.mxu0 0
    %1091 = vmatprep.subr.bf16.mxu0 0
    %1092 = vmatpush1.bf16.msra.mxu0 0
    %1093 = vmatprep.subr.bf16.mxu0 0
    %1094 = vmatpush1.bf16.msra.mxu0 0
    %1095 = vmatprep.subr.bf16.mxu0 0
    %1096 = vmatpush1.bf16.msra.mxu0 0
    %1097 = vmatprep.subr.bf16.mxu0 0
    %1098 = vmatpush1.bf16.msra.mxu0 0
    %1099 = vmatprep.subr.bf16.mxu0 0
    %1100 = vmatpush1.bf16.msra.mxu0 0
    %1101 = vmatprep.mubr.bf16.mxu0 0
    %1102 = vmatmul.mubr.bf16.gmra.mrb[0].mxu0 %v1064
    %v1103 = vpop.f32.mrb[0].mxu0
    %v1104 = vadd.f32 0.0, %v1103
    %v1105 = vpop.f32.mrb[0].mxu0
    %v1106 = vpop.f32.mrb[0].mxu0
    %v1107 = vadd.f32 0.0, %v1106
    %v1108 = vpop.f32.mrb[0].mxu0
    %1109 = vmatprep.mubr.bf16.mxu0 0
    %1110 = vmatmul.mubr.bf16.gmra.mrb[0].mxu0 %v1067
    %v1111 = vpop.f32.mrb[0].mxu0
    %v1112 = vadd.f32 0.0, %v1111
    %v1113 = vpop.f32.mrb[0].mxu0
    %v1114 = vpop.f32.mrb[0].mxu0
    %v1115 = vadd.f32 0.0, %v1114
    %v1116 = vpop.f32.mrb[0].mxu0
    %1117 = vdwg.mxu0
    %v1118 = vadd.f32 %v838, %v1104
    %v1119 = vadd.f32 %v839, %v1107
    %v1120 = vadd.f32 %v840, %v1112
    %v1121 = vadd.f32 %v841, %v1115
    %v1122 = vld [vmem:[%s15] sm:$0x1]
    %v1124 = vlaneseq
    %v1125 = vshrl.u32 %v1124, 7
    %v1126 = vsub.s32 0, %v1125
    %v1127 = vrot.slane %v1122, %v1126
    %v1129 = vadd.f32 %v1118, %v1127
    %v1130 = vadd.f32 %v1119, %v1127
    %v1131 = vadd.f32 %v1120, %v1127
    %v1132 = vadd.f32 %v1121, %v1127
    %s1133 = scalar_lea.vmem %s4, 1
    %v1134 = vld [vmem:[%s1133] sm:$0x1]
    %s1135 = scalar_lea.vmem %s5, 1
    %v1136 = vld [vmem:[%s1135] sm:$0x1]
    %v1137 = vsel %vm103, %v1129, 0.0
    %1138 = vadd.xlane.f32.xlu0 %v1137
    %v1139 = vpop.xlane.xlu0 %1138
    %v1140 = vsel %vm103, %v1130, 0.0
    %1141 = vadd.xlane.f32.xlu0 %v1140
    %v1142 = vpop.xlane.xlu0 %1141
    %v1143 = vsel %vm103, %v1131, 0.0
    %1144 = vadd.xlane.f32.xlu0 %v1143
    %v1145 = vpop.xlane.xlu0 %1144
    %v1146 = vsel %vm103, %v1132, 0.0
    %1147 = vadd.xlane.f32.xlu0 %v1146
    %v1148 = vpop.xlane.xlu0 %1147
    %v1149 = vmul.f32 %v1139, %v116
    %v1150 = vmul.f32 %v1142, %v116
    %v1151 = vmul.f32 %v1145, %v116
    %v1152 = vmul.f32 %v1148, %v116
    %v1153 = vsub.f32 %v1129, %v1149
    %v1154 = vsub.f32 %v1130, %v1150
    %v1155 = vsub.f32 %v1131, %v1151
    %v1156 = vsub.f32 %v1132, %v1152
    %v1157 = vmul.f32 %v1153, %v1153
    %v1158 = vmul.f32 %v1154, %v1154
    %v1159 = vmul.f32 %v1155, %v1155
    %v1160 = vmul.f32 %v1156, %v1156
    %v1161 = vsel %vm103, %v1157, 0.0
    %1162 = vadd.xlane.f32.xlu0 %v1161
    %v1163 = vpop.xlane.xlu0 %1162
    %v1164 = vsel %vm103, %v1158, 0.0
    %1165 = vadd.xlane.f32.xlu0 %v1164
    %v1166 = vpop.xlane.xlu0 %1165
    %v1167 = vsel %vm103, %v1159, 0.0
    %1168 = vadd.xlane.f32.xlu0 %v1167
    %v1169 = vpop.xlane.xlu0 %1168
    %v1170 = vsel %vm103, %v1160, 0.0
    %1171 = vadd.xlane.f32.xlu0 %v1170
    %v1172 = vpop.xlane.xlu0 %1171
    %v1173 = vmul.f32 %v1163, 0.032258064
    %v1174 = vmul.f32 %v1166, 0.032258064
    %v1175 = vmul.f32 %v1169, 0.032258064
    %v1176 = vmul.f32 %v1172, 0.032258064
    %v1177 = vrsqrt.pop %v1173
    %v1178 = vmul.f32 %v1173, %v1177
    %vm1179 = vcmp.eq.f32.partialorder %v1173, inf
    %v1180 = vsel %vm1179, %v1173, %v1178
    %vm1181 = vcmp.eq.f32.partialorder %v1173, 0.0
    %v1182 = vand.u32 %v1173, 2147483648
    %v1183 = vsel %vm1181, %v1182, %v1180
    %v1184 = vrsqrt.pop %v1174
    %v1185 = vmul.f32 %v1174, %v1184
    %vm1186 = vcmp.eq.f32.partialorder %v1174, inf
    %v1187 = vsel %vm1186, %v1174, %v1185
    %vm1188 = vcmp.eq.f32.partialorder %v1174, 0.0
    %v1189 = vand.u32 %v1174, 2147483648
    %v1190 = vsel %vm1188, %v1189, %v1187
    %v1191 = vrsqrt.pop %v1175
    %v1192 = vmul.f32 %v1175, %v1191
    %vm1193 = vcmp.eq.f32.partialorder %v1175, inf
    %v1194 = vsel %vm1193, %v1175, %v1192
    %vm1195 = vcmp.eq.f32.partialorder %v1175, 0.0
    %v1196 = vand.u32 %v1175, 2147483648
    %v1197 = vsel %vm1195, %v1196, %v1194
    %v1198 = vrsqrt.pop %v1176
    %v1199 = vmul.f32 %v1176, %v1198
    %vm1200 = vcmp.eq.f32.partialorder %v1176, inf
    %v1201 = vsel %vm1200, %v1176, %v1199
    %vm1202 = vcmp.eq.f32.partialorder %v1176, 0.0
    %v1203 = vand.u32 %v1176, 2147483648
    %v1204 = vsel %vm1202, %v1203, %v1201
    %v1206 = vlaneseq
    %v1207 = vshrl.u32 %v1206, 7
    %v1208 = vsub.s32 0, %v1207
    %v1209 = vrot.slane %v1134, %v1208
    %v1211 = vmul.f32 %v1209, %v1153
    %v1212 = vmul.f32 %v1209, %v1154
    %v1213 = vmul.f32 %v1209, %v1155
    %v1214 = vmul.f32 %v1209, %v1156
    %v1215 = vadd.f32 %v1183, 1e-06
    %v1216 = vadd.f32 %v1190, 1e-06
    %v1217 = vadd.f32 %v1197, 1e-06
    %v1218 = vadd.f32 %v1204, 1e-06
    %v1219 = vrcp.pop %v1215
    %v1220 = vmul.f32 %v1211, %v1219
    %v1221 = vrcp.pop %v1216
    %v1222 = vmul.f32 %v1212, %v1221
    %v1223 = vrcp.pop %v1217
    %v1224 = vmul.f32 %v1213, %v1223
    %v1225 = vrcp.pop %v1218
    %v1226 = vmul.f32 %v1214, %v1225
    %v1228 = vlaneseq
    %v1229 = vshrl.u32 %v1228, 7
    %v1230 = vsub.s32 0, %v1229
    %v1231 = vrot.slane %v1136, %v1230
    %v1233 = vadd.f32 %v1220, %v1231
    %v1234 = vadd.f32 %v1222, %v1231
    %v1235 = vadd.f32 %v1224, %v1231
    %v1236 = vadd.f32 %v1226, %v1231
    %v1237 = vpack.c.bf16 %v1234, %v1233
    %v1238 = vpack.c.bf16 %v1236, %v1235
    %s1239 = scalar_lea.vmem %s6, 16
    %v1240 = vld [vmem:[%s1239] sm:$0xf]
    %v1241 = vld [vmem:[%s1239 + $0x4] sm:$0xf]
    %v1242 = vld [vmem:[%s1239 + $0x8] sm:$0xf]
    %v1243 = vld [vmem:[%s1239 + $0xc] sm:$0xf]
    %s1244 = scalar_lea.vmem %s7, 1
    %v1245 = vld [vmem:[%s1244] sm:$0x1]
    %v1247 = vlaneseq
    %v1248 = vshrl.u32 %v1247, 7
    %v1249 = vsub.s32 0, %v1248
    %v1250 = vrot.slane %v1245, %v1249
    %v1256 = vunpack.c.l.b16 %v1240
    %v1257 = vunpack.c.l.b16 %v1241
    %v1258 = vunpack.c.l.b16 %v1242
    %v1259 = vunpack.c.l.b16 %v1243
    %v1260 = vpack.c.b16 %v1257, %v1256
    %v1261 = vpack.c.b16 %v1259, %v1258
    %v1265 = vsel %vm103, %v1237, 0
    %v1268 = vsel %vm103, %v1238, 0
    %1270 = vmatprep.subr.bf16.mxu0 0
    %1271 = vmatpush1.bf16.msra.mxu0 %v1260
    %1272 = vmatprep.subr.bf16.mxu0 0
    %1273 = vmatpush1.bf16.msra.mxu0 %v1261
    %1274 = vmatprep.subr.bf16.mxu0 0
    %1275 = vmatpush1.bf16.msra.mxu0 0
    %1276 = vmatprep.subr.bf16.mxu0 0
    %1277 = vmatpush1.bf16.msra.mxu0 0
    %1278 = vmatprep.subr.bf16.mxu0 0
    %1279 = vmatpush1.bf16.msra.mxu0 0
    %1280 = vmatprep.subr.bf16.mxu0 0
    %1281 = vmatpush1.bf16.msra.mxu0 0
    %1282 = vmatprep.subr.bf16.mxu0 0
    %1283 = vmatpush1.bf16.msra.mxu0 0
    %1284 = vmatprep.subr.bf16.mxu0 0
    %1285 = vmatpush1.bf16.msra.mxu0 0
    %1286 = vmatprep.subr.bf16.mxu0 0
    %1287 = vmatpush1.bf16.msra.mxu0 0
    %1288 = vmatprep.subr.bf16.mxu0 0
    %1289 = vmatpush1.bf16.msra.mxu0 0
    %1290 = vmatprep.subr.bf16.mxu0 0
    %1291 = vmatpush1.bf16.msra.mxu0 0
    %1292 = vmatprep.subr.bf16.mxu0 0
    %1293 = vmatpush1.bf16.msra.mxu0 0
    %1294 = vmatprep.subr.bf16.mxu0 0
    %1295 = vmatpush1.bf16.msra.mxu0 0
    %1296 = vmatprep.subr.bf16.mxu0 0
    %1297 = vmatpush1.bf16.msra.mxu0 0
    %1298 = vmatprep.subr.bf16.mxu0 0
    %1299 = vmatpush1.bf16.msra.mxu0 0
    %1300 = vmatprep.subr.bf16.mxu0 0
    %1301 = vmatpush1.bf16.msra.mxu0 0
    %1302 = vmatprep.mubr.bf16.mxu0 0
    %1303 = vmatmul.mubr.bf16.gmra.mrb[0].mxu0 %v1265
    %v1304 = vpop.f32.mrb[0].mxu0
    %v1305 = vadd.f32 %v1250, %v1304
    %v1306 = vpop.f32.mrb[0].mxu0
    %v1307 = vpop.f32.mrb[0].mxu0
    %v1308 = vadd.f32 %v1250, %v1307
    %v1309 = vpop.f32.mrb[0].mxu0
    %1310 = vmatprep.mubr.bf16.mxu0 0
    %1311 = vmatmul.mubr.bf16.gmra.mrb[0].mxu0 %v1268
    %v1312 = vpop.f32.mrb[0].mxu0
    %v1313 = vadd.f32 %v1250, %v1312
    %v1314 = vpop.f32.mrb[0].mxu0
    %v1315 = vpop.f32.mrb[0].mxu0
    %v1316 = vadd.f32 %v1250, %v1315
    %v1317 = vpop.f32.mrb[0].mxu0
    %1318 = vdwg.mxu0
    %v1319 = vmul.f32 %v1305, %v302
    %v1320 = vmul.f32 %v1308, %v304
    %v1321 = vmul.f32 %v1313, %v306
    %v1322 = vmul.f32 %v1316, %v308
    %v1323 = vmul.f32 %v1305, %v310
    %v1324 = vmul.f32 %v1308, %v312
    %v1325 = vmul.f32 %v1313, %v314
    %v1326 = vmul.f32 %v1316, %v316
    %v1327 = vmul.f32 %v1305, %v318
    %v1328 = vmul.f32 %v1308, %v320
    %v1329 = vmul.f32 %v1313, %v322
    %v1330 = vmul.f32 %v1316, %v324
    %v1331 = vmul.f32 %v1305, %v326
    %v1332 = vmul.f32 %v1308, %v328
    %v1333 = vmul.f32 %v1313, %v330
    %v1334 = vmul.f32 %v1316, %v332
    %v1335 = vpack.c.bf16 %v1320, %v1319
    %v1336 = vpack.c.bf16 %v1322, %v1321
    %v1337 = vpack.c.bf16 %v1324, %v1323
    %v1338 = vpack.c.bf16 %v1326, %v1325
    %v1339 = vpack.c.bf16 %v1328, %v1327
    %v1340 = vpack.c.bf16 %v1330, %v1329
    %v1341 = vpack.c.bf16 %v1332, %v1331
    %v1342 = vpack.c.bf16 %v1334, %v1333
    %v1343 = vmul.f32 %v1305, %v374
    %v1344 = vmul.f32 %v1308, %v376
    %v1345 = vmul.f32 %v1313, %v378
    %v1346 = vmul.f32 %v1316, %v380
    %v1347 = vmul.f32 %v1305, %v382
    %v1348 = vmul.f32 %v1308, %v384
    %v1349 = vmul.f32 %v1313, %v386
    %v1350 = vmul.f32 %v1316, %v388
    %v1351 = vmul.f32 %v1305, %v390
    %v1352 = vmul.f32 %v1308, %v392
    %v1353 = vmul.f32 %v1313, %v394
    %v1354 = vmul.f32 %v1316, %v396
    %v1355 = vmul.f32 %v1305, %v398
    %v1356 = vmul.f32 %v1308, %v400
    %v1357 = vmul.f32 %v1313, %v402
    %v1358 = vmul.f32 %v1316, %v404
    %v1359 = vpack.c.bf16 %v1344, %v1343
    %v1360 = vpack.c.bf16 %v1346, %v1345
    %v1361 = vpack.c.bf16 %v1348, %v1347
    %v1362 = vpack.c.bf16 %v1350, %v1349
    %v1363 = vpack.c.bf16 %v1352, %v1351
    %v1364 = vpack.c.bf16 %v1354, %v1353
    %v1365 = vpack.c.bf16 %v1356, %v1355
    %v1366 = vpack.c.bf16 %v1358, %v1357
    %v1367 = vpack.c.bf16 %v1308, %v1305
    %v1368 = vpack.c.bf16 %v1316, %v1313
    %1377 = vrot.lane.b32.xlu0 %v1335, 96
    %v1378 = vpop.permute.xlu0 %1377
    %1379 = vrot.lane.b32.xlu0 %v1336, 96
    %v1380 = vpop.permute.xlu0 %1379
    %1381 = vrot.lane.b32.xlu0 %v1337, 96
    %v1382 = vpop.permute.xlu0 %1381
    %1383 = vrot.lane.b32.xlu0 %v1338, 96
    %v1384 = vpop.permute.xlu0 %1383
    %1385 = vrot.lane.b32.xlu0 %v1339, 96
    %v1386 = vpop.permute.xlu0 %1385
    %1387 = vrot.lane.b32.xlu0 %v1340, 96
    %v1388 = vpop.permute.xlu0 %1387
    %1389 = vrot.lane.b32.xlu0 %v1341, 96
    %v1390 = vpop.permute.xlu0 %1389
    %1391 = vrot.lane.b32.xlu0 %v1342, 96
    %v1392 = vpop.permute.xlu0 %1391
    %v1394 = vsel %vm103, %v1367, 0
    %v1397 = vsel %vm103, %v1368, 0
    %v1400 = vsel %vm103, %v1378, 0
    %v1403 = vsel %vm103, %v1380, 0
    %v1406 = vsel %vm103, %v1382, 0
    %v1409 = vsel %vm103, %v1384, 0
    %v1412 = vsel %vm103, %v1386, 0
    %v1415 = vsel %vm103, %v1388, 0
    %v1418 = vsel %vm103, %v1390, 0
    %v1421 = vsel %vm103, %v1392, 0
    %1423 = vmatprep.subr.bf16.mxu0 0
    %1424 = vmatpush1.bf16.xpose.msra.mxu0 %v1400
    %1425 = vmatprep.subr.bf16.mxu0 0
    %1426 = vmatpush1.bf16.xpose.msra.mxu0 %v1403
    %1427 = vmatprep.subr.bf16.mxu0 0
    %1428 = vmatpush1.bf16.xpose.msra.mxu0 %v1406
    %1429 = vmatprep.subr.bf16.mxu0 0
    %1430 = vmatpush1.bf16.xpose.msra.mxu0 %v1409
    %1431 = vmatprep.subr.bf16.mxu0 0
    %1432 = vmatpush1.bf16.xpose.msra.mxu0 %v1412
    %1433 = vmatprep.subr.bf16.mxu0 0
    %1434 = vmatpush1.bf16.xpose.msra.mxu0 %v1415
    %1435 = vmatprep.subr.bf16.mxu0 0
    %1436 = vmatpush1.bf16.xpose.msra.mxu0 %v1418
    %1437 = vmatprep.subr.bf16.mxu0 0
    %1438 = vmatpush1.bf16.xpose.msra.mxu0 %v1421
    %1439 = vmatprep.subr.bf16.mxu0 0
    %1440 = vmatpush1.bf16.xpose.msra.mxu0 0
    %1441 = vmatprep.subr.bf16.mxu0 0
    %1442 = vmatpush1.bf16.xpose.msra.mxu0 0
    %1443 = vmatprep.subr.bf16.mxu0 0
    %1444 = vmatpush1.bf16.xpose.msra.mxu0 0
    %1445 = vmatprep.subr.bf16.mxu0 0
    %1446 = vmatpush1.bf16.xpose.msra.mxu0 0
    %1447 = vmatprep.subr.bf16.mxu0 0
    %1448 = vmatpush1.bf16.xpose.msra.mxu0 0
    %1449 = vmatprep.subr.bf16.mxu0 0
    %1450 = vmatpush1.bf16.xpose.msra.mxu0 0
    %1451 = vmatprep.subr.bf16.mxu0 0
    %1452 = vmatpush1.bf16.xpose.msra.mxu0 0
    %1453 = vmatprep.subr.bf16.mxu0 0
    %1454 = vmatpush1.bf16.xpose.msra.mxu0 0
    %1455 = vmatprep.mubr.bf16.mxu0 0
    %1456 = vmatmul.mubr.bf16.gmra.mrb[0].mxu0 %v1394
    %v1457 = vpop.f32.mrb[0].mxu0
    %v1458 = vadd.f32 0.0, %v1457
    %v1459 = vpop.f32.mrb[0].mxu0
    %v1460 = vpop.f32.mrb[0].mxu0
    %v1461 = vadd.f32 0.0, %v1460
    %v1462 = vpop.f32.mrb[0].mxu0
    %1463 = vmatprep.mubr.bf16.mxu0 0
    %1464 = vmatmul.mubr.bf16.gmra.mrb[0].mxu0 %v1397
    %v1465 = vpop.f32.mrb[0].mxu0
    %v1466 = vadd.f32 0.0, %v1465
    %v1467 = vpop.f32.mrb[0].mxu0
    %v1468 = vpop.f32.mrb[0].mxu0
    %v1469 = vadd.f32 0.0, %v1468
    %v1470 = vpop.f32.mrb[0].mxu0
    %1471 = vdwg.mxu0
    %v1472 = vmul.f32 %v1458, 0.35355338
    %v1473 = vmul.f32 %v1461, 0.35355338
    %v1474 = vmul.f32 %v1466, 0.35355338
    %v1475 = vmul.f32 %v1469, 0.35355338
    %v1476 = vadd.f32 %v1472, %v65
    %v1477 = vadd.f32 %v1473, %v66
    %v1478 = vadd.f32 %v1474, %v67
    %v1479 = vadd.f32 %v1475, %v68
    %1480 = vmax.xlane.f32.xlu0 %v1476
    %v1481 = vpop.xlane.xlu0 %1480
    %1482 = vmax.xlane.f32.xlu0 %v1477
    %v1483 = vpop.xlane.xlu0 %1482
    %1484 = vmax.xlane.f32.xlu0 %v1478
    %v1485 = vpop.xlane.xlu0 %1484
    %1486 = vmax.xlane.f32.xlu0 %v1479
    %v1487 = vpop.xlane.xlu0 %1486
    %v1488 = vsub.f32 %v1476, %v1481
    %v1489 = vsub.f32 %v1477, %v1483
    %v1490 = vsub.f32 %v1478, %v1485
    %v1491 = vsub.f32 %v1479, %v1487
    %v1492 = vmul.f32 %v1488, 1.442695
    %v1493 = vpow.pop %v1492
    %v1494 = vmul.f32 %v1489, 1.442695
    %v1495 = vpow.pop %v1494
    %v1496 = vmul.f32 %v1490, 1.442695
    %v1497 = vpow.pop %v1496
    %v1498 = vmul.f32 %v1491, 1.442695
    %v1499 = vpow.pop %v1498
    %1500 = vmatprep.subr.mxu0 0.0
    %1501 = vmatpush1.msra.mxu0 %v85
    %1502 = vmatprep.subr.mxu0 0.0
    %1503 = vmatpush1.msra.mxu0 %v86
    %1504 = vmatprep.subr.mxu0 0.0
    %1505 = vmatpush1.msra.mxu0 %v87
    %1506 = vmatprep.subr.mxu0 0.0
    %1507 = vmatpush1.msra.mxu0 %v88
    %1508 = vmatprep.subr.mxu0 0.0
    %1509 = vmatpush1.msra.mxu0 %v89
    %1510 = vmatprep.subr.mxu0 0.0
    %1511 = vmatpush1.msra.mxu0 %v90
    %1512 = vmatprep.subr.mxu0 0.0
    %1513 = vmatpush1.msra.mxu0 %v91
    %1514 = vmatprep.subr.mxu0 0.0
    %1515 = vmatpush1.msra.mxu0 %v92
    %1516 = vmatprep.subr.mxu0 0.0
    %1517 = vmatpush1.msra.mxu0 %v93
    %1518 = vmatprep.subr.mxu0 0.0
    %1519 = vmatpush1.msra.mxu0 %v94
    %1520 = vmatprep.subr.mxu0 0.0
    %1521 = vmatpush1.msra.mxu0 %v95
    %1522 = vmatprep.subr.mxu0 0.0
    %1523 = vmatpush1.msra.mxu0 %v96
    %1524 = vmatprep.subr.mxu0 0.0
    %1525 = vmatpush1.msra.mxu0 %v97
    %1526 = vmatprep.subr.mxu0 0.0
    %1527 = vmatpush1.msra.mxu0 %v98
    %1528 = vmatprep.subr.mxu0 0.0
    %1529 = vmatpush1.msra.mxu0 %v99
    %1530 = vmatprep.subr.mxu0 0.0
    %1531 = vmatpush1.msra.mxu0 %v100
    %1532 = vmatprep.subr.mxu0 0.0
    %1533 = vmatpush1.msra.mxu0 0.0
    %1534 = vmatprep.subr.mxu0 0.0
    %1535 = vmatpush1.msra.mxu0 0.0
    %1536 = vmatprep.subr.mxu0 0.0
    %1537 = vmatpush1.msra.mxu0 0.0
    %1538 = vmatprep.subr.mxu0 0.0
    %1539 = vmatpush1.msra.mxu0 0.0
    %1540 = vmatprep.subr.mxu0 0.0
    %1541 = vmatpush1.msra.mxu0 0.0
    %1542 = vmatprep.subr.mxu0 0.0
    %1543 = vmatpush1.msra.mxu0 0.0
    %1544 = vmatprep.subr.mxu0 0.0
    %1545 = vmatpush1.msra.mxu0 0.0
    %1546 = vmatprep.subr.mxu0 0.0
    %1547 = vmatpush1.msra.mxu0 0.0
    %1548 = vmatprep.subr.mxu0 0.0
    %1549 = vmatpush1.msra.mxu0 0.0
    %1550 = vmatprep.subr.mxu0 0.0
    %1551 = vmatpush1.msra.mxu0 0.0
    %1552 = vmatprep.subr.mxu0 0.0
    %1553 = vmatpush1.msra.mxu0 0.0
    %1554 = vmatprep.subr.mxu0 0.0
    %1555 = vmatpush1.msra.mxu0 0.0
    %1556 = vmatprep.subr.mxu0 0.0
    %1557 = vmatpush1.msra.mxu0 0.0
    %1558 = vmatprep.subr.mxu0 0.0
    %1559 = vmatpush1.msra.mxu0 0.0
    %1560 = vmatprep.subr.mxu0 0.0
    %1561 = vmatpush1.msra.mxu0 0.0
    %1562 = vmatprep.subr.mxu0 0.0
    %1563 = vmatpush1.msra.mxu0 0.0
    %1564 = vmatprep.mubr.f32.mxu0 0.0
    %1565 = vmatmul.mubr.f32.gmra.mrb[0].mxu0 %v1493
    %v1566 = vpop.f32.mrb[0].mxu0
    %v1567 = vadd.f32 0.0, %v1566
    %v1568 = vpop.f32.mrb[0].mxu0
    %1569 = vmatprep.mubr.f32.mxu0 0.0
    %1570 = vmatmul.mubr.f32.gmra.mrb[0].mxu0 %v1495
    %v1571 = vpop.f32.mrb[0].mxu0
    %v1572 = vadd.f32 0.0, %v1571
    %v1573 = vpop.f32.mrb[0].mxu0
    %1574 = vmatprep.mubr.f32.mxu0 0.0
    %1575 = vmatmul.mubr.f32.gmra.mrb[0].mxu0 %v1497
    %v1576 = vpop.f32.mrb[0].mxu0
    %v1577 = vadd.f32 0.0, %v1576
    %v1578 = vpop.f32.mrb[0].mxu0
    %1579 = vmatprep.mubr.f32.mxu0 0.0
    %1580 = vmatmul.mubr.f32.gmra.mrb[0].mxu0 %v1499
    %v1581 = vpop.f32.mrb[0].mxu0
    %v1582 = vadd.f32 0.0, %v1581
    %v1583 = vpop.f32.mrb[0].mxu0
    %1584 = vdwg.mxu0
    %v1585 = vrcp.pop %v1567
    %v1586 = vmul.f32 %v1493, %v1585
    %v1587 = vrcp.pop %v1572
    %v1588 = vmul.f32 %v1495, %v1587
    %v1589 = vrcp.pop %v1577
    %v1590 = vmul.f32 %v1497, %v1589
    %v1591 = vrcp.pop %v1582
    %v1592 = vmul.f32 %v1499, %v1591
    %v1593 = vpack.c.bf16 %v1588, %v1586
    %v1594 = vpack.c.bf16 %v1592, %v1590
    %1603 = vrot.lane.b32.xlu0 %v1359, 64
    %v1604 = vpop.permute.xlu0 %1603
    %1605 = vrot.lane.b32.xlu0 %v1360, 64
    %v1606 = vpop.permute.xlu0 %1605
    %1607 = vrot.lane.b32.xlu0 %v1361, 64
    %v1608 = vpop.permute.xlu0 %1607
    %1609 = vrot.lane.b32.xlu0 %v1362, 64
    %v1610 = vpop.permute.xlu0 %1609
    %1611 = vrot.lane.b32.xlu0 %v1363, 64
    %v1612 = vpop.permute.xlu0 %1611
    %1613 = vrot.lane.b32.xlu0 %v1364, 64
    %v1614 = vpop.permute.xlu0 %1613
    %1615 = vrot.lane.b32.xlu0 %v1365, 64
    %v1616 = vpop.permute.xlu0 %1615
    %1617 = vrot.lane.b32.xlu0 %v1366, 64
    %v1618 = vpop.permute.xlu0 %1617
    %1627 = vmatprep.subr.bf16.mxu0 0
    %1628 = vmatpush1.bf16.msra.mxu0 %v1604
    %1629 = vmatprep.subr.bf16.mxu0 0
    %1630 = vmatpush1.bf16.msra.mxu0 %v1606
    %1631 = vmatprep.subr.bf16.mxu0 0
    %1632 = vmatpush1.bf16.msra.mxu0 %v1608
    %1633 = vmatprep.subr.bf16.mxu0 0
    %1634 = vmatpush1.bf16.msra.mxu0 %v1610
    %1635 = vmatprep.subr.bf16.mxu0 0
    %1636 = vmatpush1.bf16.msra.mxu0 %v1612
    %1637 = vmatprep.subr.bf16.mxu0 0
    %1638 = vmatpush1.bf16.msra.mxu0 %v1614
    %1639 = vmatprep.subr.bf16.mxu0 0
    %1640 = vmatpush1.bf16.msra.mxu0 %v1616
    %1641 = vmatprep.subr.bf16.mxu0 0
    %1642 = vmatpush1.bf16.msra.mxu0 %v1618
    %1643 = vmatprep.subr.bf16.mxu0 0
    %1644 = vmatpush1.bf16.msra.mxu0 0
    %1645 = vmatprep.subr.bf16.mxu0 0
    %1646 = vmatpush1.bf16.msra.mxu0 0
    %1647 = vmatprep.subr.bf16.mxu0 0
    %1648 = vmatpush1.bf16.msra.mxu0 0
    %1649 = vmatprep.subr.bf16.mxu0 0
    %1650 = vmatpush1.bf16.msra.mxu0 0
    %1651 = vmatprep.subr.bf16.mxu0 0
    %1652 = vmatpush1.bf16.msra.mxu0 0
    %1653 = vmatprep.subr.bf16.mxu0 0
    %1654 = vmatpush1.bf16.msra.mxu0 0
    %1655 = vmatprep.subr.bf16.mxu0 0
    %1656 = vmatpush1.bf16.msra.mxu0 0
    %1657 = vmatprep.subr.bf16.mxu0 0
    %1658 = vmatpush1.bf16.msra.mxu0 0
    %1659 = vmatprep.mubr.bf16.mxu0 0
    %1660 = vmatmul.mubr.bf16.gmra.mrb[0].mxu0 %v1593
    %v1661 = vpop.f32.mrb[0].mxu0
    %v1662 = vadd.f32 0.0, %v1661
    %v1663 = vpop.f32.mrb[0].mxu0
    %v1664 = vpop.f32.mrb[0].mxu0
    %v1665 = vadd.f32 0.0, %v1664
    %v1666 = vpop.f32.mrb[0].mxu0
    %1667 = vmatprep.mubr.bf16.mxu0 0
    %1668 = vmatmul.mubr.bf16.gmra.mrb[0].mxu0 %v1594
    %v1669 = vpop.f32.mrb[0].mxu0
    %v1670 = vadd.f32 0.0, %v1669
    %v1671 = vpop.f32.mrb[0].mxu0
    %v1672 = vpop.f32.mrb[0].mxu0
    %v1673 = vadd.f32 0.0, %v1672
    %v1674 = vpop.f32.mrb[0].mxu0
    %1675 = vdwg.mxu0
    %v1676 = vpack.c.bf16 %v1665, %v1662
    %v1677 = vpack.c.bf16 %v1673, %v1670
    %s1678 = scalar_lea.vmem %s8, 16
    %v1679 = vld [vmem:[%s1678] sm:$0xf]
    %v1680 = vld [vmem:[%s1678 + $0x4] sm:$0xf]
    %v1681 = vld [vmem:[%s1678 + $0x8] sm:$0xf]
    %v1682 = vld [vmem:[%s1678 + $0xc] sm:$0xf]
    %v1687 = vunpack.c.l.b16 %v1679
    %v1688 = vunpack.c.l.b16 %v1680
    %v1689 = vunpack.c.l.b16 %v1681
    %v1690 = vunpack.c.l.b16 %v1682
    %v1691 = vpack.c.b16 %v1688, %v1687
    %v1692 = vpack.c.b16 %v1690, %v1689
    %v1696 = vsel %vm103, %v1676, 0
    %v1699 = vsel %vm103, %v1677, 0
    %1701 = vmatprep.subr.bf16.mxu0 0
    %1702 = vmatpush1.bf16.msra.mxu0 %v1691
    %1703 = vmatprep.subr.bf16.mxu0 0
    %1704 = vmatpush1.bf16.msra.mxu0 %v1692
    %1705 = vmatprep.subr.bf16.mxu0 0
    %1706 = vmatpush1.bf16.msra.mxu0 0
    %1707 = vmatprep.subr.bf16.mxu0 0
    %1708 = vmatpush1.bf16.msra.mxu0 0
    %1709 = vmatprep.subr.bf16.mxu0 0
    %1710 = vmatpush1.bf16.msra.mxu0 0
    %1711 = vmatprep.subr.bf16.mxu0 0
    %1712 = vmatpush1.bf16.msra.mxu0 0
    %1713 = vmatprep.subr.bf16.mxu0 0
    %1714 = vmatpush1.bf16.msra.mxu0 0
    %1715 = vmatprep.subr.bf16.mxu0 0
    %1716 = vmatpush1.bf16.msra.mxu0 0
    %1717 = vmatprep.subr.bf16.mxu0 0
    %1718 = vmatpush1.bf16.msra.mxu0 0
    %1719 = vmatprep.subr.bf16.mxu0 0
    %1720 = vmatpush1.bf16.msra.mxu0 0
    %1721 = vmatprep.subr.bf16.mxu0 0
    %1722 = vmatpush1.bf16.msra.mxu0 0
    %1723 = vmatprep.subr.bf16.mxu0 0
    %1724 = vmatpush1.bf16.msra.mxu0 0
    %1725 = vmatprep.subr.bf16.mxu0 0
    %1726 = vmatpush1.bf16.msra.mxu0 0
    %1727 = vmatprep.subr.bf16.mxu0 0
    %1728 = vmatpush1.bf16.msra.mxu0 0
    %1729 = vmatprep.subr.bf16.mxu0 0
    %1730 = vmatpush1.bf16.msra.mxu0 0
    %1731 = vmatprep.subr.bf16.mxu0 0
    %1732 = vmatpush1.bf16.msra.mxu0 0
    %1733 = vmatprep.mubr.bf16.mxu0 0
    %1734 = vmatmul.mubr.bf16.gmra.mrb[0].mxu0 %v1696
    %v1735 = vpop.f32.mrb[0].mxu0
    %v1736 = vadd.f32 0.0, %v1735
    %v1737 = vpop.f32.mrb[0].mxu0
    %v1738 = vpop.f32.mrb[0].mxu0
    %v1739 = vadd.f32 0.0, %v1738
    %v1740 = vpop.f32.mrb[0].mxu0
    %1741 = vmatprep.mubr.bf16.mxu0 0
    %1742 = vmatmul.mubr.bf16.gmra.mrb[0].mxu0 %v1699
    %v1743 = vpop.f32.mrb[0].mxu0
    %v1744 = vadd.f32 0.0, %v1743
    %v1745 = vpop.f32.mrb[0].mxu0
    %v1746 = vpop.f32.mrb[0].mxu0
    %v1747 = vadd.f32 0.0, %v1746
    %v1748 = vpop.f32.mrb[0].mxu0
    %1749 = vdwg.mxu0
    %v1750 = vadd.f32 %v1129, %v1736
    %v1751 = vadd.f32 %v1130, %v1739
    %v1752 = vadd.f32 %v1131, %v1744
    %v1753 = vadd.f32 %v1132, %v1747
    %s1754 = scalar_lea.vmem %s9, 1
    %v1755 = vld [vmem:[%s1754] sm:$0x1]
    %v1757 = vlaneseq
    %v1758 = vshrl.u32 %v1757, 7
    %v1759 = vsub.s32 0, %v1758
    %v1760 = vrot.slane %v1755, %v1759
    %v1762 = vadd.f32 %v1750, %v1760
    %v1763 = vadd.f32 %v1751, %v1760
    %v1764 = vadd.f32 %v1752, %v1760
    %v1765 = vadd.f32 %v1753, %v1760
    %s1766 = scalar_lea.vmem %s10, 1
    %v1767 = vld [vmem:[%s1766] sm:$0x1]
    %s1768 = scalar_lea.vmem %s11, 1
    %v1769 = vld [vmem:[%s1768] sm:$0x1]
    %v1770 = vsel %vm103, %v1762, 0.0
    %1771 = vadd.xlane.f32.xlu0 %v1770
    %v1772 = vpop.xlane.xlu0 %1771
    %v1773 = vsel %vm103, %v1763, 0.0
    %1774 = vadd.xlane.f32.xlu0 %v1773
    %v1775 = vpop.xlane.xlu0 %1774
    %v1776 = vsel %vm103, %v1764, 0.0
    %1777 = vadd.xlane.f32.xlu0 %v1776
    %v1778 = vpop.xlane.xlu0 %1777
    %v1779 = vsel %vm103, %v1765, 0.0
    %1780 = vadd.xlane.f32.xlu0 %v1779
    %v1781 = vpop.xlane.xlu0 %1780
    %v1782 = vmul.f32 %v1772, %v116
    %v1783 = vmul.f32 %v1775, %v116
    %v1784 = vmul.f32 %v1778, %v116
    %v1785 = vmul.f32 %v1781, %v116
    %v1786 = vsub.f32 %v1762, %v1782
    %v1787 = vsub.f32 %v1763, %v1783
    %v1788 = vsub.f32 %v1764, %v1784
    %v1789 = vsub.f32 %v1765, %v1785
    %v1790 = vmul.f32 %v1786, %v1786
    %v1791 = vmul.f32 %v1787, %v1787
    %v1792 = vmul.f32 %v1788, %v1788
    %v1793 = vmul.f32 %v1789, %v1789
    %v1794 = vsel %vm103, %v1790, 0.0
    %1795 = vadd.xlane.f32.xlu0 %v1794
    %v1796 = vpop.xlane.xlu0 %1795
    %v1797 = vsel %vm103, %v1791, 0.0
    %1798 = vadd.xlane.f32.xlu0 %v1797
    %v1799 = vpop.xlane.xlu0 %1798
    %v1800 = vsel %vm103, %v1792, 0.0
    %1801 = vadd.xlane.f32.xlu0 %v1800
    %v1802 = vpop.xlane.xlu0 %1801
    %v1803 = vsel %vm103, %v1793, 0.0
    %1804 = vadd.xlane.f32.xlu0 %v1803
    %v1805 = vpop.xlane.xlu0 %1804
    %v1806 = vmul.f32 %v1796, 0.032258064
    %v1807 = vmul.f32 %v1799, 0.032258064
    %v1808 = vmul.f32 %v1802, 0.032258064
    %v1809 = vmul.f32 %v1805, 0.032258064
    %v1810 = vrsqrt.pop %v1806
    %v1811 = vmul.f32 %v1806, %v1810
    %vm1812 = vcmp.eq.f32.partialorder %v1806, inf
    %v1813 = vsel %vm1812, %v1806, %v1811
    %vm1814 = vcmp.eq.f32.partialorder %v1806, 0.0
    %v1815 = vand.u32 %v1806, 2147483648
    %v1816 = vsel %vm1814, %v1815, %v1813
    %v1817 = vrsqrt.pop %v1807
    %v1818 = vmul.f32 %v1807, %v1817
    %vm1819 = vcmp.eq.f32.partialorder %v1807, inf
    %v1820 = vsel %vm1819, %v1807, %v1818
    %vm1821 = vcmp.eq.f32.partialorder %v1807, 0.0
    %v1822 = vand.u32 %v1807, 2147483648
    %v1823 = vsel %vm1821, %v1822, %v1820
    %v1824 = vrsqrt.pop %v1808
    %v1825 = vmul.f32 %v1808, %v1824
    %vm1826 = vcmp.eq.f32.partialorder %v1808, inf
    %v1827 = vsel %vm1826, %v1808, %v1825
    %vm1828 = vcmp.eq.f32.partialorder %v1808, 0.0
    %v1829 = vand.u32 %v1808, 2147483648
    %v1830 = vsel %vm1828, %v1829, %v1827
    %v1831 = vrsqrt.pop %v1809
    %v1832 = vmul.f32 %v1809, %v1831
    %vm1833 = vcmp.eq.f32.partialorder %v1809, inf
    %v1834 = vsel %vm1833, %v1809, %v1832
    %vm1835 = vcmp.eq.f32.partialorder %v1809, 0.0
    %v1836 = vand.u32 %v1809, 2147483648
    %v1837 = vsel %vm1835, %v1836, %v1834
    %v1839 = vlaneseq
    %v1840 = vshrl.u32 %v1839, 7
    %v1841 = vsub.s32 0, %v1840
    %v1842 = vrot.slane %v1767, %v1841
    %v1844 = vmul.f32 %v1842, %v1786
    %v1845 = vmul.f32 %v1842, %v1787
    %v1846 = vmul.f32 %v1842, %v1788
    %v1847 = vmul.f32 %v1842, %v1789
    %v1848 = vadd.f32 %v1816, 1e-06
    %v1849 = vadd.f32 %v1823, 1e-06
    %v1850 = vadd.f32 %v1830, 1e-06
    %v1851 = vadd.f32 %v1837, 1e-06
    %v1852 = vrcp.pop %v1848
    %v1853 = vmul.f32 %v1844, %v1852
    %v1854 = vrcp.pop %v1849
    %v1855 = vmul.f32 %v1845, %v1854
    %v1856 = vrcp.pop %v1850
    %v1857 = vmul.f32 %v1846, %v1856
    %v1858 = vrcp.pop %v1851
    %v1859 = vmul.f32 %v1847, %v1858
    %v1861 = vlaneseq
    %v1862 = vshrl.u32 %v1861, 7
    %v1863 = vsub.s32 0, %v1862
    %v1864 = vrot.slane %v1769, %v1863
    %v1866 = vadd.f32 %v1853, %v1864
    %v1867 = vadd.f32 %v1855, %v1864
    %v1868 = vadd.f32 %v1857, %v1864
    %v1869 = vadd.f32 %v1859, %v1864
    %v1870 = vpack.c.bf16 %v1867, %v1866
    %v1871 = vpack.c.bf16 %v1869, %v1868
    %s1872 = scalar_lea.vmem %s12, 16
    %v1873 = vld [vmem:[%s1872] sm:$0xf]
    %v1874 = vld [vmem:[%s1872 + $0x4] sm:$0xf]
    %v1875 = vld [vmem:[%s1872 + $0x8] sm:$0xf]
    %v1876 = vld [vmem:[%s1872 + $0xc] sm:$0xf]
    %s1877 = scalar_lea.vmem %s13, 1
    %v1878 = vld [vmem:[%s1877] sm:$0x1]
    %v1880 = vlaneseq
    %v1881 = vshrl.u32 %v1880, 7
    %v1882 = vsub.s32 0, %v1881
    %v1883 = vrot.slane %v1878, %v1882
    %v1889 = vunpack.c.l.b16 %v1873
    %v1890 = vunpack.c.l.b16 %v1874
    %v1891 = vunpack.c.l.b16 %v1875
    %v1892 = vunpack.c.l.b16 %v1876
    %v1893 = vpack.c.b16 %v1890, %v1889
    %v1894 = vpack.c.b16 %v1892, %v1891
    %v1898 = vsel %vm103, %v1870, 0
    %v1901 = vsel %vm103, %v1871, 0
    %1903 = vmatprep.subr.bf16.mxu0 0
    %1904 = vmatpush1.bf16.msra.mxu0 %v1893
    %1905 = vmatprep.subr.bf16.mxu0 0
    %1906 = vmatpush1.bf16.msra.mxu0 %v1894
    %1907 = vmatprep.subr.bf16.mxu0 0
    %1908 = vmatpush1.bf16.msra.mxu0 0
    %1909 = vmatprep.subr.bf16.mxu0 0
    %1910 = vmatpush1.bf16.msra.mxu0 0
    %1911 = vmatprep.subr.bf16.mxu0 0
    %1912 = vmatpush1.bf16.msra.mxu0 0
    %1913 = vmatprep.subr.bf16.mxu0 0
    %1914 = vmatpush1.bf16.msra.mxu0 0
    %1915 = vmatprep.subr.bf16.mxu0 0
    %1916 = vmatpush1.bf16.msra.mxu0 0
    %1917 = vmatprep.subr.bf16.mxu0 0
    %1918 = vmatpush1.bf16.msra.mxu0 0
    %1919 = vmatprep.subr.bf16.mxu0 0
    %1920 = vmatpush1.bf16.msra.mxu0 0
    %1921 = vmatprep.subr.bf16.mxu0 0
    %1922 = vmatpush1.bf16.msra.mxu0 0
    %1923 = vmatprep.subr.bf16.mxu0 0
    %1924 = vmatpush1.bf16.msra.mxu0 0
    %1925 = vmatprep.subr.bf16.mxu0 0
    %1926 = vmatpush1.bf16.msra.mxu0 0
    %1927 = vmatprep.subr.bf16.mxu0 0
    %1928 = vmatpush1.bf16.msra.mxu0 0
    %1929 = vmatprep.subr.bf16.mxu0 0
    %1930 = vmatpush1.bf16.msra.mxu0 0
    %1931 = vmatprep.subr.bf16.mxu0 0
    %1932 = vmatpush1.bf16.msra.mxu0 0
    %1933 = vmatprep.subr.bf16.mxu0 0
    %1934 = vmatpush1.bf16.msra.mxu0 0
    %1935 = vmatprep.mubr.bf16.mxu0 0
    %1936 = vmatmul.mubr.bf16.gmra.mrb[0].mxu0 %v1898
    %v1937 = vpop.f32.mrb[0].mxu0
    %v1938 = vadd.f32 %v1883, %v1937
    %v1939 = vpop.f32.mrb[0].mxu0
    %v1940 = vpop.f32.mrb[0].mxu0
    %v1941 = vadd.f32 %v1883, %v1940
    %v1942 = vpop.f32.mrb[0].mxu0
    %1943 = vmatprep.mubr.bf16.mxu0 0
    %1944 = vmatmul.mubr.bf16.gmra.mrb[0].mxu0 %v1901
    %v1945 = vpop.f32.mrb[0].mxu0
    %v1946 = vadd.f32 %v1883, %v1945
    %v1947 = vpop.f32.mrb[0].mxu0
    %v1948 = vpop.f32.mrb[0].mxu0
    %v1949 = vadd.f32 %v1883, %v1948
    %v1950 = vpop.f32.mrb[0].mxu0
    %1951 = vdwg.mxu0
    %v1952 = vmax.f32 %v1938, 0.0
    %v1953 = vmax.f32 %v1941, 0.0
    %v1954 = vmax.f32 %v1946, 0.0
    %v1955 = vmax.f32 %v1949, 0.0
    %v1956 = vpack.c.bf16 %v1953, %v1952
    %v1957 = vpack.c.bf16 %v1955, %v1954
    %s1958 = scalar_lea.vmem %s14, 32
    %v1959 = vld [vmem:[%s1958] sm:$0xf]
    %v1960 = vld [vmem:[%s1958 + $0x4] sm:$0xf]
    %v1961 = vld [vmem:[%s1958 + $0x8] sm:$0xf]
    %v1962 = vld [vmem:[%s1958 + $0xc] sm:$0xf]
    %v1963 = vld [vmem:[%s1958 + $0x10] sm:$0xf]
    %v1964 = vld [vmem:[%s1958 + $0x14] sm:$0xf]
    %v1965 = vld [vmem:[%s1958 + $0x18] sm:$0xf]
    %v1966 = vld [vmem:[%s1958 + $0x1c] sm:$0xf]
    %v1975 = vunpack.c.l.b16 %v1959
    %v1976 = vunpack.c.l.b16 %v1960
    %v1977 = vunpack.c.l.b16 %v1961
    %v1978 = vunpack.c.l.b16 %v1962
    %v1979 = vunpack.c.l.b16 %v1963
    %v1980 = vunpack.c.l.b16 %v1964
    %v1981 = vunpack.c.l.b16 %v1965
    %v1982 = vunpack.c.l.b16 %v1966
    %v1983 = vpack.c.b16 %v1976, %v1975
    %v1984 = vpack.c.b16 %v1978, %v1977
    %v1985 = vpack.c.b16 %v1980, %v1979
    %v1986 = vpack.c.b16 %v1982, %v1981
    %v1992 = vsel %vm1062, %v1956, 0
    %v1995 = vsel %vm1062, %v1957, 0
    %1997 = vmatprep.subr.bf16.mxu0 0
    %1998 = vmatpush1.bf16.msra.mxu0 %v1983
    %1999 = vmatprep.subr.bf16.mxu0 0
    %2000 = vmatpush1.bf16.msra.mxu0 %v1984
    %2001 = vmatprep.subr.bf16.mxu0 0
    %2002 = vmatpush1.bf16.msra.mxu0 %v1985
    %2003 = vmatprep.subr.bf16.mxu0 0
    %2004 = vmatpush1.bf16.msra.mxu0 %v1986
    %2005 = vmatprep.subr.bf16.mxu0 0
    %2006 = vmatpush1.bf16.msra.mxu0 0
    %2007 = vmatprep.subr.bf16.mxu0 0
    %2008 = vmatpush1.bf16.msra.mxu0 0
    %2009 = vmatprep.subr.bf16.mxu0 0
    %2010 = vmatpush1.bf16.msra.mxu0 0
    %2011 = vmatprep.subr.bf16.mxu0 0
    %2012 = vmatpush1.bf16.msra.mxu0 0
    %2013 = vmatprep.subr.bf16.mxu0 0
    %2014 = vmatpush1.bf16.msra.mxu0 0
    %2015 = vmatprep.subr.bf16.mxu0 0
    %2016 = vmatpush1.bf16.msra.mxu0 0
    %2017 = vmatprep.subr.bf16.mxu0 0
    %2018 = vmatpush1.bf16.msra.mxu0 0
    %2019 = vmatprep.subr.bf16.mxu0 0
    %2020 = vmatpush1.bf16.msra.mxu0 0
    %2021 = vmatprep.subr.bf16.mxu0 0
    %2022 = vmatpush1.bf16.msra.mxu0 0
    %2023 = vmatprep.subr.bf16.mxu0 0
    %2024 = vmatpush1.bf16.msra.mxu0 0
    %2025 = vmatprep.subr.bf16.mxu0 0
    %2026 = vmatpush1.bf16.msra.mxu0 0
    %2027 = vmatprep.subr.bf16.mxu0 0
    %2028 = vmatpush1.bf16.msra.mxu0 0
    %2029 = vmatprep.mubr.bf16.mxu0 0
    %2030 = vmatmul.mubr.bf16.gmra.mrb[0].mxu0 %v1992
    %v2031 = vpop.f32.mrb[0].mxu0
    %v2032 = vadd.f32 0.0, %v2031
    %v2033 = vpop.f32.mrb[0].mxu0
    %v2034 = vpop.f32.mrb[0].mxu0
    %v2035 = vadd.f32 0.0, %v2034
    %v2036 = vpop.f32.mrb[0].mxu0
    %2037 = vmatprep.mubr.bf16.mxu0 0
    %2038 = vmatmul.mubr.bf16.gmra.mrb[0].mxu0 %v1995
    %v2039 = vpop.f32.mrb[0].mxu0
    %v2040 = vadd.f32 0.0, %v2039
    %v2041 = vpop.f32.mrb[0].mxu0
    %v2042 = vpop.f32.mrb[0].mxu0
    %v2043 = vadd.f32 0.0, %v2042
    %v2044 = vpop.f32.mrb[0].mxu0
    %2045 = vdwg.mxu0
    %v2046 = vadd.f32 %v1762, %v2032
    %v2047 = vadd.f32 %v1763, %v2035
    %v2048 = vadd.f32 %v1764, %v2040
    %v2049 = vadd.f32 %v1765, %v2043
    %s2050 = scalar_lea.vmem %s15, 1
    %v2051 = vld [vmem:[%s2050] sm:$0x1]
    %v2053 = vlaneseq
    %v2054 = vshrl.u32 %v2053, 7
    %v2055 = vsub.s32 0, %v2054
    %v2056 = vrot.slane %v2051, %v2055
    %v2058 = vadd.f32 %v2046, %v2056
    %v2059 = vadd.f32 %v2047, %v2056
    %v2060 = vadd.f32 %v2048, %v2056
    %v2061 = vadd.f32 %v2049, %v2056
    %s2062 = scalar_lea.vmem %s4, 2
    %v2063 = vld [vmem:[%s2062] sm:$0x1]
    %s2064 = scalar_lea.vmem %s5, 2
    %v2065 = vld [vmem:[%s2064] sm:$0x1]
    %v2066 = vsel %vm103, %v2058, 0.0
    %2067 = vadd.xlane.f32.xlu0 %v2066
    %v2068 = vpop.xlane.xlu0 %2067
    %v2069 = vsel %vm103, %v2059, 0.0
    %2070 = vadd.xlane.f32.xlu0 %v2069
    %v2071 = vpop.xlane.xlu0 %2070
    %v2072 = vsel %vm103, %v2060, 0.0
    %2073 = vadd.xlane.f32.xlu0 %v2072
    %v2074 = vpop.xlane.xlu0 %2073
    %v2075 = vsel %vm103, %v2061, 0.0
    %2076 = vadd.xlane.f32.xlu0 %v2075
    %v2077 = vpop.xlane.xlu0 %2076
    %v2078 = vmul.f32 %v2068, %v116
    %v2079 = vmul.f32 %v2071, %v116
    %v2080 = vmul.f32 %v2074, %v116
    %v2081 = vmul.f32 %v2077, %v116
    %v2082 = vsub.f32 %v2058, %v2078
    %v2083 = vsub.f32 %v2059, %v2079
    %v2084 = vsub.f32 %v2060, %v2080
    %v2085 = vsub.f32 %v2061, %v2081
    %v2086 = vmul.f32 %v2082, %v2082
    %v2087 = vmul.f32 %v2083, %v2083
    %v2088 = vmul.f32 %v2084, %v2084
    %v2089 = vmul.f32 %v2085, %v2085
    %v2090 = vsel %vm103, %v2086, 0.0
    %2091 = vadd.xlane.f32.xlu0 %v2090
    %v2092 = vpop.xlane.xlu0 %2091
    %v2093 = vsel %vm103, %v2087, 0.0
    %2094 = vadd.xlane.f32.xlu0 %v2093
    %v2095 = vpop.xlane.xlu0 %2094
    %v2096 = vsel %vm103, %v2088, 0.0
    %2097 = vadd.xlane.f32.xlu0 %v2096
    %v2098 = vpop.xlane.xlu0 %2097
    %v2099 = vsel %vm103, %v2089, 0.0
    %2100 = vadd.xlane.f32.xlu0 %v2099
    %v2101 = vpop.xlane.xlu0 %2100
    %v2102 = vmul.f32 %v2092, 0.032258064
    %v2103 = vmul.f32 %v2095, 0.032258064
    %v2104 = vmul.f32 %v2098, 0.032258064
    %v2105 = vmul.f32 %v2101, 0.032258064
    %v2106 = vrsqrt.pop %v2102
    %v2107 = vmul.f32 %v2102, %v2106
    %vm2108 = vcmp.eq.f32.partialorder %v2102, inf
    %v2109 = vsel %vm2108, %v2102, %v2107
    %vm2110 = vcmp.eq.f32.partialorder %v2102, 0.0
    %v2111 = vand.u32 %v2102, 2147483648
    %v2112 = vsel %vm2110, %v2111, %v2109
    %v2113 = vrsqrt.pop %v2103
    %v2114 = vmul.f32 %v2103, %v2113
    %vm2115 = vcmp.eq.f32.partialorder %v2103, inf
    %v2116 = vsel %vm2115, %v2103, %v2114
    %vm2117 = vcmp.eq.f32.partialorder %v2103, 0.0
    %v2118 = vand.u32 %v2103, 2147483648
    %v2119 = vsel %vm2117, %v2118, %v2116
    %v2120 = vrsqrt.pop %v2104
    %v2121 = vmul.f32 %v2104, %v2120
    %vm2122 = vcmp.eq.f32.partialorder %v2104, inf
    %v2123 = vsel %vm2122, %v2104, %v2121
    %vm2124 = vcmp.eq.f32.partialorder %v2104, 0.0
    %v2125 = vand.u32 %v2104, 2147483648
    %v2126 = vsel %vm2124, %v2125, %v2123
    %v2127 = vrsqrt.pop %v2105
    %v2128 = vmul.f32 %v2105, %v2127
    %vm2129 = vcmp.eq.f32.partialorder %v2105, inf
    %v2130 = vsel %vm2129, %v2105, %v2128
    %vm2131 = vcmp.eq.f32.partialorder %v2105, 0.0
    %v2132 = vand.u32 %v2105, 2147483648
    %v2133 = vsel %vm2131, %v2132, %v2130
    %v2135 = vlaneseq
    %v2136 = vshrl.u32 %v2135, 7
    %v2137 = vsub.s32 0, %v2136
    %v2138 = vrot.slane %v2063, %v2137
    %v2140 = vmul.f32 %v2138, %v2082
    %v2141 = vmul.f32 %v2138, %v2083
    %v2142 = vmul.f32 %v2138, %v2084
    %v2143 = vmul.f32 %v2138, %v2085
    %v2144 = vadd.f32 %v2112, 1e-06
    %v2145 = vadd.f32 %v2119, 1e-06
    %v2146 = vadd.f32 %v2126, 1e-06
    %v2147 = vadd.f32 %v2133, 1e-06
    %v2148 = vrcp.pop %v2144
    %v2149 = vmul.f32 %v2140, %v2148
    %v2150 = vrcp.pop %v2145
    %v2151 = vmul.f32 %v2141, %v2150
    %v2152 = vrcp.pop %v2146
    %v2153 = vmul.f32 %v2142, %v2152
    %v2154 = vrcp.pop %v2147
    %v2155 = vmul.f32 %v2143, %v2154
    %v2157 = vlaneseq
    %v2158 = vshrl.u32 %v2157, 7
    %v2159 = vsub.s32 0, %v2158
    %v2160 = vrot.slane %v2065, %v2159
    %v2162 = vadd.f32 %v2149, %v2160
    %v2163 = vadd.f32 %v2151, %v2160
    %v2164 = vadd.f32 %v2153, %v2160
    %v2165 = vadd.f32 %v2155, %v2160
    %v2166 = vpack.c.bf16 %v2163, %v2162
    %v2167 = vpack.c.bf16 %v2165, %v2164
    %s2168 = scalar_lea.vmem %s6, 32
    %v2169 = vld [vmem:[%s2168] sm:$0xf]
    %v2170 = vld [vmem:[%s2168 + $0x4] sm:$0xf]
    %v2171 = vld [vmem:[%s2168 + $0x8] sm:$0xf]
    %v2172 = vld [vmem:[%s2168 + $0xc] sm:$0xf]
    %s2173 = scalar_lea.vmem %s7, 2
    %v2174 = vld [vmem:[%s2173] sm:$0x1]
    %v2176 = vlaneseq
    %v2177 = vshrl.u32 %v2176, 7
    %v2178 = vsub.s32 0, %v2177
    %v2179 = vrot.slane %v2174, %v2178
    %v2185 = vunpack.c.l.b16 %v2169
    %v2186 = vunpack.c.l.b16 %v2170
    %v2187 = vunpack.c.l.b16 %v2171
    %v2188 = vunpack.c.l.b16 %v2172
    %v2189 = vpack.c.b16 %v2186, %v2185
    %v2190 = vpack.c.b16 %v2188, %v2187
    %v2194 = vsel %vm103, %v2166, 0
    %v2197 = vsel %vm103, %v2167, 0
    %2199 = vmatprep.subr.bf16.mxu0 0
    %2200 = vmatpush1.bf16.msra.mxu0 %v2189
    %2201 = vmatprep.subr.bf16.mxu0 0
    %2202 = vmatpush1.bf16.msra.mxu0 %v2190
    %2203 = vmatprep.subr.bf16.mxu0 0
    %2204 = vmatpush1.bf16.msra.mxu0 0
    %2205 = vmatprep.subr.bf16.mxu0 0
    %2206 = vmatpush1.bf16.msra.mxu0 0
    %2207 = vmatprep.subr.bf16.mxu0 0
    %2208 = vmatpush1.bf16.msra.mxu0 0
    %2209 = vmatprep.subr.bf16.mxu0 0
    %2210 = vmatpush1.bf16.msra.mxu0 0
    %2211 = vmatprep.subr.bf16.mxu0 0
    %2212 = vmatpush1.bf16.msra.mxu0 0
    %2213 = vmatprep.subr.bf16.mxu0 0
    %2214 = vmatpush1.bf16.msra.mxu0 0
    %2215 = vmatprep.subr.bf16.mxu0 0
    %2216 = vmatpush1.bf16.msra.mxu0 0
    %2217 = vmatprep.subr.bf16.mxu0 0
    %2218 = vmatpush1.bf16.msra.mxu0 0
    %2219 = vmatprep.subr.bf16.mxu0 0
    %2220 = vmatpush1.bf16.msra.mxu0 0
    %2221 = vmatprep.subr.bf16.mxu0 0
    %2222 = vmatpush1.bf16.msra.mxu0 0
    %2223 = vmatprep.subr.bf16.mxu0 0
    %2224 = vmatpush1.bf16.msra.mxu0 0
    %2225 = vmatprep.subr.bf16.mxu0 0
    %2226 = vmatpush1.bf16.msra.mxu0 0
    %2227 = vmatprep.subr.bf16.mxu0 0
    %2228 = vmatpush1.bf16.msra.mxu0 0
    %2229 = vmatprep.subr.bf16.mxu0 0
    %2230 = vmatpush1.bf16.msra.mxu0 0
    %2231 = vmatprep.mubr.bf16.mxu0 0
    %2232 = vmatmul.mubr.bf16.gmra.mrb[0].mxu0 %v2194
    %v2233 = vpop.f32.mrb[0].mxu0
    %v2234 = vadd.f32 %v2179, %v2233
    %v2235 = vpop.f32.mrb[0].mxu0
    %v2236 = vpop.f32.mrb[0].mxu0
    %v2237 = vadd.f32 %v2179, %v2236
    %v2238 = vpop.f32.mrb[0].mxu0
    %2239 = vmatprep.mubr.bf16.mxu0 0
    %2240 = vmatmul.mubr.bf16.gmra.mrb[0].mxu0 %v2197
    %v2241 = vpop.f32.mrb[0].mxu0
    %v2242 = vadd.f32 %v2179, %v2241
    %v2243 = vpop.f32.mrb[0].mxu0
    %v2244 = vpop.f32.mrb[0].mxu0
    %v2245 = vadd.f32 %v2179, %v2244
    %v2246 = vpop.f32.mrb[0].mxu0
    %2247 = vdwg.mxu0
    %v2248 = vmul.f32 %v2234, %v302
    %v2249 = vmul.f32 %v2237, %v304
    %v2250 = vmul.f32 %v2242, %v306
    %v2251 = vmul.f32 %v2245, %v308
    %v2252 = vmul.f32 %v2234, %v310
    %v2253 = vmul.f32 %v2237, %v312
    %v2254 = vmul.f32 %v2242, %v314
    %v2255 = vmul.f32 %v2245, %v316
    %v2256 = vmul.f32 %v2234, %v318
    %v2257 = vmul.f32 %v2237, %v320
    %v2258 = vmul.f32 %v2242, %v322
    %v2259 = vmul.f32 %v2245, %v324
    %v2260 = vmul.f32 %v2234, %v326
    %v2261 = vmul.f32 %v2237, %v328
    %v2262 = vmul.f32 %v2242, %v330
    %v2263 = vmul.f32 %v2245, %v332
    %v2264 = vpack.c.bf16 %v2249, %v2248
    %v2265 = vpack.c.bf16 %v2251, %v2250
    %v2266 = vpack.c.bf16 %v2253, %v2252
    %v2267 = vpack.c.bf16 %v2255, %v2254
    %v2268 = vpack.c.bf16 %v2257, %v2256
    %v2269 = vpack.c.bf16 %v2259, %v2258
    %v2270 = vpack.c.bf16 %v2261, %v2260
    %v2271 = vpack.c.bf16 %v2263, %v2262
    %v2272 = vmul.f32 %v2234, %v374
    %v2273 = vmul.f32 %v2237, %v376
    %v2274 = vmul.f32 %v2242, %v378
    %v2275 = vmul.f32 %v2245, %v380
    %v2276 = vmul.f32 %v2234, %v382
    %v2277 = vmul.f32 %v2237, %v384
    %v2278 = vmul.f32 %v2242, %v386
    %v2279 = vmul.f32 %v2245, %v388
    %v2280 = vmul.f32 %v2234, %v390
    %v2281 = vmul.f32 %v2237, %v392
    %v2282 = vmul.f32 %v2242, %v394
    %v2283 = vmul.f32 %v2245, %v396
    %v2284 = vmul.f32 %v2234, %v398
    %v2285 = vmul.f32 %v2237, %v400
    %v2286 = vmul.f32 %v2242, %v402
    %v2287 = vmul.f32 %v2245, %v404
    %v2288 = vpack.c.bf16 %v2273, %v2272
    %v2289 = vpack.c.bf16 %v2275, %v2274
    %v2290 = vpack.c.bf16 %v2277, %v2276
    %v2291 = vpack.c.bf16 %v2279, %v2278
    %v2292 = vpack.c.bf16 %v2281, %v2280
    %v2293 = vpack.c.bf16 %v2283, %v2282
    %v2294 = vpack.c.bf16 %v2285, %v2284
    %v2295 = vpack.c.bf16 %v2287, %v2286
    %v2296 = vpack.c.bf16 %v2237, %v2234
    %v2297 = vpack.c.bf16 %v2245, %v2242
    %2306 = vrot.lane.b32.xlu0 %v2264, 96
    %v2307 = vpop.permute.xlu0 %2306
    %2308 = vrot.lane.b32.xlu0 %v2265, 96
    %v2309 = vpop.permute.xlu0 %2308
    %2310 = vrot.lane.b32.xlu0 %v2266, 96
    %v2311 = vpop.permute.xlu0 %2310
    %2312 = vrot.lane.b32.xlu0 %v2267, 96
    %v2313 = vpop.permute.xlu0 %2312
    %2314 = vrot.lane.b32.xlu0 %v2268, 96
    %v2315 = vpop.permute.xlu0 %2314
    %2316 = vrot.lane.b32.xlu0 %v2269, 96
    %v2317 = vpop.permute.xlu0 %2316
    %2318 = vrot.lane.b32.xlu0 %v2270, 96
    %v2319 = vpop.permute.xlu0 %2318
    %2320 = vrot.lane.b32.xlu0 %v2271, 96
    %v2321 = vpop.permute.xlu0 %2320
    %v2323 = vsel %vm103, %v2296, 0
    %v2326 = vsel %vm103, %v2297, 0
    %v2329 = vsel %vm103, %v2307, 0
    %v2332 = vsel %vm103, %v2309, 0
    %v2335 = vsel %vm103, %v2311, 0
    %v2338 = vsel %vm103, %v2313, 0
    %v2341 = vsel %vm103, %v2315, 0
    %v2344 = vsel %vm103, %v2317, 0
    %v2347 = vsel %vm103, %v2319, 0
    %v2350 = vsel %vm103, %v2321, 0
    %2352 = vmatprep.subr.bf16.mxu0 0
    %2353 = vmatpush1.bf16.xpose.msra.mxu0 %v2329
    %2354 = vmatprep.subr.bf16.mxu0 0
    %2355 = vmatpush1.bf16.xpose.msra.mxu0 %v2332
    %2356 = vmatprep.subr.bf16.mxu0 0
    %2357 = vmatpush1.bf16.xpose.msra.mxu0 %v2335
    %2358 = vmatprep.subr.bf16.mxu0 0
    %2359 = vmatpush1.bf16.xpose.msra.mxu0 %v2338
    %2360 = vmatprep.subr.bf16.mxu0 0
    %2361 = vmatpush1.bf16.xpose.msra.mxu0 %v2341
    %2362 = vmatprep.subr.bf16.mxu0 0
    %2363 = vmatpush1.bf16.xpose.msra.mxu0 %v2344
    %2364 = vmatprep.subr.bf16.mxu0 0
    %2365 = vmatpush1.bf16.xpose.msra.mxu0 %v2347
    %2366 = vmatprep.subr.bf16.mxu0 0
    %2367 = vmatpush1.bf16.xpose.msra.mxu0 %v2350
    %2368 = vmatprep.subr.bf16.mxu0 0
    %2369 = vmatpush1.bf16.xpose.msra.mxu0 0
    %2370 = vmatprep.subr.bf16.mxu0 0
    %2371 = vmatpush1.bf16.xpose.msra.mxu0 0
    %2372 = vmatprep.subr.bf16.mxu0 0
    %2373 = vmatpush1.bf16.xpose.msra.mxu0 0
    %2374 = vmatprep.subr.bf16.mxu0 0
    %2375 = vmatpush1.bf16.xpose.msra.mxu0 0
    %2376 = vmatprep.subr.bf16.mxu0 0
    %2377 = vmatpush1.bf16.xpose.msra.mxu0 0
    %2378 = vmatprep.subr.bf16.mxu0 0
    %2379 = vmatpush1.bf16.xpose.msra.mxu0 0
    %2380 = vmatprep.subr.bf16.mxu0 0
    %2381 = vmatpush1.bf16.xpose.msra.mxu0 0
    %2382 = vmatprep.subr.bf16.mxu0 0
    %2383 = vmatpush1.bf16.xpose.msra.mxu0 0
    %2384 = vmatprep.mubr.bf16.mxu0 0
    %2385 = vmatmul.mubr.bf16.gmra.mrb[0].mxu0 %v2323
    %v2386 = vpop.f32.mrb[0].mxu0
    %v2387 = vadd.f32 0.0, %v2386
    %v2388 = vpop.f32.mrb[0].mxu0
    %v2389 = vpop.f32.mrb[0].mxu0
    %v2390 = vadd.f32 0.0, %v2389
    %v2391 = vpop.f32.mrb[0].mxu0
    %2392 = vmatprep.mubr.bf16.mxu0 0
    %2393 = vmatmul.mubr.bf16.gmra.mrb[0].mxu0 %v2326
    %v2394 = vpop.f32.mrb[0].mxu0
    %v2395 = vadd.f32 0.0, %v2394
    %v2396 = vpop.f32.mrb[0].mxu0
    %v2397 = vpop.f32.mrb[0].mxu0
    %v2398 = vadd.f32 0.0, %v2397
    %v2399 = vpop.f32.mrb[0].mxu0
    %2400 = vdwg.mxu0
    %v2401 = vmul.f32 %v2387, 0.35355338
    %v2402 = vmul.f32 %v2390, 0.35355338
    %v2403 = vmul.f32 %v2395, 0.35355338
    %v2404 = vmul.f32 %v2398, 0.35355338
    %v2405 = vadd.f32 %v2401, %v65
    %v2406 = vadd.f32 %v2402, %v66
    %v2407 = vadd.f32 %v2403, %v67
    %v2408 = vadd.f32 %v2404, %v68
    %2409 = vmax.xlane.f32.xlu0 %v2405
    %v2410 = vpop.xlane.xlu0 %2409
    %2411 = vmax.xlane.f32.xlu0 %v2406
    %v2412 = vpop.xlane.xlu0 %2411
    %2413 = vmax.xlane.f32.xlu0 %v2407
    %v2414 = vpop.xlane.xlu0 %2413
    %2415 = vmax.xlane.f32.xlu0 %v2408
    %v2416 = vpop.xlane.xlu0 %2415
    %v2417 = vsub.f32 %v2405, %v2410
    %v2418 = vsub.f32 %v2406, %v2412
    %v2419 = vsub.f32 %v2407, %v2414
    %v2420 = vsub.f32 %v2408, %v2416
    %v2421 = vmul.f32 %v2417, 1.442695
    %v2422 = vpow.pop %v2421
    %v2423 = vmul.f32 %v2418, 1.442695
    %v2424 = vpow.pop %v2423
    %v2425 = vmul.f32 %v2419, 1.442695
    %v2426 = vpow.pop %v2425
    %v2427 = vmul.f32 %v2420, 1.442695
    %v2428 = vpow.pop %v2427
    %2429 = vmatprep.subr.mxu0 0.0
    %2430 = vmatpush1.msra.mxu0 %v85
    %2431 = vmatprep.subr.mxu0 0.0
    %2432 = vmatpush1.msra.mxu0 %v86
    %2433 = vmatprep.subr.mxu0 0.0
    %2434 = vmatpush1.msra.mxu0 %v87
    %2435 = vmatprep.subr.mxu0 0.0
    %2436 = vmatpush1.msra.mxu0 %v88
    %2437 = vmatprep.subr.mxu0 0.0
    %2438 = vmatpush1.msra.mxu0 %v89
    %2439 = vmatprep.subr.mxu0 0.0
    %2440 = vmatpush1.msra.mxu0 %v90
    %2441 = vmatprep.subr.mxu0 0.0
    %2442 = vmatpush1.msra.mxu0 %v91
    %2443 = vmatprep.subr.mxu0 0.0
    %2444 = vmatpush1.msra.mxu0 %v92
    %2445 = vmatprep.subr.mxu0 0.0
    %2446 = vmatpush1.msra.mxu0 %v93
    %2447 = vmatprep.subr.mxu0 0.0
    %2448 = vmatpush1.msra.mxu0 %v94
    %2449 = vmatprep.subr.mxu0 0.0
    %2450 = vmatpush1.msra.mxu0 %v95
    %2451 = vmatprep.subr.mxu0 0.0
    %2452 = vmatpush1.msra.mxu0 %v96
    %2453 = vmatprep.subr.mxu0 0.0
    %2454 = vmatpush1.msra.mxu0 %v97
    %2455 = vmatprep.subr.mxu0 0.0
    %2456 = vmatpush1.msra.mxu0 %v98
    %2457 = vmatprep.subr.mxu0 0.0
    %2458 = vmatpush1.msra.mxu0 %v99
    %2459 = vmatprep.subr.mxu0 0.0
    %2460 = vmatpush1.msra.mxu0 %v100
    %2461 = vmatprep.subr.mxu0 0.0
    %2462 = vmatpush1.msra.mxu0 0.0
    %2463 = vmatprep.subr.mxu0 0.0
    %2464 = vmatpush1.msra.mxu0 0.0
    %2465 = vmatprep.subr.mxu0 0.0
    %2466 = vmatpush1.msra.mxu0 0.0
    %2467 = vmatprep.subr.mxu0 0.0
    %2468 = vmatpush1.msra.mxu0 0.0
    %2469 = vmatprep.subr.mxu0 0.0
    %2470 = vmatpush1.msra.mxu0 0.0
    %2471 = vmatprep.subr.mxu0 0.0
    %2472 = vmatpush1.msra.mxu0 0.0
    %2473 = vmatprep.subr.mxu0 0.0
    %2474 = vmatpush1.msra.mxu0 0.0
    %2475 = vmatprep.subr.mxu0 0.0
    %2476 = vmatpush1.msra.mxu0 0.0
    %2477 = vmatprep.subr.mxu0 0.0
    %2478 = vmatpush1.msra.mxu0 0.0
    %2479 = vmatprep.subr.mxu0 0.0
    %2480 = vmatpush1.msra.mxu0 0.0
    %2481 = vmatprep.subr.mxu0 0.0
    %2482 = vmatpush1.msra.mxu0 0.0
    %2483 = vmatprep.subr.mxu0 0.0
    %2484 = vmatpush1.msra.mxu0 0.0
    %2485 = vmatprep.subr.mxu0 0.0
    %2486 = vmatpush1.msra.mxu0 0.0
    %2487 = vmatprep.subr.mxu0 0.0
    %2488 = vmatpush1.msra.mxu0 0.0
    %2489 = vmatprep.subr.mxu0 0.0
    %2490 = vmatpush1.msra.mxu0 0.0
    %2491 = vmatprep.subr.mxu0 0.0
    %2492 = vmatpush1.msra.mxu0 0.0
    %2493 = vmatprep.mubr.f32.mxu0 0.0
    %2494 = vmatmul.mubr.f32.gmra.mrb[0].mxu0 %v2422
    %v2495 = vpop.f32.mrb[0].mxu0
    %v2496 = vadd.f32 0.0, %v2495
    %v2497 = vpop.f32.mrb[0].mxu0
    %2498 = vmatprep.mubr.f32.mxu0 0.0
    %2499 = vmatmul.mubr.f32.gmra.mrb[0].mxu0 %v2424
    %v2500 = vpop.f32.mrb[0].mxu0
    %v2501 = vadd.f32 0.0, %v2500
    %v2502 = vpop.f32.mrb[0].mxu0
    %2503 = vmatprep.mubr.f32.mxu0 0.0
    %2504 = vmatmul.mubr.f32.gmra.mrb[0].mxu0 %v2426
    %v2505 = vpop.f32.mrb[0].mxu0
    %v2506 = vadd.f32 0.0, %v2505
    %v2507 = vpop.f32.mrb[0].mxu0
    %2508 = vmatprep.mubr.f32.mxu0 0.0
    %2509 = vmatmul.mubr.f32.gmra.mrb[0].mxu0 %v2428
    %v2510 = vpop.f32.mrb[0].mxu0
    %v2511 = vadd.f32 0.0, %v2510
    %v2512 = vpop.f32.mrb[0].mxu0
    %2513 = vdwg.mxu0
    %v2514 = vrcp.pop %v2496
    %v2515 = vmul.f32 %v2422, %v2514
    %v2516 = vrcp.pop %v2501
    %v2517 = vmul.f32 %v2424, %v2516
    %v2518 = vrcp.pop %v2506
    %v2519 = vmul.f32 %v2426, %v2518
    %v2520 = vrcp.pop %v2511
    %v2521 = vmul.f32 %v2428, %v2520
    %v2522 = vpack.c.bf16 %v2517, %v2515
    %v2523 = vpack.c.bf16 %v2521, %v2519
    %2532 = vrot.lane.b32.xlu0 %v2288, 64
    %v2533 = vpop.permute.xlu0 %2532
    %2534 = vrot.lane.b32.xlu0 %v2289, 64
    %v2535 = vpop.permute.xlu0 %2534
    %2536 = vrot.lane.b32.xlu0 %v2290, 64
    %v2537 = vpop.permute.xlu0 %2536
    %2538 = vrot.lane.b32.xlu0 %v2291, 64
    %v2539 = vpop.permute.xlu0 %2538
    %2540 = vrot.lane.b32.xlu0 %v2292, 64
    %v2541 = vpop.permute.xlu0 %2540
    %2542 = vrot.lane.b32.xlu0 %v2293, 64
    %v2543 = vpop.permute.xlu0 %2542
    %2544 = vrot.lane.b32.xlu0 %v2294, 64
    %v2545 = vpop.permute.xlu0 %2544
    %2546 = vrot.lane.b32.xlu0 %v2295, 64
    %v2547 = vpop.permute.xlu0 %2546
    %2556 = vmatprep.subr.bf16.mxu0 0
    %2557 = vmatpush1.bf16.msra.mxu0 %v2533
    %2558 = vmatprep.subr.bf16.mxu0 0
    %2559 = vmatpush1.bf16.msra.mxu0 %v2535
    %2560 = vmatprep.subr.bf16.mxu0 0
    %2561 = vmatpush1.bf16.msra.mxu0 %v2537
    %2562 = vmatprep.subr.bf16.mxu0 0
    %2563 = vmatpush1.bf16.msra.mxu0 %v2539
    %2564 = vmatprep.subr.bf16.mxu0 0
    %2565 = vmatpush1.bf16.msra.mxu0 %v2541
    %2566 = vmatprep.subr.bf16.mxu0 0
    %2567 = vmatpush1.bf16.msra.mxu0 %v2543
    %2568 = vmatprep.subr.bf16.mxu0 0
    %2569 = vmatpush1.bf16.msra.mxu0 %v2545
    %2570 = vmatprep.subr.bf16.mxu0 0
    %2571 = vmatpush1.bf16.msra.mxu0 %v2547
    %2572 = vmatprep.subr.bf16.mxu0 0
    %2573 = vmatpush1.bf16.msra.mxu0 0
    %2574 = vmatprep.subr.bf16.mxu0 0
    %2575 = vmatpush1.bf16.msra.mxu0 0
    %2576 = vmatprep.subr.bf16.mxu0 0
    %2577 = vmatpush1.bf16.msra.mxu0 0
    %2578 = vmatprep.subr.bf16.mxu0 0
    %2579 = vmatpush1.bf16.msra.mxu0 0
    %2580 = vmatprep.subr.bf16.mxu0 0
    %2581 = vmatpush1.bf16.msra.mxu0 0
    %2582 = vmatprep.subr.bf16.mxu0 0
    %2583 = vmatpush1.bf16.msra.mxu0 0
    %2584 = vmatprep.subr.bf16.mxu0 0
    %2585 = vmatpush1.bf16.msra.mxu0 0
    %2586 = vmatprep.subr.bf16.mxu0 0
    %2587 = vmatpush1.bf16.msra.mxu0 0
    %2588 = vmatprep.mubr.bf16.mxu0 0
    %2589 = vmatmul.mubr.bf16.gmra.mrb[0].mxu0 %v2522
    %v2590 = vpop.f32.mrb[0].mxu0
    %v2591 = vadd.f32 0.0, %v2590
    %v2592 = vpop.f32.mrb[0].mxu0
    %v2593 = vpop.f32.mrb[0].mxu0
    %v2594 = vadd.f32 0.0, %v2593
    %v2595 = vpop.f32.mrb[0].mxu0
    %2596 = vmatprep.mubr.bf16.mxu0 0
    %2597 = vmatmul.mubr.bf16.gmra.mrb[0].mxu0 %v2523
    %v2598 = vpop.f32.mrb[0].mxu0
    %v2599 = vadd.f32 0.0, %v2598
    %v2600 = vpop.f32.mrb[0].mxu0
    %v2601 = vpop.f32.mrb[0].mxu0
    %v2602 = vadd.f32 0.0, %v2601
    %v2603 = vpop.f32.mrb[0].mxu0
    %2604 = vdwg.mxu0
    %v2605 = vpack.c.bf16 %v2594, %v2591
    %v2606 = vpack.c.bf16 %v2602, %v2599
    %s2607 = scalar_lea.vmem %s8, 32
    %v2608 = vld [vmem:[%s2607] sm:$0xf]
    %v2609 = vld [vmem:[%s2607 + $0x4] sm:$0xf]
    %v2610 = vld [vmem:[%s2607 + $0x8] sm:$0xf]
    %v2611 = vld [vmem:[%s2607 + $0xc] sm:$0xf]
    %v2616 = vunpack.c.l.b16 %v2608
    %v2617 = vunpack.c.l.b16 %v2609
    %v2618 = vunpack.c.l.b16 %v2610
    %v2619 = vunpack.c.l.b16 %v2611
    %v2620 = vpack.c.b16 %v2617, %v2616
    %v2621 = vpack.c.b16 %v2619, %v2618
    %v2625 = vsel %vm103, %v2605, 0
    %v2628 = vsel %vm103, %v2606, 0
    %2630 = vmatprep.subr.bf16.mxu0 0
    %2631 = vmatpush1.bf16.msra.mxu0 %v2620
    %2632 = vmatprep.subr.bf16.mxu0 0
    %2633 = vmatpush1.bf16.msra.mxu0 %v2621
    %2634 = vmatprep.subr.bf16.mxu0 0
    %2635 = vmatpush1.bf16.msra.mxu0 0
    %2636 = vmatprep.subr.bf16.mxu0 0
    %2637 = vmatpush1.bf16.msra.mxu0 0
    %2638 = vmatprep.subr.bf16.mxu0 0
    %2639 = vmatpush1.bf16.msra.mxu0 0
    %2640 = vmatprep.subr.bf16.mxu0 0
    %2641 = vmatpush1.bf16.msra.mxu0 0
    %2642 = vmatprep.subr.bf16.mxu0 0
    %2643 = vmatpush1.bf16.msra.mxu0 0
    %2644 = vmatprep.subr.bf16.mxu0 0
    %2645 = vmatpush1.bf16.msra.mxu0 0
    %2646 = vmatprep.subr.bf16.mxu0 0
    %2647 = vmatpush1.bf16.msra.mxu0 0
    %2648 = vmatprep.subr.bf16.mxu0 0
    %2649 = vmatpush1.bf16.msra.mxu0 0
    %2650 = vmatprep.subr.bf16.mxu0 0
    %2651 = vmatpush1.bf16.msra.mxu0 0
    %2652 = vmatprep.subr.bf16.mxu0 0
    %2653 = vmatpush1.bf16.msra.mxu0 0
    %2654 = vmatprep.subr.bf16.mxu0 0
    %2655 = vmatpush1.bf16.msra.mxu0 0
    %2656 = vmatprep.subr.bf16.mxu0 0
    %2657 = vmatpush1.bf16.msra.mxu0 0
    %2658 = vmatprep.subr.bf16.mxu0 0
    %2659 = vmatpush1.bf16.msra.mxu0 0
    %2660 = vmatprep.subr.bf16.mxu0 0
    %2661 = vmatpush1.bf16.msra.mxu0 0
    %2662 = vmatprep.mubr.bf16.mxu0 0
    %2663 = vmatmul.mubr.bf16.gmra.mrb[0].mxu0 %v2625
    %v2664 = vpop.f32.mrb[0].mxu0
    %v2665 = vadd.f32 0.0, %v2664
    %v2666 = vpop.f32.mrb[0].mxu0
    %v2667 = vpop.f32.mrb[0].mxu0
    %v2668 = vadd.f32 0.0, %v2667
    %v2669 = vpop.f32.mrb[0].mxu0
    %2670 = vmatprep.mubr.bf16.mxu0 0
    %2671 = vmatmul.mubr.bf16.gmra.mrb[0].mxu0 %v2628
    %v2672 = vpop.f32.mrb[0].mxu0
    %v2673 = vadd.f32 0.0, %v2672
    %v2674 = vpop.f32.mrb[0].mxu0
    %v2675 = vpop.f32.mrb[0].mxu0
    %v2676 = vadd.f32 0.0, %v2675
    %v2677 = vpop.f32.mrb[0].mxu0
    %2678 = vdwg.mxu0
    %v2679 = vadd.f32 %v2058, %v2665
    %v2680 = vadd.f32 %v2059, %v2668
    %v2681 = vadd.f32 %v2060, %v2673
    %v2682 = vadd.f32 %v2061, %v2676
    %s2683 = scalar_lea.vmem %s9, 2
    %v2684 = vld [vmem:[%s2683] sm:$0x1]
    %v2686 = vlaneseq
    %v2687 = vshrl.u32 %v2686, 7
    %v2688 = vsub.s32 0, %v2687
    %v2689 = vrot.slane %v2684, %v2688
    %v2691 = vadd.f32 %v2679, %v2689
    %v2692 = vadd.f32 %v2680, %v2689
    %v2693 = vadd.f32 %v2681, %v2689
    %v2694 = vadd.f32 %v2682, %v2689
    %s2695 = scalar_lea.vmem %s10, 2
    %v2696 = vld [vmem:[%s2695] sm:$0x1]
    %s2697 = scalar_lea.vmem %s11, 2
    %v2698 = vld [vmem:[%s2697] sm:$0x1]
    %v2699 = vsel %vm103, %v2691, 0.0
    %2700 = vadd.xlane.f32.xlu0 %v2699
    %v2701 = vpop.xlane.xlu0 %2700
    %v2702 = vsel %vm103, %v2692, 0.0
    %2703 = vadd.xlane.f32.xlu0 %v2702
    %v2704 = vpop.xlane.xlu0 %2703
    %v2705 = vsel %vm103, %v2693, 0.0
    %2706 = vadd.xlane.f32.xlu0 %v2705
    %v2707 = vpop.xlane.xlu0 %2706
    %v2708 = vsel %vm103, %v2694, 0.0
    %2709 = vadd.xlane.f32.xlu0 %v2708
    %v2710 = vpop.xlane.xlu0 %2709
    %v2711 = vmul.f32 %v2701, %v116
    %v2712 = vmul.f32 %v2704, %v116
    %v2713 = vmul.f32 %v2707, %v116
    %v2714 = vmul.f32 %v2710, %v116
    %v2715 = vsub.f32 %v2691, %v2711
    %v2716 = vsub.f32 %v2692, %v2712
    %v2717 = vsub.f32 %v2693, %v2713
    %v2718 = vsub.f32 %v2694, %v2714
    %v2719 = vmul.f32 %v2715, %v2715
    %v2720 = vmul.f32 %v2716, %v2716
    %v2721 = vmul.f32 %v2717, %v2717
    %v2722 = vmul.f32 %v2718, %v2718
    %v2723 = vsel %vm103, %v2719, 0.0
    %2724 = vadd.xlane.f32.xlu0 %v2723
    %v2725 = vpop.xlane.xlu0 %2724
    %v2726 = vsel %vm103, %v2720, 0.0
    %2727 = vadd.xlane.f32.xlu0 %v2726
    %v2728 = vpop.xlane.xlu0 %2727
    %v2729 = vsel %vm103, %v2721, 0.0
    %2730 = vadd.xlane.f32.xlu0 %v2729
    %v2731 = vpop.xlane.xlu0 %2730
    %v2732 = vsel %vm103, %v2722, 0.0
    %2733 = vadd.xlane.f32.xlu0 %v2732
    %v2734 = vpop.xlane.xlu0 %2733
    %v2735 = vmul.f32 %v2725, 0.032258064
    %v2736 = vmul.f32 %v2728, 0.032258064
    %v2737 = vmul.f32 %v2731, 0.032258064
    %v2738 = vmul.f32 %v2734, 0.032258064
    %v2739 = vrsqrt.pop %v2735
    %v2740 = vmul.f32 %v2735, %v2739
    %vm2741 = vcmp.eq.f32.partialorder %v2735, inf
    %v2742 = vsel %vm2741, %v2735, %v2740
    %vm2743 = vcmp.eq.f32.partialorder %v2735, 0.0
    %v2744 = vand.u32 %v2735, 2147483648
    %v2745 = vsel %vm2743, %v2744, %v2742
    %v2746 = vrsqrt.pop %v2736
    %v2747 = vmul.f32 %v2736, %v2746
    %vm2748 = vcmp.eq.f32.partialorder %v2736, inf
    %v2749 = vsel %vm2748, %v2736, %v2747
    %vm2750 = vcmp.eq.f32.partialorder %v2736, 0.0
    %v2751 = vand.u32 %v2736, 2147483648
    %v2752 = vsel %vm2750, %v2751, %v2749
    %v2753 = vrsqrt.pop %v2737
    %v2754 = vmul.f32 %v2737, %v2753
    %vm2755 = vcmp.eq.f32.partialorder %v2737, inf
    %v2756 = vsel %vm2755, %v2737, %v2754
    %vm2757 = vcmp.eq.f32.partialorder %v2737, 0.0
    %v2758 = vand.u32 %v2737, 2147483648
    %v2759 = vsel %vm2757, %v2758, %v2756
    %v2760 = vrsqrt.pop %v2738
    %v2761 = vmul.f32 %v2738, %v2760
    %vm2762 = vcmp.eq.f32.partialorder %v2738, inf
    %v2763 = vsel %vm2762, %v2738, %v2761
    %vm2764 = vcmp.eq.f32.partialorder %v2738, 0.0
    %v2765 = vand.u32 %v2738, 2147483648
    %v2766 = vsel %vm2764, %v2765, %v2763
    %v2768 = vlaneseq
    %v2769 = vshrl.u32 %v2768, 7
    %v2770 = vsub.s32 0, %v2769
    %v2771 = vrot.slane %v2696, %v2770
    %v2773 = vmul.f32 %v2771, %v2715
    %v2774 = vmul.f32 %v2771, %v2716
    %v2775 = vmul.f32 %v2771, %v2717
    %v2776 = vmul.f32 %v2771, %v2718
    %v2777 = vadd.f32 %v2745, 1e-06
    %v2778 = vadd.f32 %v2752, 1e-06
    %v2779 = vadd.f32 %v2759, 1e-06
    %v2780 = vadd.f32 %v2766, 1e-06
    %v2781 = vrcp.pop %v2777
    %v2782 = vmul.f32 %v2773, %v2781
    %v2783 = vrcp.pop %v2778
    %v2784 = vmul.f32 %v2774, %v2783
    %v2785 = vrcp.pop %v2779
    %v2786 = vmul.f32 %v2775, %v2785
    %v2787 = vrcp.pop %v2780
    %v2788 = vmul.f32 %v2776, %v2787
    %v2790 = vlaneseq
    %v2791 = vshrl.u32 %v2790, 7
    %v2792 = vsub.s32 0, %v2791
    %v2793 = vrot.slane %v2698, %v2792
    %v2795 = vadd.f32 %v2782, %v2793
    %v2796 = vadd.f32 %v2784, %v2793
    %v2797 = vadd.f32 %v2786, %v2793
    %v2798 = vadd.f32 %v2788, %v2793
    %v2799 = vpack.c.bf16 %v2796, %v2795
    %v2800 = vpack.c.bf16 %v2798, %v2797
    %s2801 = scalar_lea.vmem %s12, 32
    %v2802 = vld [vmem:[%s2801] sm:$0xf]
    %v2803 = vld [vmem:[%s2801 + $0x4] sm:$0xf]
    %v2804 = vld [vmem:[%s2801 + $0x8] sm:$0xf]
    %v2805 = vld [vmem:[%s2801 + $0xc] sm:$0xf]
    %s2806 = scalar_lea.vmem %s13, 2
    %v2807 = vld [vmem:[%s2806] sm:$0x1]
    %v2809 = vlaneseq
    %v2810 = vshrl.u32 %v2809, 7
    %v2811 = vsub.s32 0, %v2810
    %v2812 = vrot.slane %v2807, %v2811
    %v2818 = vunpack.c.l.b16 %v2802
    %v2819 = vunpack.c.l.b16 %v2803
    %v2820 = vunpack.c.l.b16 %v2804
    %v2821 = vunpack.c.l.b16 %v2805
    %v2822 = vpack.c.b16 %v2819, %v2818
    %v2823 = vpack.c.b16 %v2821, %v2820
    %v2827 = vsel %vm103, %v2799, 0
    %v2830 = vsel %vm103, %v2800, 0
    %2832 = vmatprep.subr.bf16.mxu0 0
    %2833 = vmatpush1.bf16.msra.mxu0 %v2822
    %2834 = vmatprep.subr.bf16.mxu0 0
    %2835 = vmatpush1.bf16.msra.mxu0 %v2823
    %2836 = vmatprep.subr.bf16.mxu0 0
    %2837 = vmatpush1.bf16.msra.mxu0 0
    %2838 = vmatprep.subr.bf16.mxu0 0
    %2839 = vmatpush1.bf16.msra.mxu0 0
    %2840 = vmatprep.subr.bf16.mxu0 0
    %2841 = vmatpush1.bf16.msra.mxu0 0
    %2842 = vmatprep.subr.bf16.mxu0 0
    %2843 = vmatpush1.bf16.msra.mxu0 0
    %2844 = vmatprep.subr.bf16.mxu0 0
    %2845 = vmatpush1.bf16.msra.mxu0 0
    %2846 = vmatprep.subr.bf16.mxu0 0
    %2847 = vmatpush1.bf16.msra.mxu0 0
    %2848 = vmatprep.subr.bf16.mxu0 0
    %2849 = vmatpush1.bf16.msra.mxu0 0
    %2850 = vmatprep.subr.bf16.mxu0 0
    %2851 = vmatpush1.bf16.msra.mxu0 0
    %2852 = vmatprep.subr.bf16.mxu0 0
    %2853 = vmatpush1.bf16.msra.mxu0 0
    %2854 = vmatprep.subr.bf16.mxu0 0
    %2855 = vmatpush1.bf16.msra.mxu0 0
    %2856 = vmatprep.subr.bf16.mxu0 0
    %2857 = vmatpush1.bf16.msra.mxu0 0
    %2858 = vmatprep.subr.bf16.mxu0 0
    %2859 = vmatpush1.bf16.msra.mxu0 0
    %2860 = vmatprep.subr.bf16.mxu0 0
    %2861 = vmatpush1.bf16.msra.mxu0 0
    %2862 = vmatprep.subr.bf16.mxu0 0
    %2863 = vmatpush1.bf16.msra.mxu0 0
    %2864 = vmatprep.mubr.bf16.mxu0 0
    %2865 = vmatmul.mubr.bf16.gmra.mrb[0].mxu0 %v2827
    %v2866 = vpop.f32.mrb[0].mxu0
    %v2867 = vadd.f32 %v2812, %v2866
    %v2868 = vpop.f32.mrb[0].mxu0
    %v2869 = vpop.f32.mrb[0].mxu0
    %v2870 = vadd.f32 %v2812, %v2869
    %v2871 = vpop.f32.mrb[0].mxu0
    %2872 = vmatprep.mubr.bf16.mxu0 0
    %2873 = vmatmul.mubr.bf16.gmra.mrb[0].mxu0 %v2830
    %v2874 = vpop.f32.mrb[0].mxu0
    %v2875 = vadd.f32 %v2812, %v2874
    %v2876 = vpop.f32.mrb[0].mxu0
    %v2877 = vpop.f32.mrb[0].mxu0
    %v2878 = vadd.f32 %v2812, %v2877
    %v2879 = vpop.f32.mrb[0].mxu0
    %2880 = vdwg.mxu0
    %v2881 = vmax.f32 %v2867, 0.0
    %v2882 = vmax.f32 %v2870, 0.0
    %v2883 = vmax.f32 %v2875, 0.0
    %v2884 = vmax.f32 %v2878, 0.0
    %v2885 = vpack.c.bf16 %v2882, %v2881
    %v2886 = vpack.c.bf16 %v2884, %v2883
    %s2887 = scalar_lea.vmem %s14, 64
    %v2888 = vld [vmem:[%s2887] sm:$0xf]
    %v2889 = vld [vmem:[%s2887 + $0x4] sm:$0xf]
    %v2890 = vld [vmem:[%s2887 + $0x8] sm:$0xf]
    %v2891 = vld [vmem:[%s2887 + $0xc] sm:$0xf]
    %v2892 = vld [vmem:[%s2887 + $0x10] sm:$0xf]
    %v2893 = vld [vmem:[%s2887 + $0x14] sm:$0xf]
    %v2894 = vld [vmem:[%s2887 + $0x18] sm:$0xf]
    %v2895 = vld [vmem:[%s2887 + $0x1c] sm:$0xf]
    %v2904 = vunpack.c.l.b16 %v2888
    %v2905 = vunpack.c.l.b16 %v2889
    %v2906 = vunpack.c.l.b16 %v2890
    %v2907 = vunpack.c.l.b16 %v2891
    %v2908 = vunpack.c.l.b16 %v2892
    %v2909 = vunpack.c.l.b16 %v2893
    %v2910 = vunpack.c.l.b16 %v2894
    %v2911 = vunpack.c.l.b16 %v2895
    %v2912 = vpack.c.b16 %v2905, %v2904
    %v2913 = vpack.c.b16 %v2907, %v2906
    %v2914 = vpack.c.b16 %v2909, %v2908
    %v2915 = vpack.c.b16 %v2911, %v2910
    %v2921 = vsel %vm1062, %v2885, 0
    %v2924 = vsel %vm1062, %v2886, 0
    %2926 = vmatprep.subr.bf16.mxu0 0
    %2927 = vmatpush1.bf16.msra.mxu0 %v2912
    %2928 = vmatprep.subr.bf16.mxu0 0
    %2929 = vmatpush1.bf16.msra.mxu0 %v2913
    %2930 = vmatprep.subr.bf16.mxu0 0
    %2931 = vmatpush1.bf16.msra.mxu0 %v2914
    %2932 = vmatprep.subr.bf16.mxu0 0
    %2933 = vmatpush1.bf16.msra.mxu0 %v2915
    %2934 = vmatprep.subr.bf16.mxu0 0
    %2935 = vmatpush1.bf16.msra.mxu0 0
    %2936 = vmatprep.subr.bf16.mxu0 0
    %2937 = vmatpush1.bf16.msra.mxu0 0
    %2938 = vmatprep.subr.bf16.mxu0 0
    %2939 = vmatpush1.bf16.msra.mxu0 0
    %2940 = vmatprep.subr.bf16.mxu0 0
    %2941 = vmatpush1.bf16.msra.mxu0 0
    %2942 = vmatprep.subr.bf16.mxu0 0
    %2943 = vmatpush1.bf16.msra.mxu0 0
    %2944 = vmatprep.subr.bf16.mxu0 0
    %2945 = vmatpush1.bf16.msra.mxu0 0
    %2946 = vmatprep.subr.bf16.mxu0 0
    %2947 = vmatpush1.bf16.msra.mxu0 0
    %2948 = vmatprep.subr.bf16.mxu0 0
    %2949 = vmatpush1.bf16.msra.mxu0 0
    %2950 = vmatprep.subr.bf16.mxu0 0
    %2951 = vmatpush1.bf16.msra.mxu0 0
    %2952 = vmatprep.subr.bf16.mxu0 0
    %2953 = vmatpush1.bf16.msra.mxu0 0
    %2954 = vmatprep.subr.bf16.mxu0 0
    %2955 = vmatpush1.bf16.msra.mxu0 0
    %2956 = vmatprep.subr.bf16.mxu0 0
    %2957 = vmatpush1.bf16.msra.mxu0 0
    %2958 = vmatprep.mubr.bf16.mxu0 0
    %2959 = vmatmul.mubr.bf16.gmra.mrb[0].mxu0 %v2921
    %v2960 = vpop.f32.mrb[0].mxu0
    %v2961 = vadd.f32 0.0, %v2960
    %v2962 = vpop.f32.mrb[0].mxu0
    %v2963 = vpop.f32.mrb[0].mxu0
    %v2964 = vadd.f32 0.0, %v2963
    %v2965 = vpop.f32.mrb[0].mxu0
    %2966 = vmatprep.mubr.bf16.mxu0 0
    %2967 = vmatmul.mubr.bf16.gmra.mrb[0].mxu0 %v2924
    %v2968 = vpop.f32.mrb[0].mxu0
    %v2969 = vadd.f32 0.0, %v2968
    %v2970 = vpop.f32.mrb[0].mxu0
    %v2971 = vpop.f32.mrb[0].mxu0
    %v2972 = vadd.f32 0.0, %v2971
    %v2973 = vpop.f32.mrb[0].mxu0
    %2974 = vdwg.mxu0
    %v2975 = vadd.f32 %v2691, %v2961
    %v2976 = vadd.f32 %v2692, %v2964
    %v2977 = vadd.f32 %v2693, %v2969
    %v2978 = vadd.f32 %v2694, %v2972
    %s2979 = scalar_lea.vmem %s15, 2
    %v2980 = vld [vmem:[%s2979] sm:$0x1]
    %v2982 = vlaneseq
    %v2983 = vshrl.u32 %v2982, 7
    %v2984 = vsub.s32 0, %v2983
    %v2985 = vrot.slane %v2980, %v2984
    %v2987 = vadd.f32 %v2975, %v2985
    %v2988 = vadd.f32 %v2976, %v2985
    %v2989 = vadd.f32 %v2977, %v2985
    %v2990 = vadd.f32 %v2978, %v2985
    %v2991 = vld [vmem:[%s16] sm:$0x1]
    %v2992 = vld [vmem:[%s17] sm:$0x1]
    %v2993 = vsel %vm103, %v2987, 0.0
    %2994 = vadd.xlane.f32.xlu0 %v2993
    %v2995 = vpop.xlane.xlu0 %2994
    %v2996 = vsel %vm103, %v2988, 0.0
    %2997 = vadd.xlane.f32.xlu0 %v2996
    %v2998 = vpop.xlane.xlu0 %2997
    %v2999 = vsel %vm103, %v2989, 0.0
    %3000 = vadd.xlane.f32.xlu0 %v2999
    %v3001 = vpop.xlane.xlu0 %3000
    %v3002 = vsel %vm103, %v2990, 0.0
    %3003 = vadd.xlane.f32.xlu0 %v3002
    %v3004 = vpop.xlane.xlu0 %3003
    %v3005 = vmul.f32 %v2995, %v116
    %v3006 = vmul.f32 %v2998, %v116
    %v3007 = vmul.f32 %v3001, %v116
    %v3008 = vmul.f32 %v3004, %v116
    %v3009 = vsub.f32 %v2987, %v3005
    %v3010 = vsub.f32 %v2988, %v3006
    %v3011 = vsub.f32 %v2989, %v3007
    %v3012 = vsub.f32 %v2990, %v3008
    %v3013 = vmul.f32 %v3009, %v3009
    %v3014 = vmul.f32 %v3010, %v3010
    %v3015 = vmul.f32 %v3011, %v3011
    %v3016 = vmul.f32 %v3012, %v3012
    %v3017 = vsel %vm103, %v3013, 0.0
    %3018 = vadd.xlane.f32.xlu0 %v3017
    %v3019 = vpop.xlane.xlu0 %3018
    %v3020 = vsel %vm103, %v3014, 0.0
    %3021 = vadd.xlane.f32.xlu0 %v3020
    %v3022 = vpop.xlane.xlu0 %3021
    %v3023 = vsel %vm103, %v3015, 0.0
    %3024 = vadd.xlane.f32.xlu0 %v3023
    %v3025 = vpop.xlane.xlu0 %3024
    %v3026 = vsel %vm103, %v3016, 0.0
    %3027 = vadd.xlane.f32.xlu0 %v3026
    %v3028 = vpop.xlane.xlu0 %3027
    %v3029 = vmul.f32 %v3019, 0.032258064
    %v3030 = vmul.f32 %v3022, 0.032258064
    %v3031 = vmul.f32 %v3025, 0.032258064
    %v3032 = vmul.f32 %v3028, 0.032258064
    %v3033 = vrsqrt.pop %v3029
    %v3034 = vmul.f32 %v3029, %v3033
    %vm3035 = vcmp.eq.f32.partialorder %v3029, inf
    %v3036 = vsel %vm3035, %v3029, %v3034
    %vm3037 = vcmp.eq.f32.partialorder %v3029, 0.0
    %v3038 = vand.u32 %v3029, 2147483648
    %v3039 = vsel %vm3037, %v3038, %v3036
    %v3040 = vrsqrt.pop %v3030
    %v3041 = vmul.f32 %v3030, %v3040
    %vm3042 = vcmp.eq.f32.partialorder %v3030, inf
    %v3043 = vsel %vm3042, %v3030, %v3041
    %vm3044 = vcmp.eq.f32.partialorder %v3030, 0.0
    %v3045 = vand.u32 %v3030, 2147483648
    %v3046 = vsel %vm3044, %v3045, %v3043
    %v3047 = vrsqrt.pop %v3031
    %v3048 = vmul.f32 %v3031, %v3047
    %vm3049 = vcmp.eq.f32.partialorder %v3031, inf
    %v3050 = vsel %vm3049, %v3031, %v3048
    %vm3051 = vcmp.eq.f32.partialorder %v3031, 0.0
    %v3052 = vand.u32 %v3031, 2147483648
    %v3053 = vsel %vm3051, %v3052, %v3050
    %v3054 = vrsqrt.pop %v3032
    %v3055 = vmul.f32 %v3032, %v3054
    %vm3056 = vcmp.eq.f32.partialorder %v3032, inf
    %v3057 = vsel %vm3056, %v3032, %v3055
    %vm3058 = vcmp.eq.f32.partialorder %v3032, 0.0
    %v3059 = vand.u32 %v3032, 2147483648
    %v3060 = vsel %vm3058, %v3059, %v3057
    %v3062 = vlaneseq
    %v3063 = vshrl.u32 %v3062, 7
    %v3064 = vsub.s32 0, %v3063
    %v3065 = vrot.slane %v2991, %v3064
    %v3067 = vmul.f32 %v3065, %v3009
    %v3068 = vmul.f32 %v3065, %v3010
    %v3069 = vmul.f32 %v3065, %v3011
    %v3070 = vmul.f32 %v3065, %v3012
    %v3071 = vadd.f32 %v3039, 1e-06
    %v3072 = vadd.f32 %v3046, 1e-06
    %v3073 = vadd.f32 %v3053, 1e-06
    %v3074 = vadd.f32 %v3060, 1e-06
    %v3075 = vrcp.pop %v3071
    %v3076 = vmul.f32 %v3067, %v3075
    %v3077 = vrcp.pop %v3072
    %v3078 = vmul.f32 %v3068, %v3077
    %v3079 = vrcp.pop %v3073
    %v3080 = vmul.f32 %v3069, %v3079
    %v3081 = vrcp.pop %v3074
    %v3082 = vmul.f32 %v3070, %v3081
    %v3084 = vlaneseq
    %v3085 = vshrl.u32 %v3084, 7
    %v3086 = vsub.s32 0, %v3085
    %v3087 = vrot.slane %v2992, %v3086
    %v3089 = vadd.f32 %v3076, %v3087
    %v3090 = vadd.f32 %v3078, %v3087
    %v3091 = vadd.f32 %v3080, %v3087
    %v3092 = vadd.f32 %v3082, %v3087
    %3093 = vst.msk [vmem:[#allocation2] sm:$0xff] %vm103, %v3089
    %3094 = vst.msk [vmem:[#allocation2 + $0x8] sm:$0xff] %vm103, %v3090
    %3095 = vst.msk [vmem:[#allocation2 + $0x10] sm:$0xff] %vm103, %v3091
    %3096 = vst.msk [vmem:[#allocation2 + $0x18] sm:$0xff] %vm103, %v3092
    // Predicated region
    $region74: #{encoder_pallas.1} parent=1 // pred_check
      _
    $region75: #{encoder_pallas.1} parent=1 // pred_check_branch
      %3098 = sbr.rel (0) target = $region77
    $region76: #{encoder_pallas.1} parent=1 // pred_region
      %s3100 = ssub.s32 512, 512
      %3101 = vsyncadd [#allocation3], %s3100
      %s3102 = sshll.u32 [#allocation2], 4
      %s3103 = int_to_ptr.vmem [resolvable:$true] %s3102
      %3108 = dma.vmem_to_hbm [thread:$0]  %s3103, 512, %s18, [#allocation3], 128, 128, 8
    $region77: #{encoder_pallas.1} parent=1 // pred_fallthru
      _
    // Predicated region
    $region78: #{encoder_pallas.1} parent=1 // pred_check
      _
    $region79: #{encoder_pallas.1} parent=1 // pred_check_branch
      %3110 = sbr.rel (0) target = $region81
    $region80: #{encoder_pallas.1} parent=1 // pred_region
      %3111 = dma.done [#allocation3], 512
    $region81: #{encoder_pallas.1} parent=1 // pred_fallthru
      _
    %3112 = vsyncpa [#allocation3], 1

</llo_original>
